<compile_context>
chip_gen: v7x
topology: tpu7x:2x2x1
jax: 0.10.0
libtpu: 0.0.40
codegen_flags: <defaults>
</compile_context>

<pallas_src>
import math
import jax
import jax.numpy as jnp
from jax import lax
from jax.experimental import pallas as pl
from jax.experimental.pallas import tpu as pltpu


# ------------------------------- config / params ----------------------------

class Config:
    vocab_size = 100
    max_position = 64
    type_vocab_size = 2
    hidden_size = 32
    num_heads = 2
    num_layers = 2
    intermediate_size = 64
    classes = 2


def init_params(key, cfg):
    H, I, L, C = cfg.hidden_size, cfg.intermediate_size, cfg.num_layers, cfg.classes
    bf16, f32 = jnp.bfloat16, jnp.float32

    def nrm(k, shape, dtype=f32, scale=0.02):
        return (scale * jax.random.normal(k, shape, dtype=f32)).astype(dtype)

    ks = iter(jax.random.split(key, 20))
    return {
        # embedding tables (gathered in plain JAX) stay f32
        "word_emb": nrm(next(ks), (cfg.vocab_size, H)),
        "pos_emb": nrm(next(ks), (cfg.max_position, H)),
        "type_emb": nrm(next(ks), (cfg.type_vocab_size, H)),
        "emb_ln_g": jnp.ones((1, H), f32),
        "emb_ln_b": jnp.zeros((1, H), f32),
        # per-layer weights stacked on a leading layer axis; matmul weights in bf16 (MXU)
        "qkv_w": nrm(next(ks), (L, H, 3 * H), bf16),   # columns ordered [Q | K | V], heads contiguous
        "qkv_b": jnp.zeros((L, 1, 3 * H), f32),
        "o_w": nrm(next(ks), (L, H, H), bf16),
        "o_b": jnp.zeros((L, 1, H), f32),
        "ln1_g": jnp.ones((L, 1, H), f32),
        "ln1_b": jnp.zeros((L, 1, H), f32),
        "f1_w": nrm(next(ks), (L, H, I), bf16),
        "f1_b": jnp.zeros((L, 1, I), f32),
        "f2_w": nrm(next(ks), (L, I, H), bf16),
        "f2_b": jnp.zeros((L, 1, H), f32),
        "ln2_g": jnp.ones((L, 1, H), f32),
        "ln2_b": jnp.zeros((L, 1, H), f32),
        # pooler / classifier (classifier weight pre-split: pooled half / memory half,
        # so concat(pooled, read) never materializes)
        "pool_w": nrm(next(ks), (H, H), bf16),
        "pool_b": jnp.zeros((1, H), f32),
        "cls_w_pool": nrm(next(ks), (H, C), bf16),
        "cls_w_mem": nrm(next(ks), (H, C), bf16),
        "cls_b": jnp.zeros((1, C), f32),
    }


# --------------------- fully fused forward kernel (1 pallas_call) ------------

def fused_forward_pallas(params, cfg, h0, attn_bias, memory_bank):
    """emb-LN + all encoder layers + pooler + memory read + classifier in one kernel.

    h0:        [B*S, H] f32   (sum of word/pos/type embeddings, pre-LayerNorm)
    attn_bias: [B, 1, S] f32  ((1 - mask) * -10000, computed once wrapper-side)
    memory_bank: [Lm, H] bf16
    returns logits [B, classes] f32
    """
    M, H = h0.shape
    B, _, S = attn_bias.shape
    L = cfg.num_layers
    nH = cfg.num_heads
    dH = H // nH
    C = cfg.classes
    scale = 1.0 / math.sqrt(dH)
    f32, bf16 = jnp.float32, jnp.bfloat16

    def ln(x, g, b, eps=1e-12):
        mu = jnp.mean(x, axis=-1, keepdims=True)
        var = jnp.mean(jnp.square(x - mu), axis=-1, keepdims=True)
        return (x - mu) * lax.rsqrt(var + eps) * g + b

    def kernel(h0_ref, bias_ref, eg_ref, eb_ref,
               qkvw_ref, qkvb_ref, ow_ref, ob_ref, g1_ref, b1_ref,
               f1w_ref, f1b_ref, f2w_ref, f2b_ref, g2_ref, b2_ref,
               pw_ref, pb_ref, mem_ref, wp_ref, wm_ref, cb_ref,
               o_ref):
        # ---- hoisted mask-bias broadcast (once for all layers/heads) ----
        neg = jnp.broadcast_to(bias_ref[...], (B, S, S))                 # [B, S, S] f32

        # ---- embedding LayerNorm ----
        x = ln(h0_ref[...].astype(f32), eg_ref[...], eb_ref[...])        # [M, H] f32

        # ---- encoder layers: statically unrolled, weights sliced per layer ----
        for l in range(L):
            x_bf = x.astype(bf16)
            # fused QKV projection (one [H, 3H] matmul)
            qkv = jnp.dot(x_bf, qkvw_ref[l], preferred_element_type=f32) + qkvb_ref[l]
            ow_l = ow_ref[l]                                             # [H, H] bf16

            # multi-head attention; output projection folded into the head loop
            attn = None
            for hd in range(nH):
                q = qkv[:, hd * dH:(hd + 1) * dH].reshape(B, S, dH).astype(bf16)
                k = qkv[:, H + hd * dH:H + (hd + 1) * dH].reshape(B, S, dH).astype(bf16)
                v = qkv[:, 2 * H + hd * dH:2 * H + (hd + 1) * dH].reshape(B, S, dH).astype(bf16)
                # scores: contract last dims (no K transpose), batch over B
                s = lax.dot_general(q, k, (((2,), (2,)), ((0,), (0,))),
                                    preferred_element_type=f32) * scale + neg
                s = s - jnp.max(s, axis=-1, keepdims=True)
                p = jnp.exp(s)
                p = p * pl.reciprocal(jnp.sum(p, axis=-1, keepdims=True), approx=True)
                ctx = lax.dot_general(p.astype(bf16), v, (((2,), (1,)), ((0,), (0,))),
                                      preferred_element_type=f32)       # [B, S, dH]
                # fold o_w row-slice: no lane-dim concat of head contexts
                contrib = jnp.dot(ctx.reshape(M, dH).astype(bf16),
                                  ow_l[hd * dH:(hd + 1) * dH, :],
                                  preferred_element_type=f32)            # [M, H]
                attn = contrib if attn is None else attn + contrib

            h1 = ln(x + attn + ob_ref[l], g1_ref[l], b1_ref[l])

            # FFN (gelu) + residual + LN2 ([M, I] intermediate stays in VMEM/vregs)
            # TODO(synk): tanh-approx gelu; PyTorch BertModel default is exact erf.
            ff = jax.nn.gelu(jnp.dot(h1.astype(bf16), f1w_ref[l],
                                     preferred_element_type=f32) + f1b_ref[l],
                             approximate=True)
            ff2 = jnp.dot(ff.astype(bf16), f2w_ref[l],
                          preferred_element_type=f32) + f2b_ref[l]
            x = ln(h1 + ff2, g2_ref[l], b2_ref[l])

        # ---- classification head: pooler + memory read + linear (fused tail) ----
        cls = x.reshape(B, S, H)[:, 0, :]                                # [B, H] CLS rows
        pooled = jnp.tanh(jnp.dot(cls.astype(bf16), pw_ref[...],
                                  preferred_element_type=f32) + pb_ref[...])
        mem = mem_ref[...]                                               # [Lm, H] bf16
        # TODO(synk): exact MemoryNetwork implementation unavailable; standard attention
        #             read over the per-mode memory bank is used.
        sm = lax.dot_general(pooled.astype(bf16), mem, (((1,), (1,)), ((), ())),
                             preferred_element_type=f32)                 # [B, Lm]
        sm = sm - jnp.max(sm, axis=-1, keepdims=True)
        pm = jnp.exp(sm)
        pm = pm * pl.reciprocal(jnp.sum(pm, axis=-1, keepdims=True), approx=True)
        read = jnp.dot(pm.astype(bf16), mem, preferred_element_type=f32)  # [B, H]

        logits = (jnp.dot(pooled.astype(bf16), wp_ref[...], preferred_element_type=f32)
                  + jnp.dot(read.astype(bf16), wm_ref[...], preferred_element_type=f32)
                  + cb_ref[...])
        o_ref[...] = logits.astype(o_ref.dtype)

    # Single invocation (no grid): every operand is a whole VMEM block (<100 KB total),
    # only the [B, C] logits are written back to HBM.
    return pl.pallas_call(
        kernel,
        out_shape=jax.ShapeDtypeStruct((B, C), jnp.float32),
        compiler_params=pltpu.CompilerParams(vmem_limit_bytes=32 * 1024 * 1024),
    )(h0, attn_bias, params["emb_ln_g"], params["emb_ln_b"],
      params["qkv_w"], params["qkv_b"], params["o_w"], params["o_b"],
      params["ln1_g"], params["ln1_b"], params["f1_w"], params["f1_b"],
      params["f2_w"], params["f2_b"], params["ln2_g"], params["ln2_b"],
      params["pool_w"], params["pool_b"], memory_bank,
      params["cls_w_pool"], params["cls_w_mem"], params["cls_b"])


# --------------------------- model forward (glue + kernel) -------------------

def sentence_classify_forward(params, cfg, memory_banks,
                              input_ids, attention_mask, token_type_ids=None,
                              mode="train"):
    if token_type_ids is None:
        token_type_ids = jnp.zeros_like(input_ids)
    B, S = input_ids.shape
    H = cfg.hidden_size

    # Embedding gathers (glue); LayerNorm is fused into the kernel.
    pos_ids = jnp.arange(S)[None, :]
    h0 = (jnp.take(params["word_emb"], input_ids, axis=0)
          + jnp.take(params["pos_emb"], pos_ids, axis=0)
          + jnp.take(params["type_emb"], token_type_ids, axis=0)).reshape(B * S, H)

    # Mask bias computed once here; broadcast hoisted inside the kernel.
    attn_bias = (1.0 - attention_mask.astype(jnp.float32)).reshape(B, 1, S) * (-10000.0)

    return fused_forward_pallas(params, cfg, h0, attn_bias, memory_banks[mode])


# --------------------------------- main --------------------------------------

if __name__ == "__main__":
    cfg = Config()
    key = jax.random.PRNGKey(0)
    kp, kmem, kids = jax.random.split(key, 3)

    params = init_params(kp, cfg)

    # mode_length = {'train': ..., 'valid': ..., 'test': ...} -> per-mode memory banks
    # (pre-cast to bf16 once at init; no per-call convert).
    mode_length = {"train": 16, "valid": 8, "test": 8}
    mem_keys = jax.random.split(kmem, 3)
    memory_banks = {
        m: (0.02 * jax.random.normal(k, (Lm, cfg.hidden_size), dtype=jnp.float32)
            ).astype(jnp.bfloat16)
        for (m, Lm), k in zip(mode_length.items(), mem_keys)
    }

    B, S = 2, 8
    input_ids = jax.random.randint(kids, (B, S), 0, cfg.vocab_size, dtype=jnp.int32)
    attention_mask = jnp.ones((B, S), dtype=jnp.int32).at[1, 6:].set(0)   # pad tail of row 1
    token_type_ids = jnp.zeros((B, S), dtype=jnp.int32)

    logits = sentence_classify_forward(params, cfg, memory_banks,
                                       input_ids, attention_mask, token_type_ids,
                                       mode="train")
    logits = jax.block_until_ready(logits)
    assert logits.shape == (B, cfg.classes)
    assert bool(jnp.all(jnp.isfinite(logits)))
    print("KERNEL_OK")
</pallas_src>

<mosaic_0001>
module attributes {stable_mosaic.version = 11 : i64} {
  func.func @kernel(%arg0: memref<16x32xf32, #tpu.memory_space<vmem>>, %arg1: memref<2x1x8xf32, #tpu.memory_space<vmem>>, %arg2: memref<1x32xf32, #tpu.memory_space<vmem>>, %arg3: memref<1x32xf32, #tpu.memory_space<vmem>>, %arg4: memref<2x32x96xbf16, #tpu.memory_space<vmem>>, %arg5: memref<2x1x96xf32, #tpu.memory_space<vmem>>, %arg6: memref<2x32x32xbf16, #tpu.memory_space<vmem>>, %arg7: memref<2x1x32xf32, #tpu.memory_space<vmem>>, %arg8: memref<2x1x32xf32, #tpu.memory_space<vmem>>, %arg9: memref<2x1x32xf32, #tpu.memory_space<vmem>>, %arg10: memref<2x32x64xbf16, #tpu.memory_space<vmem>>, %arg11: memref<2x1x64xf32, #tpu.memory_space<vmem>>, %arg12: memref<2x64x32xbf16, #tpu.memory_space<vmem>>, %arg13: memref<2x1x32xf32, #tpu.memory_space<vmem>>, %arg14: memref<2x1x32xf32, #tpu.memory_space<vmem>>, %arg15: memref<2x1x32xf32, #tpu.memory_space<vmem>>, %arg16: memref<32x32xbf16, #tpu.memory_space<vmem>>, %arg17: memref<1x32xf32, #tpu.memory_space<vmem>>, %arg18: memref<16x32xbf16, #tpu.memory_space<vmem>>, %arg19: memref<32x2xbf16, #tpu.memory_space<vmem>>, %arg20: memref<32x2xbf16, #tpu.memory_space<vmem>>, %arg21: memref<1x2xf32, #tpu.memory_space<vmem>>, %arg22: memref<2x2xf32, #tpu.memory_space<vmem>>) attributes {dimension_semantics = [], scalar_prefetch = 0 : i64, scratch_operands = 0 : i64, tpu.core_type = #tpu.core_type<tc>} {
    %c0 = arith.constant 0 : index
    %c0_0 = arith.constant 0 : index
    %c0_1 = arith.constant 0 : index
    %0 = vector.load %arg1[%c0, %c0_0, %c0_1] : memref<2x1x8xf32, #tpu.memory_space<vmem>>, vector<2x1x8xf32>
    %1 = vector.shape_cast %0 : vector<2x1x8xf32> to vector<2x1x8xf32>
    %2 = vector.broadcast %1 : vector<2x1x8xf32> to vector<2x8x8xf32>
    %c0_2 = arith.constant 0 : index
    %c0_3 = arith.constant 0 : index
    %3 = vector.load %arg0[%c0_2, %c0_3] : memref<16x32xf32, #tpu.memory_space<vmem>>, vector<16x32xf32>
    %c0_4 = arith.constant 0 : index
    %c0_5 = arith.constant 0 : index
    %4 = vector.load %arg2[%c0_4, %c0_5] : memref<1x32xf32, #tpu.memory_space<vmem>>, vector<1x32xf32>
    %c0_6 = arith.constant 0 : index
    %c0_7 = arith.constant 0 : index
    %5 = vector.load %arg3[%c0_6, %c0_7] : memref<1x32xf32, #tpu.memory_space<vmem>>, vector<1x32xf32>
    %cst = arith.constant dense<0.000000e+00> : vector<16xf32>
    %6 = vector.multi_reduction <add>, %3, %cst [1] : vector<16x32xf32> to vector<16xf32>
    %7 = vector.shape_cast %6 : vector<16xf32> to vector<16x1xf32>
    %cst_8 = arith.constant 3.200000e+01 : f32
    %8 = vector.broadcast %cst_8 : f32 to vector<16x1xf32>
    %9 = arith.divf %7, %8 : vector<16x1xf32>
    %10 = vector.broadcast %9 : vector<16x1xf32> to vector<16x32xf32>
    %11 = arith.subf %3, %10 : vector<16x32xf32>
    %12 = arith.mulf %11, %11 : vector<16x32xf32>
    %cst_9 = arith.constant dense<0.000000e+00> : vector<16xf32>
    %13 = vector.multi_reduction <add>, %12, %cst_9 [1] : vector<16x32xf32> to vector<16xf32>
    %14 = vector.shape_cast %13 : vector<16xf32> to vector<16x1xf32>
    %cst_10 = arith.constant 3.200000e+01 : f32
    %15 = vector.broadcast %cst_10 : f32 to vector<16x1xf32>
    %16 = arith.divf %14, %15 : vector<16x1xf32>
    %17 = vector.broadcast %9 : vector<16x1xf32> to vector<16x32xf32>
    %18 = arith.subf %3, %17 : vector<16x32xf32>
    %cst_11 = arith.constant 9.99999996E-13 : f32
    %19 = vector.broadcast %cst_11 : f32 to vector<16x1xf32>
    %20 = arith.addf %16, %19 : vector<16x1xf32>
    %21 = math.rsqrt %20 : vector<16x1xf32>
    %22 = vector.broadcast %21 : vector<16x1xf32> to vector<16x32xf32>
    %23 = arith.mulf %18, %22 : vector<16x32xf32>
    %24 = vector.broadcast %4 : vector<1x32xf32> to vector<16x32xf32>
    %25 = arith.mulf %23, %24 : vector<16x32xf32>
    %26 = vector.broadcast %5 : vector<1x32xf32> to vector<16x32xf32>
    %27 = arith.addf %25, %26 : vector<16x32xf32>
    %28 = arith.truncf %27 : vector<16x32xf32> to vector<16x32xbf16>
    %c0_12 = arith.constant 0 : index
    %c0_13 = arith.constant 0 : index
    %c0_14 = arith.constant 0 : index
    %29 = vector.load %arg4[%c0_12, %c0_13, %c0_14] : memref<2x32x96xbf16, #tpu.memory_space<vmem>>, vector<1x32x96xbf16>
    %30 = vector.shape_cast %29 : vector<1x32x96xbf16> to vector<32x96xbf16>
    %cst_15 = arith.constant dense<0.000000e+00> : vector<16x96xf32>
    %31 = tpu.matmul %28, %30, %cst_15 {dimension_numbers = #tpu.dot_dimension_numbers<[1], [0], [0], [1], [0, 0, 1, 1], [], []>} : vector<16x32xbf16>, vector<32x96xbf16>, vector<16x96xf32> -> vector<16x96xf32>
    %c0_16 = arith.constant 0 : index
    %c0_17 = arith.constant 0 : index
    %c0_18 = arith.constant 0 : index
    %32 = vector.load %arg5[%c0_16, %c0_17, %c0_18] : memref<2x1x96xf32, #tpu.memory_space<vmem>>, vector<1x1x96xf32>
    %33 = vector.shape_cast %32 : vector<1x1x96xf32> to vector<1x96xf32>
    %34 = vector.broadcast %33 : vector<1x96xf32> to vector<16x96xf32>
    %35 = arith.addf %31, %34 : vector<16x96xf32>
    %c0_19 = arith.constant 0 : index
    %c0_20 = arith.constant 0 : index
    %c0_21 = arith.constant 0 : index
    %36 = vector.load %arg6[%c0_19, %c0_20, %c0_21] : memref<2x32x32xbf16, #tpu.memory_space<vmem>>, vector<1x32x32xbf16>
    %37 = vector.shape_cast %36 : vector<1x32x32xbf16> to vector<32x32xbf16>
    %38 = vector.extract_strided_slice %35 {offsets = [0, 0], sizes = [16, 16], strides = [1, 1]} : vector<16x96xf32> to vector<16x16xf32>
    %39 = vector.shape_cast %38 : vector<16x16xf32> to vector<2x8x16xf32>
    %40 = arith.truncf %39 : vector<2x8x16xf32> to vector<2x8x16xbf16>
    %41 = vector.extract_strided_slice %35 {offsets = [0, 32], sizes = [16, 16], strides = [1, 1]} : vector<16x96xf32> to vector<16x16xf32>
    %42 = vector.shape_cast %41 : vector<16x16xf32> to vector<2x8x16xf32>
    %43 = arith.truncf %42 : vector<2x8x16xf32> to vector<2x8x16xbf16>
    %44 = vector.extract_strided_slice %35 {offsets = [0, 64], sizes = [16, 16], strides = [1, 1]} : vector<16x96xf32> to vector<16x16xf32>
    %45 = vector.shape_cast %44 : vector<16x16xf32> to vector<2x8x16xf32>
    %46 = arith.truncf %45 : vector<2x8x16xf32> to vector<2x8x16xbf16>
    %cst_22 = arith.constant dense<0.000000e+00> : vector<2x8x8xf32>
    %47 = tpu.matmul %40, %43, %cst_22 {dimension_numbers = #tpu.dot_dimension_numbers<[2], [2], [1], [1], [0, 0, 0, 1, 1, 1], [0], [0]>} : vector<2x8x16xbf16>, vector<2x8x16xbf16>, vector<2x8x8xf32> -> vector<2x8x8xf32>
    %cst_23 = arith.constant 2.500000e-01 : f32
    %48 = vector.broadcast %cst_23 : f32 to vector<2x8x8xf32>
    %49 = arith.mulf %47, %48 : vector<2x8x8xf32>
    %50 = arith.addf %49, %2 : vector<2x8x8xf32>
    %cst_24 = arith.constant dense<0xFF800000> : vector<2x8xf32>
    %51 = vector.multi_reduction <maximumf>, %50, %cst_24 [2] : vector<2x8x8xf32> to vector<2x8xf32>
    %52 = vector.shape_cast %51 : vector<2x8xf32> to vector<2x8x1xf32>
    %53 = vector.broadcast %52 : vector<2x8x1xf32> to vector<2x8x8xf32>
    %54 = arith.subf %50, %53 : vector<2x8x8xf32>
    %55 = math.exp %54 : vector<2x8x8xf32>
    %cst_25 = arith.constant dense<0.000000e+00> : vector<2x8xf32>
    %56 = vector.multi_reduction <add>, %55, %cst_25 [2] : vector<2x8x8xf32> to vector<2x8xf32>
    %57 = vector.shape_cast %56 : vector<2x8xf32> to vector<2x8x1xf32>
    %58 = tpu.reciprocal %57 {approx = true} : vector<2x8x1xf32> -> vector<2x8x1xf32>
    %59 = vector.broadcast %58 : vector<2x8x1xf32> to vector<2x8x8xf32>
    %60 = arith.mulf %55, %59 : vector<2x8x8xf32>
    %61 = arith.truncf %60 : vector<2x8x8xf32> to vector<2x8x8xbf16>
    %cst_26 = arith.constant dense<0.000000e+00> : vector<2x8x16xf32>
    %62 = tpu.matmul %61, %46, %cst_26 {dimension_numbers = #tpu.dot_dimension_numbers<[2], [1], [1], [2], [0, 0, 0, 1, 1, 2], [0], [0]>} : vector<2x8x8xbf16>, vector<2x8x16xbf16>, vector<2x8x16xf32> -> vector<2x8x16xf32>
    %63 = vector.shape_cast %62 : vector<2x8x16xf32> to vector<16x16xf32>
    %64 = arith.truncf %63 : vector<16x16xf32> to vector<16x16xbf16>
    %65 = vector.extract_strided_slice %37 {offsets = [0, 0], sizes = [16, 32], strides = [1, 1]} : vector<32x32xbf16> to vector<16x32xbf16>
    %cst_27 = arith.constant dense<0.000000e+00> : vector<16x32xf32>
    %66 = tpu.matmul %64, %65, %cst_27 {dimension_numbers = #tpu.dot_dimension_numbers<[1], [0], [0], [1], [0, 0, 1, 1], [], []>} : vector<16x16xbf16>, vector<16x32xbf16>, vector<16x32xf32> -> vector<16x32xf32>
    %67 = vector.extract_strided_slice %35 {offsets = [0, 16], sizes = [16, 16], strides = [1, 1]} : vector<16x96xf32> to vector<16x16xf32>
    %68 = vector.shape_cast %67 : vector<16x16xf32> to vector<2x8x16xf32>
    %69 = arith.truncf %68 : vector<2x8x16xf32> to vector<2x8x16xbf16>
    %70 = vector.extract_strided_slice %35 {offsets = [0, 48], sizes = [16, 16], strides = [1, 1]} : vector<16x96xf32> to vector<16x16xf32>
    %71 = vector.shape_cast %70 : vector<16x16xf32> to vector<2x8x16xf32>
    %72 = arith.truncf %71 : vector<2x8x16xf32> to vector<2x8x16xbf16>
    %73 = vector.extract_strided_slice %35 {offsets = [0, 80], sizes = [16, 16], strides = [1, 1]} : vector<16x96xf32> to vector<16x16xf32>
    %74 = vector.shape_cast %73 : vector<16x16xf32> to vector<2x8x16xf32>
    %75 = arith.truncf %74 : vector<2x8x16xf32> to vector<2x8x16xbf16>
    %cst_28 = arith.constant dense<0.000000e+00> : vector<2x8x8xf32>
    %76 = tpu.matmul %69, %72, %cst_28 {dimension_numbers = #tpu.dot_dimension_numbers<[2], [2], [1], [1], [0, 0, 0, 1, 1, 1], [0], [0]>} : vector<2x8x16xbf16>, vector<2x8x16xbf16>, vector<2x8x8xf32> -> vector<2x8x8xf32>
    %cst_29 = arith.constant 2.500000e-01 : f32
    %77 = vector.broadcast %cst_29 : f32 to vector<2x8x8xf32>
    %78 = arith.mulf %76, %77 : vector<2x8x8xf32>
    %79 = arith.addf %78, %2 : vector<2x8x8xf32>
    %cst_30 = arith.constant dense<0xFF800000> : vector<2x8xf32>
    %80 = vector.multi_reduction <maximumf>, %79, %cst_30 [2] : vector<2x8x8xf32> to vector<2x8xf32>
    %81 = vector.shape_cast %80 : vector<2x8xf32> to vector<2x8x1xf32>
    %82 = vector.broadcast %81 : vector<2x8x1xf32> to vector<2x8x8xf32>
    %83 = arith.subf %79, %82 : vector<2x8x8xf32>
    %84 = math.exp %83 : vector<2x8x8xf32>
    %cst_31 = arith.constant dense<0.000000e+00> : vector<2x8xf32>
    %85 = vector.multi_reduction <add>, %84, %cst_31 [2] : vector<2x8x8xf32> to vector<2x8xf32>
    %86 = vector.shape_cast %85 : vector<2x8xf32> to vector<2x8x1xf32>
    %87 = tpu.reciprocal %86 {approx = true} : vector<2x8x1xf32> -> vector<2x8x1xf32>
    %88 = vector.broadcast %87 : vector<2x8x1xf32> to vector<2x8x8xf32>
    %89 = arith.mulf %84, %88 : vector<2x8x8xf32>
    %90 = arith.truncf %89 : vector<2x8x8xf32> to vector<2x8x8xbf16>
    %cst_32 = arith.constant dense<0.000000e+00> : vector<2x8x16xf32>
    %91 = tpu.matmul %90, %75, %cst_32 {dimension_numbers = #tpu.dot_dimension_numbers<[2], [1], [1], [2], [0, 0, 0, 1, 1, 2], [0], [0]>} : vector<2x8x8xbf16>, vector<2x8x16xbf16>, vector<2x8x16xf32> -> vector<2x8x16xf32>
    %92 = vector.shape_cast %91 : vector<2x8x16xf32> to vector<16x16xf32>
    %93 = arith.truncf %92 : vector<16x16xf32> to vector<16x16xbf16>
    %94 = vector.extract_strided_slice %37 {offsets = [16, 0], sizes = [16, 32], strides = [1, 1]} : vector<32x32xbf16> to vector<16x32xbf16>
    %cst_33 = arith.constant dense<0.000000e+00> : vector<16x32xf32>
    %95 = tpu.matmul %93, %94, %cst_33 {dimension_numbers = #tpu.dot_dimension_numbers<[1], [0], [0], [1], [0, 0, 1, 1], [], []>} : vector<16x16xbf16>, vector<16x32xbf16>, vector<16x32xf32> -> vector<16x32xf32>
    %96 = arith.addf %66, %95 : vector<16x32xf32>
    %97 = arith.addf %27, %96 : vector<16x32xf32>
    %c0_34 = arith.constant 0 : index
    %c0_35 = arith.constant 0 : index
    %c0_36 = arith.constant 0 : index
    %98 = vector.load %arg7[%c0_34, %c0_35, %c0_36] : memref<2x1x32xf32, #tpu.memory_space<vmem>>, vector<1x1x32xf32>
    %99 = vector.shape_cast %98 : vector<1x1x32xf32> to vector<1x32xf32>
    %100 = vector.broadcast %99 : vector<1x32xf32> to vector<16x32xf32>
    %101 = arith.addf %97, %100 : vector<16x32xf32>
    %c0_37 = arith.constant 0 : index
    %c0_38 = arith.constant 0 : index
    %c0_39 = arith.constant 0 : index
    %102 = vector.load %arg8[%c0_37, %c0_38, %c0_39] : memref<2x1x32xf32, #tpu.memory_space<vmem>>, vector<1x1x32xf32>
    %103 = vector.shape_cast %102 : vector<1x1x32xf32> to vector<1x32xf32>
    %c0_40 = arith.constant 0 : index
    %c0_41 = arith.constant 0 : index
    %c0_42 = arith.constant 0 : index
    %104 = vector.load %arg9[%c0_40, %c0_41, %c0_42] : memref<2x1x32xf32, #tpu.memory_space<vmem>>, vector<1x1x32xf32>
    %105 = vector.shape_cast %104 : vector<1x1x32xf32> to vector<1x32xf32>
    %cst_43 = arith.constant dense<0.000000e+00> : vector<16xf32>
    %106 = vector.multi_reduction <add>, %101, %cst_43 [1] : vector<16x32xf32> to vector<16xf32>
    %107 = vector.shape_cast %106 : vector<16xf32> to vector<16x1xf32>
    %cst_44 = arith.constant 3.200000e+01 : f32
    %108 = vector.broadcast %cst_44 : f32 to vector<16x1xf32>
    %109 = arith.divf %107, %108 : vector<16x1xf32>
    %110 = vector.broadcast %109 : vector<16x1xf32> to vector<16x32xf32>
    %111 = arith.subf %101, %110 : vector<16x32xf32>
    %112 = arith.mulf %111, %111 : vector<16x32xf32>
    %cst_45 = arith.constant dense<0.000000e+00> : vector<16xf32>
    %113 = vector.multi_reduction <add>, %112, %cst_45 [1] : vector<16x32xf32> to vector<16xf32>
    %114 = vector.shape_cast %113 : vector<16xf32> to vector<16x1xf32>
    %cst_46 = arith.constant 3.200000e+01 : f32
    %115 = vector.broadcast %cst_46 : f32 to vector<16x1xf32>
    %116 = arith.divf %114, %115 : vector<16x1xf32>
    %117 = vector.broadcast %109 : vector<16x1xf32> to vector<16x32xf32>
    %118 = arith.subf %101, %117 : vector<16x32xf32>
    %cst_47 = arith.constant 9.99999996E-13 : f32
    %119 = vector.broadcast %cst_47 : f32 to vector<16x1xf32>
    %120 = arith.addf %116, %119 : vector<16x1xf32>
    %121 = math.rsqrt %120 : vector<16x1xf32>
    %122 = vector.broadcast %121 : vector<16x1xf32> to vector<16x32xf32>
    %123 = arith.mulf %118, %122 : vector<16x32xf32>
    %124 = vector.broadcast %103 : vector<1x32xf32> to vector<16x32xf32>
    %125 = arith.mulf %123, %124 : vector<16x32xf32>
    %126 = vector.broadcast %105 : vector<1x32xf32> to vector<16x32xf32>
    %127 = arith.addf %125, %126 : vector<16x32xf32>
    %128 = arith.truncf %127 : vector<16x32xf32> to vector<16x32xbf16>
    %c0_48 = arith.constant 0 : index
    %c0_49 = arith.constant 0 : index
    %c0_50 = arith.constant 0 : index
    %129 = vector.load %arg10[%c0_48, %c0_49, %c0_50] : memref<2x32x64xbf16, #tpu.memory_space<vmem>>, vector<1x32x64xbf16>
    %130 = vector.shape_cast %129 : vector<1x32x64xbf16> to vector<32x64xbf16>
    %cst_51 = arith.constant dense<0.000000e+00> : vector<16x64xf32>
    %131 = tpu.matmul %128, %130, %cst_51 {dimension_numbers = #tpu.dot_dimension_numbers<[1], [0], [0], [1], [0, 0, 1, 1], [], []>} : vector<16x32xbf16>, vector<32x64xbf16>, vector<16x64xf32> -> vector<16x64xf32>
    %c0_52 = arith.constant 0 : index
    %c0_53 = arith.constant 0 : index
    %c0_54 = arith.constant 0 : index
    %132 = vector.load %arg11[%c0_52, %c0_53, %c0_54] : memref<2x1x64xf32, #tpu.memory_space<vmem>>, vector<1x1x64xf32>
    %133 = vector.shape_cast %132 : vector<1x1x64xf32> to vector<1x64xf32>
    %134 = vector.broadcast %133 : vector<1x64xf32> to vector<16x64xf32>
    %135 = arith.addf %131, %134 : vector<16x64xf32>
    %136 = arith.mulf %135, %135 : vector<16x64xf32>
    %137 = arith.mulf %135, %136 : vector<16x64xf32>
    %cst_55 = arith.constant 4.471500e-02 : f32
    %138 = vector.broadcast %cst_55 : f32 to vector<16x64xf32>
    %139 = arith.mulf %138, %137 : vector<16x64xf32>
    %140 = arith.addf %135, %139 : vector<16x64xf32>
    %cst_56 = arith.constant 0.797884583 : f32
    %141 = vector.broadcast %cst_56 : f32 to vector<16x64xf32>
    %142 = arith.mulf %141, %140 : vector<16x64xf32>
    %143 = math.tanh %142 : vector<16x64xf32>
    %cst_57 = arith.constant 1.000000e+00 : f32
    %144 = vector.broadcast %cst_57 : f32 to vector<16x64xf32>
    %145 = arith.addf %144, %143 : vector<16x64xf32>
    %cst_58 = arith.constant 5.000000e-01 : f32
    %146 = vector.broadcast %cst_58 : f32 to vector<16x64xf32>
    %147 = arith.mulf %146, %145 : vector<16x64xf32>
    %148 = arith.mulf %135, %147 : vector<16x64xf32>
    %149 = arith.truncf %148 : vector<16x64xf32> to vector<16x64xbf16>
    %c0_59 = arith.constant 0 : index
    %c0_60 = arith.constant 0 : index
    %c0_61 = arith.constant 0 : index
    %150 = vector.load %arg12[%c0_59, %c0_60, %c0_61] : memref<2x64x32xbf16, #tpu.memory_space<vmem>>, vector<1x64x32xbf16>
    %151 = vector.shape_cast %150 : vector<1x64x32xbf16> to vector<64x32xbf16>
    %cst_62 = arith.constant dense<0.000000e+00> : vector<16x32xf32>
    %152 = tpu.matmul %149, %151, %cst_62 {dimension_numbers = #tpu.dot_dimension_numbers<[1], [0], [0], [1], [0, 0, 1, 1], [], []>} : vector<16x64xbf16>, vector<64x32xbf16>, vector<16x32xf32> -> vector<16x32xf32>
    %c0_63 = arith.constant 0 : index
    %c0_64 = arith.constant 0 : index
    %c0_65 = arith.constant 0 : index
    %153 = vector.load %arg13[%c0_63, %c0_64, %c0_65] : memref<2x1x32xf32, #tpu.memory_space<vmem>>, vector<1x1x32xf32>
    %154 = vector.shape_cast %153 : vector<1x1x32xf32> to vector<1x32xf32>
    %155 = vector.broadcast %154 : vector<1x32xf32> to vector<16x32xf32>
    %156 = arith.addf %152, %155 : vector<16x32xf32>
    %157 = arith.addf %127, %156 : vector<16x32xf32>
    %c0_66 = arith.constant 0 : index
    %c0_67 = arith.constant 0 : index
    %c0_68 = arith.constant 0 : index
    %158 = vector.load %arg14[%c0_66, %c0_67, %c0_68] : memref<2x1x32xf32, #tpu.memory_space<vmem>>, vector<1x1x32xf32>
    %159 = vector.shape_cast %158 : vector<1x1x32xf32> to vector<1x32xf32>
    %c0_69 = arith.constant 0 : index
    %c0_70 = arith.constant 0 : index
    %c0_71 = arith.constant 0 : index
    %160 = vector.load %arg15[%c0_69, %c0_70, %c0_71] : memref<2x1x32xf32, #tpu.memory_space<vmem>>, vector<1x1x32xf32>
    %161 = vector.shape_cast %160 : vector<1x1x32xf32> to vector<1x32xf32>
    %cst_72 = arith.constant dense<0.000000e+00> : vector<16xf32>
    %162 = vector.multi_reduction <add>, %157, %cst_72 [1] : vector<16x32xf32> to vector<16xf32>
    %163 = vector.shape_cast %162 : vector<16xf32> to vector<16x1xf32>
    %cst_73 = arith.constant 3.200000e+01 : f32
    %164 = vector.broadcast %cst_73 : f32 to vector<16x1xf32>
    %165 = arith.divf %163, %164 : vector<16x1xf32>
    %166 = vector.broadcast %165 : vector<16x1xf32> to vector<16x32xf32>
    %167 = arith.subf %157, %166 : vector<16x32xf32>
    %168 = arith.mulf %167, %167 : vector<16x32xf32>
    %cst_74 = arith.constant dense<0.000000e+00> : vector<16xf32>
    %169 = vector.multi_reduction <add>, %168, %cst_74 [1] : vector<16x32xf32> to vector<16xf32>
    %170 = vector.shape_cast %169 : vector<16xf32> to vector<16x1xf32>
    %cst_75 = arith.constant 3.200000e+01 : f32
    %171 = vector.broadcast %cst_75 : f32 to vector<16x1xf32>
    %172 = arith.divf %170, %171 : vector<16x1xf32>
    %173 = vector.broadcast %165 : vector<16x1xf32> to vector<16x32xf32>
    %174 = arith.subf %157, %173 : vector<16x32xf32>
    %cst_76 = arith.constant 9.99999996E-13 : f32
    %175 = vector.broadcast %cst_76 : f32 to vector<16x1xf32>
    %176 = arith.addf %172, %175 : vector<16x1xf32>
    %177 = math.rsqrt %176 : vector<16x1xf32>
    %178 = vector.broadcast %177 : vector<16x1xf32> to vector<16x32xf32>
    %179 = arith.mulf %174, %178 : vector<16x32xf32>
    %180 = vector.broadcast %159 : vector<1x32xf32> to vector<16x32xf32>
    %181 = arith.mulf %179, %180 : vector<16x32xf32>
    %182 = vector.broadcast %161 : vector<1x32xf32> to vector<16x32xf32>
    %183 = arith.addf %181, %182 : vector<16x32xf32>
    %184 = arith.truncf %183 : vector<16x32xf32> to vector<16x32xbf16>
    %c1 = arith.constant 1 : index
    %c0_77 = arith.constant 0 : index
    %c0_78 = arith.constant 0 : index
    %185 = vector.load %arg4[%c1, %c0_77, %c0_78] : memref<2x32x96xbf16, #tpu.memory_space<vmem>>, vector<1x32x96xbf16>
    %186 = vector.shape_cast %185 : vector<1x32x96xbf16> to vector<32x96xbf16>
    %cst_79 = arith.constant dense<0.000000e+00> : vector<16x96xf32>
    %187 = tpu.matmul %184, %186, %cst_79 {dimension_numbers = #tpu.dot_dimension_numbers<[1], [0], [0], [1], [0, 0, 1, 1], [], []>} : vector<16x32xbf16>, vector<32x96xbf16>, vector<16x96xf32> -> vector<16x96xf32>
    %c1_80 = arith.constant 1 : index
    %c0_81 = arith.constant 0 : index
    %c0_82 = arith.constant 0 : index
    %188 = vector.load %arg5[%c1_80, %c0_81, %c0_82] : memref<2x1x96xf32, #tpu.memory_space<vmem>>, vector<1x1x96xf32>
    %189 = vector.shape_cast %188 : vector<1x1x96xf32> to vector<1x96xf32>
    %190 = vector.broadcast %189 : vector<1x96xf32> to vector<16x96xf32>
    %191 = arith.addf %187, %190 : vector<16x96xf32>
    %c1_83 = arith.constant 1 : index
    %c0_84 = arith.constant 0 : index
    %c0_85 = arith.constant 0 : index
    %192 = vector.load %arg6[%c1_83, %c0_84, %c0_85] : memref<2x32x32xbf16, #tpu.memory_space<vmem>>, vector<1x32x32xbf16>
    %193 = vector.shape_cast %192 : vector<1x32x32xbf16> to vector<32x32xbf16>
    %194 = vector.extract_strided_slice %191 {offsets = [0, 0], sizes = [16, 16], strides = [1, 1]} : vector<16x96xf32> to vector<16x16xf32>
    %195 = vector.shape_cast %194 : vector<16x16xf32> to vector<2x8x16xf32>
    %196 = arith.truncf %195 : vector<2x8x16xf32> to vector<2x8x16xbf16>
    %197 = vector.extract_strided_slice %191 {offsets = [0, 32], sizes = [16, 16], strides = [1, 1]} : vector<16x96xf32> to vector<16x16xf32>
    %198 = vector.shape_cast %197 : vector<16x16xf32> to vector<2x8x16xf32>
    %199 = arith.truncf %198 : vector<2x8x16xf32> to vector<2x8x16xbf16>
    %200 = vector.extract_strided_slice %191 {offsets = [0, 64], sizes = [16, 16], strides = [1, 1]} : vector<16x96xf32> to vector<16x16xf32>
    %201 = vector.shape_cast %200 : vector<16x16xf32> to vector<2x8x16xf32>
    %202 = arith.truncf %201 : vector<2x8x16xf32> to vector<2x8x16xbf16>
    %cst_86 = arith.constant dense<0.000000e+00> : vector<2x8x8xf32>
    %203 = tpu.matmul %196, %199, %cst_86 {dimension_numbers = #tpu.dot_dimension_numbers<[2], [2], [1], [1], [0, 0, 0, 1, 1, 1], [0], [0]>} : vector<2x8x16xbf16>, vector<2x8x16xbf16>, vector<2x8x8xf32> -> vector<2x8x8xf32>
    %cst_87 = arith.constant 2.500000e-01 : f32
    %204 = vector.broadcast %cst_87 : f32 to vector<2x8x8xf32>
    %205 = arith.mulf %203, %204 : vector<2x8x8xf32>
    %206 = arith.addf %205, %2 : vector<2x8x8xf32>
    %cst_88 = arith.constant dense<0xFF800000> : vector<2x8xf32>
    %207 = vector.multi_reduction <maximumf>, %206, %cst_88 [2] : vector<2x8x8xf32> to vector<2x8xf32>
    %208 = vector.shape_cast %207 : vector<2x8xf32> to vector<2x8x1xf32>
    %209 = vector.broadcast %208 : vector<2x8x1xf32> to vector<2x8x8xf32>
    %210 = arith.subf %206, %209 : vector<2x8x8xf32>
    %211 = math.exp %210 : vector<2x8x8xf32>
    %cst_89 = arith.constant dense<0.000000e+00> : vector<2x8xf32>
    %212 = vector.multi_reduction <add>, %211, %cst_89 [2] : vector<2x8x8xf32> to vector<2x8xf32>
    %213 = vector.shape_cast %212 : vector<2x8xf32> to vector<2x8x1xf32>
    %214 = tpu.reciprocal %213 {approx = true} : vector<2x8x1xf32> -> vector<2x8x1xf32>
    %215 = vector.broadcast %214 : vector<2x8x1xf32> to vector<2x8x8xf32>
    %216 = arith.mulf %211, %215 : vector<2x8x8xf32>
    %217 = arith.truncf %216 : vector<2x8x8xf32> to vector<2x8x8xbf16>
    %cst_90 = arith.constant dense<0.000000e+00> : vector<2x8x16xf32>
    %218 = tpu.matmul %217, %202, %cst_90 {dimension_numbers = #tpu.dot_dimension_numbers<[2], [1], [1], [2], [0, 0, 0, 1, 1, 2], [0], [0]>} : vector<2x8x8xbf16>, vector<2x8x16xbf16>, vector<2x8x16xf32> -> vector<2x8x16xf32>
    %219 = vector.shape_cast %218 : vector<2x8x16xf32> to vector<16x16xf32>
    %220 = arith.truncf %219 : vector<16x16xf32> to vector<16x16xbf16>
    %221 = vector.extract_strided_slice %193 {offsets = [0, 0], sizes = [16, 32], strides = [1, 1]} : vector<32x32xbf16> to vector<16x32xbf16>
    %cst_91 = arith.constant dense<0.000000e+00> : vector<16x32xf32>
    %222 = tpu.matmul %220, %221, %cst_91 {dimension_numbers = #tpu.dot_dimension_numbers<[1], [0], [0], [1], [0, 0, 1, 1], [], []>} : vector<16x16xbf16>, vector<16x32xbf16>, vector<16x32xf32> -> vector<16x32xf32>
    %223 = vector.extract_strided_slice %191 {offsets = [0, 16], sizes = [16, 16], strides = [1, 1]} : vector<16x96xf32> to vector<16x16xf32>
    %224 = vector.shape_cast %223 : vector<16x16xf32> to vector<2x8x16xf32>
    %225 = arith.truncf %224 : vector<2x8x16xf32> to vector<2x8x16xbf16>
    %226 = vector.extract_strided_slice %191 {offsets = [0, 48], sizes = [16, 16], strides = [1, 1]} : vector<16x96xf32> to vector<16x16xf32>
    %227 = vector.shape_cast %226 : vector<16x16xf32> to vector<2x8x16xf32>
    %228 = arith.truncf %227 : vector<2x8x16xf32> to vector<2x8x16xbf16>
    %229 = vector.extract_strided_slice %191 {offsets = [0, 80], sizes = [16, 16], strides = [1, 1]} : vector<16x96xf32> to vector<16x16xf32>
    %230 = vector.shape_cast %229 : vector<16x16xf32> to vector<2x8x16xf32>
    %231 = arith.truncf %230 : vector<2x8x16xf32> to vector<2x8x16xbf16>
    %cst_92 = arith.constant dense<0.000000e+00> : vector<2x8x8xf32>
    %232 = tpu.matmul %225, %228, %cst_92 {dimension_numbers = #tpu.dot_dimension_numbers<[2], [2], [1], [1], [0, 0, 0, 1, 1, 1], [0], [0]>} : vector<2x8x16xbf16>, vector<2x8x16xbf16>, vector<2x8x8xf32> -> vector<2x8x8xf32>
    %cst_93 = arith.constant 2.500000e-01 : f32
    %233 = vector.broadcast %cst_93 : f32 to vector<2x8x8xf32>
    %234 = arith.mulf %232, %233 : vector<2x8x8xf32>
    %235 = arith.addf %234, %2 : vector<2x8x8xf32>
    %cst_94 = arith.constant dense<0xFF800000> : vector<2x8xf32>
    %236 = vector.multi_reduction <maximumf>, %235, %cst_94 [2] : vector<2x8x8xf32> to vector<2x8xf32>
    %237 = vector.shape_cast %236 : vector<2x8xf32> to vector<2x8x1xf32>
    %238 = vector.broadcast %237 : vector<2x8x1xf32> to vector<2x8x8xf32>
    %239 = arith.subf %235, %238 : vector<2x8x8xf32>
    %240 = math.exp %239 : vector<2x8x8xf32>
    %cst_95 = arith.constant dense<0.000000e+00> : vector<2x8xf32>
    %241 = vector.multi_reduction <add>, %240, %cst_95 [2] : vector<2x8x8xf32> to vector<2x8xf32>
    %242 = vector.shape_cast %241 : vector<2x8xf32> to vector<2x8x1xf32>
    %243 = tpu.reciprocal %242 {approx = true} : vector<2x8x1xf32> -> vector<2x8x1xf32>
    %244 = vector.broadcast %243 : vector<2x8x1xf32> to vector<2x8x8xf32>
    %245 = arith.mulf %240, %244 : vector<2x8x8xf32>
    %246 = arith.truncf %245 : vector<2x8x8xf32> to vector<2x8x8xbf16>
    %cst_96 = arith.constant dense<0.000000e+00> : vector<2x8x16xf32>
    %247 = tpu.matmul %246, %231, %cst_96 {dimension_numbers = #tpu.dot_dimension_numbers<[2], [1], [1], [2], [0, 0, 0, 1, 1, 2], [0], [0]>} : vector<2x8x8xbf16>, vector<2x8x16xbf16>, vector<2x8x16xf32> -> vector<2x8x16xf32>
    %248 = vector.shape_cast %247 : vector<2x8x16xf32> to vector<16x16xf32>
    %249 = arith.truncf %248 : vector<16x16xf32> to vector<16x16xbf16>
    %250 = vector.extract_strided_slice %193 {offsets = [16, 0], sizes = [16, 32], strides = [1, 1]} : vector<32x32xbf16> to vector<16x32xbf16>
    %cst_97 = arith.constant dense<0.000000e+00> : vector<16x32xf32>
    %251 = tpu.matmul %249, %250, %cst_97 {dimension_numbers = #tpu.dot_dimension_numbers<[1], [0], [0], [1], [0, 0, 1, 1], [], []>} : vector<16x16xbf16>, vector<16x32xbf16>, vector<16x32xf32> -> vector<16x32xf32>
    %252 = arith.addf %222, %251 : vector<16x32xf32>
    %253 = arith.addf %183, %252 : vector<16x32xf32>
    %c1_98 = arith.constant 1 : index
    %c0_99 = arith.constant 0 : index
    %c0_100 = arith.constant 0 : index
    %254 = vector.load %arg7[%c1_98, %c0_99, %c0_100] : memref<2x1x32xf32, #tpu.memory_space<vmem>>, vector<1x1x32xf32>
    %255 = vector.shape_cast %254 : vector<1x1x32xf32> to vector<1x32xf32>
    %256 = vector.broadcast %255 : vector<1x32xf32> to vector<16x32xf32>
    %257 = arith.addf %253, %256 : vector<16x32xf32>
    %c1_101 = arith.constant 1 : index
    %c0_102 = arith.constant 0 : index
    %c0_103 = arith.constant 0 : index
    %258 = vector.load %arg8[%c1_101, %c0_102, %c0_103] : memref<2x1x32xf32, #tpu.memory_space<vmem>>, vector<1x1x32xf32>
    %259 = vector.shape_cast %258 : vector<1x1x32xf32> to vector<1x32xf32>
    %c1_104 = arith.constant 1 : index
    %c0_105 = arith.constant 0 : index
    %c0_106 = arith.constant 0 : index
    %260 = vector.load %arg9[%c1_104, %c0_105, %c0_106] : memref<2x1x32xf32, #tpu.memory_space<vmem>>, vector<1x1x32xf32>
    %261 = vector.shape_cast %260 : vector<1x1x32xf32> to vector<1x32xf32>
    %cst_107 = arith.constant dense<0.000000e+00> : vector<16xf32>
    %262 = vector.multi_reduction <add>, %257, %cst_107 [1] : vector<16x32xf32> to vector<16xf32>
    %263 = vector.shape_cast %262 : vector<16xf32> to vector<16x1xf32>
    %cst_108 = arith.constant 3.200000e+01 : f32
    %264 = vector.broadcast %cst_108 : f32 to vector<16x1xf32>
    %265 = arith.divf %263, %264 : vector<16x1xf32>
    %266 = vector.broadcast %265 : vector<16x1xf32> to vector<16x32xf32>
    %267 = arith.subf %257, %266 : vector<16x32xf32>
    %268 = arith.mulf %267, %267 : vector<16x32xf32>
    %cst_109 = arith.constant dense<0.000000e+00> : vector<16xf32>
    %269 = vector.multi_reduction <add>, %268, %cst_109 [1] : vector<16x32xf32> to vector<16xf32>
    %270 = vector.shape_cast %269 : vector<16xf32> to vector<16x1xf32>
    %cst_110 = arith.constant 3.200000e+01 : f32
    %271 = vector.broadcast %cst_110 : f32 to vector<16x1xf32>
    %272 = arith.divf %270, %271 : vector<16x1xf32>
    %273 = vector.broadcast %265 : vector<16x1xf32> to vector<16x32xf32>
    %274 = arith.subf %257, %273 : vector<16x32xf32>
    %cst_111 = arith.constant 9.99999996E-13 : f32
    %275 = vector.broadcast %cst_111 : f32 to vector<16x1xf32>
    %276 = arith.addf %272, %275 : vector<16x1xf32>
    %277 = math.rsqrt %276 : vector<16x1xf32>
    %278 = vector.broadcast %277 : vector<16x1xf32> to vector<16x32xf32>
    %279 = arith.mulf %274, %278 : vector<16x32xf32>
    %280 = vector.broadcast %259 : vector<1x32xf32> to vector<16x32xf32>
    %281 = arith.mulf %279, %280 : vector<16x32xf32>
    %282 = vector.broadcast %261 : vector<1x32xf32> to vector<16x32xf32>
    %283 = arith.addf %281, %282 : vector<16x32xf32>
    %284 = arith.truncf %283 : vector<16x32xf32> to vector<16x32xbf16>
    %c1_112 = arith.constant 1 : index
    %c0_113 = arith.constant 0 : index
    %c0_114 = arith.constant 0 : index
    %285 = vector.load %arg10[%c1_112, %c0_113, %c0_114] : memref<2x32x64xbf16, #tpu.memory_space<vmem>>, vector<1x32x64xbf16>
    %286 = vector.shape_cast %285 : vector<1x32x64xbf16> to vector<32x64xbf16>
    %cst_115 = arith.constant dense<0.000000e+00> : vector<16x64xf32>
    %287 = tpu.matmul %284, %286, %cst_115 {dimension_numbers = #tpu.dot_dimension_numbers<[1], [0], [0], [1], [0, 0, 1, 1], [], []>} : vector<16x32xbf16>, vector<32x64xbf16>, vector<16x64xf32> -> vector<16x64xf32>
    %c1_116 = arith.constant 1 : index
    %c0_117 = arith.constant 0 : index
    %c0_118 = arith.constant 0 : index
    %288 = vector.load %arg11[%c1_116, %c0_117, %c0_118] : memref<2x1x64xf32, #tpu.memory_space<vmem>>, vector<1x1x64xf32>
    %289 = vector.shape_cast %288 : vector<1x1x64xf32> to vector<1x64xf32>
    %290 = vector.broadcast %289 : vector<1x64xf32> to vector<16x64xf32>
    %291 = arith.addf %287, %290 : vector<16x64xf32>
    %292 = arith.mulf %291, %291 : vector<16x64xf32>
    %293 = arith.mulf %291, %292 : vector<16x64xf32>
    %cst_119 = arith.constant 4.471500e-02 : f32
    %294 = vector.broadcast %cst_119 : f32 to vector<16x64xf32>
    %295 = arith.mulf %294, %293 : vector<16x64xf32>
    %296 = arith.addf %291, %295 : vector<16x64xf32>
    %cst_120 = arith.constant 0.797884583 : f32
    %297 = vector.broadcast %cst_120 : f32 to vector<16x64xf32>
    %298 = arith.mulf %297, %296 : vector<16x64xf32>
    %299 = math.tanh %298 : vector<16x64xf32>
    %cst_121 = arith.constant 1.000000e+00 : f32
    %300 = vector.broadcast %cst_121 : f32 to vector<16x64xf32>
    %301 = arith.addf %300, %299 : vector<16x64xf32>
    %cst_122 = arith.constant 5.000000e-01 : f32
    %302 = vector.broadcast %cst_122 : f32 to vector<16x64xf32>
    %303 = arith.mulf %302, %301 : vector<16x64xf32>
    %304 = arith.mulf %291, %303 : vector<16x64xf32>
    %305 = arith.truncf %304 : vector<16x64xf32> to vector<16x64xbf16>
    %c1_123 = arith.constant 1 : index
    %c0_124 = arith.constant 0 : index
    %c0_125 = arith.constant 0 : index
    %306 = vector.load %arg12[%c1_123, %c0_124, %c0_125] : memref<2x64x32xbf16, #tpu.memory_space<vmem>>, vector<1x64x32xbf16>
    %307 = vector.shape_cast %306 : vector<1x64x32xbf16> to vector<64x32xbf16>
    %cst_126 = arith.constant dense<0.000000e+00> : vector<16x32xf32>
    %308 = tpu.matmul %305, %307, %cst_126 {dimension_numbers = #tpu.dot_dimension_numbers<[1], [0], [0], [1], [0, 0, 1, 1], [], []>} : vector<16x64xbf16>, vector<64x32xbf16>, vector<16x32xf32> -> vector<16x32xf32>
    %c1_127 = arith.constant 1 : index
    %c0_128 = arith.constant 0 : index
    %c0_129 = arith.constant 0 : index
    %309 = vector.load %arg13[%c1_127, %c0_128, %c0_129] : memref<2x1x32xf32, #tpu.memory_space<vmem>>, vector<1x1x32xf32>
    %310 = vector.shape_cast %309 : vector<1x1x32xf32> to vector<1x32xf32>
    %311 = vector.broadcast %310 : vector<1x32xf32> to vector<16x32xf32>
    %312 = arith.addf %308, %311 : vector<16x32xf32>
    %313 = arith.addf %283, %312 : vector<16x32xf32>
    %c1_130 = arith.constant 1 : index
    %c0_131 = arith.constant 0 : index
    %c0_132 = arith.constant 0 : index
    %314 = vector.load %arg14[%c1_130, %c0_131, %c0_132] : memref<2x1x32xf32, #tpu.memory_space<vmem>>, vector<1x1x32xf32>
    %315 = vector.shape_cast %314 : vector<1x1x32xf32> to vector<1x32xf32>
    %c1_133 = arith.constant 1 : index
    %c0_134 = arith.constant 0 : index
    %c0_135 = arith.constant 0 : index
    %316 = vector.load %arg15[%c1_133, %c0_134, %c0_135] : memref<2x1x32xf32, #tpu.memory_space<vmem>>, vector<1x1x32xf32>
    %317 = vector.shape_cast %316 : vector<1x1x32xf32> to vector<1x32xf32>
    %cst_136 = arith.constant dense<0.000000e+00> : vector<16xf32>
    %318 = vector.multi_reduction <add>, %313, %cst_136 [1] : vector<16x32xf32> to vector<16xf32>
    %319 = vector.shape_cast %318 : vector<16xf32> to vector<16x1xf32>
    %cst_137 = arith.constant 3.200000e+01 : f32
    %320 = vector.broadcast %cst_137 : f32 to vector<16x1xf32>
    %321 = arith.divf %319, %320 : vector<16x1xf32>
    %322 = vector.broadcast %321 : vector<16x1xf32> to vector<16x32xf32>
    %323 = arith.subf %313, %322 : vector<16x32xf32>
    %324 = arith.mulf %323, %323 : vector<16x32xf32>
    %cst_138 = arith.constant dense<0.000000e+00> : vector<16xf32>
    %325 = vector.multi_reduction <add>, %324, %cst_138 [1] : vector<16x32xf32> to vector<16xf32>
    %326 = vector.shape_cast %325 : vector<16xf32> to vector<16x1xf32>
    %cst_139 = arith.constant 3.200000e+01 : f32
    %327 = vector.broadcast %cst_139 : f32 to vector<16x1xf32>
    %328 = arith.divf %326, %327 : vector<16x1xf32>
    %329 = vector.broadcast %321 : vector<16x1xf32> to vector<16x32xf32>
    %330 = arith.subf %313, %329 : vector<16x32xf32>
    %cst_140 = arith.constant 9.99999996E-13 : f32
    %331 = vector.broadcast %cst_140 : f32 to vector<16x1xf32>
    %332 = arith.addf %328, %331 : vector<16x1xf32>
    %333 = math.rsqrt %332 : vector<16x1xf32>
    %334 = vector.broadcast %333 : vector<16x1xf32> to vector<16x32xf32>
    %335 = arith.mulf %330, %334 : vector<16x32xf32>
    %336 = vector.broadcast %315 : vector<1x32xf32> to vector<16x32xf32>
    %337 = arith.mulf %335, %336 : vector<16x32xf32>
    %338 = vector.broadcast %317 : vector<1x32xf32> to vector<16x32xf32>
    %339 = arith.addf %337, %338 : vector<16x32xf32>
    %340 = vector.shape_cast %339 : vector<16x32xf32> to vector<2x8x32xf32>
    %341 = vector.extract_strided_slice %340 {offsets = [0, 0, 0], sizes = [2, 1, 32], strides = [1, 1, 1]} : vector<2x8x32xf32> to vector<2x1x32xf32>
    %342 = vector.shape_cast %341 : vector<2x1x32xf32> to vector<2x32xf32>
    %343 = arith.truncf %342 : vector<2x32xf32> to vector<2x32xbf16>
    %c0_141 = arith.constant 0 : index
    %c0_142 = arith.constant 0 : index
    %344 = vector.load %arg16[%c0_141, %c0_142] : memref<32x32xbf16, #tpu.memory_space<vmem>>, vector<32x32xbf16>
    %cst_143 = arith.constant dense<0.000000e+00> : vector<2x32xf32>
    %345 = tpu.matmul %343, %344, %cst_143 {dimension_numbers = #tpu.dot_dimension_numbers<[1], [0], [0], [1], [0, 0, 1, 1], [], []>} : vector<2x32xbf16>, vector<32x32xbf16>, vector<2x32xf32> -> vector<2x32xf32>
    %c0_144 = arith.constant 0 : index
    %c0_145 = arith.constant 0 : index
    %346 = vector.load %arg17[%c0_144, %c0_145] : memref<1x32xf32, #tpu.memory_space<vmem>>, vector<1x32xf32>
    %347 = vector.broadcast %346 : vector<1x32xf32> to vector<2x32xf32>
    %348 = arith.addf %345, %347 : vector<2x32xf32>
    %349 = math.tanh %348 : vector<2x32xf32>
    %c0_146 = arith.constant 0 : index
    %c0_147 = arith.constant 0 : index
    %350 = vector.load %arg18[%c0_146, %c0_147] : memref<16x32xbf16, #tpu.memory_space<vmem>>, vector<16x32xbf16>
    %351 = arith.truncf %349 : vector<2x32xf32> to vector<2x32xbf16>
    %cst_148 = arith.constant dense<0.000000e+00> : vector<2x16xf32>
    %352 = tpu.matmul %351, %350, %cst_148 {dimension_numbers = #tpu.dot_dimension_numbers<[1], [1], [0], [0], [0, 0, 1, 0], [], []>} : vector<2x32xbf16>, vector<16x32xbf16>, vector<2x16xf32> -> vector<2x16xf32>
    %cst_149 = arith.constant dense<0xFF800000> : vector<2xf32>
    %353 = vector.multi_reduction <maximumf>, %352, %cst_149 [1] : vector<2x16xf32> to vector<2xf32>
    %354 = vector.shape_cast %353 : vector<2xf32> to vector<2x1xf32>
    %355 = vector.broadcast %354 : vector<2x1xf32> to vector<2x16xf32>
    %356 = arith.subf %352, %355 : vector<2x16xf32>
    %357 = math.exp %356 : vector<2x16xf32>
    %cst_150 = arith.constant dense<0.000000e+00> : vector<2xf32>
    %358 = vector.multi_reduction <add>, %357, %cst_150 [1] : vector<2x16xf32> to vector<2xf32>
    %359 = vector.shape_cast %358 : vector<2xf32> to vector<2x1xf32>
    %360 = tpu.reciprocal %359 {approx = true} : vector<2x1xf32> -> vector<2x1xf32>
    %361 = vector.broadcast %360 : vector<2x1xf32> to vector<2x16xf32>
    %362 = arith.mulf %357, %361 : vector<2x16xf32>
    %363 = arith.truncf %362 : vector<2x16xf32> to vector<2x16xbf16>
    %cst_151 = arith.constant dense<0.000000e+00> : vector<2x32xf32>
    %364 = tpu.matmul %363, %350, %cst_151 {dimension_numbers = #tpu.dot_dimension_numbers<[1], [0], [0], [1], [0, 0, 1, 1], [], []>} : vector<2x16xbf16>, vector<16x32xbf16>, vector<2x32xf32> -> vector<2x32xf32>
    %365 = arith.truncf %349 : vector<2x32xf32> to vector<2x32xbf16>
    %c0_152 = arith.constant 0 : index
    %c0_153 = arith.constant 0 : index
    %366 = vector.load %arg19[%c0_152, %c0_153] : memref<32x2xbf16, #tpu.memory_space<vmem>>, vector<32x2xbf16>
    %cst_154 = arith.constant dense<0.000000e+00> : vector<2x2xf32>
    %367 = tpu.matmul %365, %366, %cst_154 {dimension_numbers = #tpu.dot_dimension_numbers<[1], [0], [0], [1], [0, 0, 1, 1], [], []>} : vector<2x32xbf16>, vector<32x2xbf16>, vector<2x2xf32> -> vector<2x2xf32>
    %368 = arith.truncf %364 : vector<2x32xf32> to vector<2x32xbf16>
    %c0_155 = arith.constant 0 : index
    %c0_156 = arith.constant 0 : index
    %369 = vector.load %arg20[%c0_155, %c0_156] : memref<32x2xbf16, #tpu.memory_space<vmem>>, vector<32x2xbf16>
    %cst_157 = arith.constant dense<0.000000e+00> : vector<2x2xf32>
    %370 = tpu.matmul %368, %369, %cst_157 {dimension_numbers = #tpu.dot_dimension_numbers<[1], [0], [0], [1], [0, 0, 1, 1], [], []>} : vector<2x32xbf16>, vector<32x2xbf16>, vector<2x2xf32> -> vector<2x2xf32>
    %371 = arith.addf %367, %370 : vector<2x2xf32>
    %c0_158 = arith.constant 0 : index
    %c0_159 = arith.constant 0 : index
    %372 = vector.load %arg21[%c0_158, %c0_159] : memref<1x2xf32, #tpu.memory_space<vmem>>, vector<1x2xf32>
    %373 = vector.broadcast %372 : vector<1x2xf32> to vector<2x2xf32>
    %374 = arith.addf %371, %373 : vector<2x2xf32>
    %c0_160 = arith.constant 0 : index
    %c0_161 = arith.constant 0 : index
    %375 = vector.load %arg22[%c0_160, %c0_161] : memref<2x2xf32, #tpu.memory_space<vmem>>, vector<2x2xf32>
    tpu.vector_store %arg22[%c0_160, %c0_161], %374 {strides = array<i32>} : memref<2x2xf32, #tpu.memory_space<vmem>>, vector<2x2xf32>,
    return
  }
}

</mosaic_0001>

<llo_original>
// kernel: tpu_custom_call.1
$region0: #{tpu_custom_call.1}
  #allocation0 [shape = 'u32[]', space=smem, size = 0x4, offset = 0x4, fixed_abs, tag = 'smem constant byte address 0x4 - core index']
  #allocation1 [shape = 'u32[144,128]{1,0:T(1,128)}', space=vmem, size = 0x12000, scoped, tag = 'internal scratch']
  %s0 = inlined_call_operand.vmem [shape: f32[16,32], index: 0, kind: input, shape index: {}]
  %s1 = inlined_call_operand.hbm [shape: f32[2,1,8], index: 1, kind: input, shape index: {}]
  %s2 = inlined_call_operand.hbm [shape: f32[1,32], index: 2, kind: input, shape index: {}]
  %s3 = inlined_call_operand.hbm [shape: f32[1,32], index: 3, kind: input, shape index: {}]
  %s4 = inlined_call_operand.vmem [shape: bf16[2,32,96], index: 4, kind: input, shape index: {}]
  %s5 = inlined_call_operand.hbm [shape: f32[2,1,96], index: 5, kind: input, shape index: {}]
  %s6 = inlined_call_operand.vmem [shape: bf16[2,32,32], index: 6, kind: input, shape index: {}]
  %s7 = inlined_call_operand.hbm [shape: f32[2,1,32], index: 7, kind: input, shape index: {}]
  %s8 = inlined_call_operand.hbm [shape: f32[2,1,32], index: 8, kind: input, shape index: {}]
  %s9 = inlined_call_operand.vmem [shape: f32[2,1,32], index: 9, kind: input, shape index: {}]
  %s10 = inlined_call_operand.vmem [shape: bf16[2,32,64], index: 10, kind: input, shape index: {}]
  %s11 = inlined_call_operand.hbm [shape: f32[2,1,64], index: 11, kind: input, shape index: {}]
  %s12 = inlined_call_operand.vmem [shape: bf16[2,64,32], index: 12, kind: input, shape index: {}]
  %s13 = inlined_call_operand.vmem [shape: f32[2,1,32], index: 13, kind: input, shape index: {}]
  %s14 = inlined_call_operand.vmem [shape: f32[2,1,32], index: 14, kind: input, shape index: {}]
  %s15 = inlined_call_operand.vmem [shape: f32[2,1,32], index: 15, kind: input, shape index: {}]
  %s16 = inlined_call_operand.vmem [shape: bf16[32,32], index: 16, kind: input, shape index: {}]
  %s17 = inlined_call_operand.vmem [shape: f32[1,32], index: 17, kind: input, shape index: {}]
  %s18 = inlined_call_operand.vmem [shape: bf16[16,32], index: 18, kind: input, shape index: {}]
  %s19 = inlined_call_operand.vmem [shape: bf16[32,2], index: 19, kind: input, shape index: {}]
  %s20 = inlined_call_operand.vmem [shape: bf16[32,2], index: 20, kind: input, shape index: {}]
  %s21 = inlined_call_operand.vmem [shape: f32[1,2], index: 21, kind: input, shape index: {}]
  %s22 = inlined_call_operand.hbm [shape: f32[2,2], index: 22, kind: output, shape index: {}]
  %s23 = sld [smem:[#allocation0]]
  $region126: #{tpu_custom_call.1} parent=0
    _
  %s25 = ssub.s32 1, %s23
  %s26 = scalar_select 0, %s25, %s23
  $region1: #{tpu_custom_call.1} parent=0
    #allocation2 [shape = 'u8[1024]{0}', space=vmem, size = 0x400, scoped, tag = 'input window, operand 1, single buffered']
    #allocation3 [shape = 's32[1]{0}', space=sflag, size = 0x4, scoped, tag = 'scoped memory for tpu_custom_call.1']
    #allocation4 [shape = 's32[1]{0}', space=sflag, size = 0x4, scoped, tag = 'scoped memory for tpu_custom_call.1']
    #allocation5 [shape = 'u8[512]{0}', space=vmem, size = 0x400, scoped, tag = 'input window, operand 2, single buffered']
    #allocation6 [shape = 's32[1]{0}', space=sflag, size = 0x4, scoped, tag = 'scoped memory for tpu_custom_call.1']
    #allocation7 [shape = 'u8[512]{0}', space=vmem, size = 0x400, scoped, tag = 'input window, operand 3, single buffered']
    #allocation8 [shape = 'u8[1024]{0}', space=vmem, size = 0x400, scoped, tag = 'input window, operand 5, single buffered']
    #allocation9 [shape = 's32[1]{0}', space=sflag, size = 0x4, scoped, tag = 'scoped memory for tpu_custom_call.1']
    #allocation10 [shape = 'u8[1024]{0}', space=vmem, size = 0x400, scoped, tag = 'input window, operand 7, single buffered']
    #allocation11 [shape = 'u8[1024]{0}', space=vmem, size = 0x400, scoped, tag = 'input window, operand 8, single buffered']
    #allocation12 [shape = 's32[1]{0}', space=sflag, size = 0x4, scoped, tag = 'scoped memory for tpu_custom_call.1']
    #allocation13 [shape = 'u8[1024]{0}', space=vmem, size = 0x400, scoped, tag = 'input window, operand 11, single buffered']
    #allocation14 [shape = 'u8[1024]{0}', space=vmem, size = 0x400, scoped, tag = 'output window, operand 0, single buffered']
    %27 = vsyncpa [#allocation3], 0
    %28 = vsyncpa [#allocation6], 0
    %29 = vsyncpa [#allocation9], 0
    %30 = vsyncpa [#allocation12], 0
    %31 = vsyncpa [#allocation4], 0
    // Predicated region
    $region2: #{tpu_custom_call.1} parent=1 // pred_check
      _
    $region3: #{tpu_custom_call.1} parent=1 // pred_check_branch
      %33 = sbr.rel (0) target = $region5
    $region4: #{tpu_custom_call.1} parent=1 // pred_region
      _
    $region5: #{tpu_custom_call.1} parent=1 // pred_fallthru
      _
    // Predicated region
    $region6: #{tpu_custom_call.1} parent=1 // pred_check
      _
    $region7: #{tpu_custom_call.1} parent=1 // pred_check_branch
      %35 = sbr.rel (0) target = $region9
    $region8: #{tpu_custom_call.1} parent=1 // pred_region
      %s37 = ssub.s32 32, 32
      %38 = vsyncadd [#allocation3], %s37
      %s39 = sshll.u32 [#allocation2], 4
      %s40 = int_to_ptr.vmem [resolvable:$true] %s39
      %45 = dma.hbm_to_vmem [thread:$0]  %s1, 32, %s40, [#allocation3], 16, 16, 1
    $region9: #{tpu_custom_call.1} parent=1 // pred_fallthru
      _
    // Predicated region
    $region10: #{tpu_custom_call.1} parent=1 // pred_check
      _
    $region11: #{tpu_custom_call.1} parent=1 // pred_check_branch
      %47 = sbr.rel (0) target = $region13
    $region12: #{tpu_custom_call.1} parent=1 // pred_region
      %s49 = ssub.s32 16, 16
      %50 = vsyncadd [#allocation6], %s49
      %s52 = sshll.u32 [#allocation5], 4
      %s53 = int_to_ptr.vmem [resolvable:$true] %s52
      %55 = dma.hbm_to_vmem [thread:$0]  %s2, 16, %s53, [#allocation6]
    $region13: #{tpu_custom_call.1} parent=1 // pred_fallthru
      _
    // Predicated region
    $region14: #{tpu_custom_call.1} parent=1 // pred_check
      _
    $region15: #{tpu_custom_call.1} parent=1 // pred_check_branch
      %57 = sbr.rel (0) target = $region17
    $region16: #{tpu_custom_call.1} parent=1 // pred_region
      %s59 = ssub.s32 16, 16
      %60 = vsyncadd [#allocation6], %s59
      %s62 = sshll.u32 [#allocation7], 4
      %s63 = int_to_ptr.vmem [resolvable:$true] %s62
      %65 = dma.hbm_to_vmem [thread:$0]  %s3, 16, %s63, [#allocation6]
    $region17: #{tpu_custom_call.1} parent=1 // pred_fallthru
      _
    // Predicated region
    $region18: #{tpu_custom_call.1} parent=1 // pred_check
      _
    $region19: #{tpu_custom_call.1} parent=1 // pred_check_branch
      %67 = sbr.rel (0) target = $region21
    $region20: #{tpu_custom_call.1} parent=1 // pred_region
      _
    $region21: #{tpu_custom_call.1} parent=1 // pred_fallthru
      _
    // Predicated region
    $region22: #{tpu_custom_call.1} parent=1 // pred_check
      _
    $region23: #{tpu_custom_call.1} parent=1 // pred_check_branch
      %69 = sbr.rel (0) target = $region25
    $region24: #{tpu_custom_call.1} parent=1 // pred_region
      %s71 = ssub.s32 32, 32
      %72 = vsyncadd [#allocation9], %s71
      %s73 = sshll.u32 [#allocation8], 4
      %s74 = int_to_ptr.vmem [resolvable:$true] %s73
      %79 = dma.hbm_to_vmem [thread:$0]  %s5, 32, %s74, [#allocation9], 16, 16, 1
    $region25: #{tpu_custom_call.1} parent=1 // pred_fallthru
      _
    // Predicated region
    $region26: #{tpu_custom_call.1} parent=1 // pred_check
      _
    $region27: #{tpu_custom_call.1} parent=1 // pred_check_branch
      %81 = sbr.rel (0) target = $region29
    $region28: #{tpu_custom_call.1} parent=1 // pred_region
      _
    $region29: #{tpu_custom_call.1} parent=1 // pred_fallthru
      _
    // Predicated region
    $region30: #{tpu_custom_call.1} parent=1 // pred_check
      _
    $region31: #{tpu_custom_call.1} parent=1 // pred_check_branch
      %83 = sbr.rel (0) target = $region33
    $region32: #{tpu_custom_call.1} parent=1 // pred_region
      %s85 = ssub.s32 32, 32
      %86 = vsyncadd [#allocation9], %s85
      %s87 = sshll.u32 [#allocation10], 4
      %s88 = int_to_ptr.vmem [resolvable:$true] %s87
      %93 = dma.hbm_to_vmem [thread:$0]  %s7, 32, %s88, [#allocation9], 16, 16, 1
    $region33: #{tpu_custom_call.1} parent=1 // pred_fallthru
      _
    // Predicated region
    $region34: #{tpu_custom_call.1} parent=1 // pred_check
      _
    $region35: #{tpu_custom_call.1} parent=1 // pred_check_branch
      %95 = sbr.rel (0) target = $region37
    $region36: #{tpu_custom_call.1} parent=1 // pred_region
      %s97 = ssub.s32 32, 32
      %98 = vsyncadd [#allocation12], %s97
      %s99 = sshll.u32 [#allocation11], 4
      %s100 = int_to_ptr.vmem [resolvable:$true] %s99
      %105 = dma.hbm_to_vmem [thread:$0]  %s8, 32, %s100, [#allocation12], 16, 16, 1
    $region37: #{tpu_custom_call.1} parent=1 // pred_fallthru
      _
    // Predicated region
    $region38: #{tpu_custom_call.1} parent=1 // pred_check
      _
    $region39: #{tpu_custom_call.1} parent=1 // pred_check_branch
      %107 = sbr.rel (0) target = $region41
    $region40: #{tpu_custom_call.1} parent=1 // pred_region
      _
    $region41: #{tpu_custom_call.1} parent=1 // pred_fallthru
      _
    // Predicated region
    $region42: #{tpu_custom_call.1} parent=1 // pred_check
      _
    $region43: #{tpu_custom_call.1} parent=1 // pred_check_branch
      %109 = sbr.rel (0) target = $region45
    $region44: #{tpu_custom_call.1} parent=1 // pred_region
      _
    $region45: #{tpu_custom_call.1} parent=1 // pred_fallthru
      _
    // Predicated region
    $region46: #{tpu_custom_call.1} parent=1 // pred_check
      _
    $region47: #{tpu_custom_call.1} parent=1 // pred_check_branch
      %111 = sbr.rel (0) target = $region49
    $region48: #{tpu_custom_call.1} parent=1 // pred_region
      %s113 = ssub.s32 32, 32
      %114 = vsyncadd [#allocation12], %s113
      %s115 = sshll.u32 [#allocation13], 4
      %s116 = int_to_ptr.vmem [resolvable:$true] %s115
      %121 = dma.hbm_to_vmem [thread:$0]  %s11, 32, %s116, [#allocation12], 16, 16, 1
    $region49: #{tpu_custom_call.1} parent=1 // pred_fallthru
      _
    // Predicated region
    $region50: #{tpu_custom_call.1} parent=1 // pred_check
      _
    $region51: #{tpu_custom_call.1} parent=1 // pred_check_branch
      %123 = sbr.rel (0) target = $region53
    $region52: #{tpu_custom_call.1} parent=1 // pred_region
      _
    $region53: #{tpu_custom_call.1} parent=1 // pred_fallthru
      _
    // Predicated region
    $region54: #{tpu_custom_call.1} parent=1 // pred_check
      _
    $region55: #{tpu_custom_call.1} parent=1 // pred_check_branch
      %125 = sbr.rel (0) target = $region57
    $region56: #{tpu_custom_call.1} parent=1 // pred_region
      _
    $region57: #{tpu_custom_call.1} parent=1 // pred_fallthru
      _
    // Predicated region
    $region58: #{tpu_custom_call.1} parent=1 // pred_check
      _
    $region59: #{tpu_custom_call.1} parent=1 // pred_check_branch
      %127 = sbr.rel (0) target = $region61
    $region60: #{tpu_custom_call.1} parent=1 // pred_region
      _
    $region61: #{tpu_custom_call.1} parent=1 // pred_fallthru
      _
    // Predicated region
    $region62: #{tpu_custom_call.1} parent=1 // pred_check
      _
    $region63: #{tpu_custom_call.1} parent=1 // pred_check_branch
      %129 = sbr.rel (0) target = $region65
    $region64: #{tpu_custom_call.1} parent=1 // pred_region
      _
    $region65: #{tpu_custom_call.1} parent=1 // pred_fallthru
      _
    // Predicated region
    $region66: #{tpu_custom_call.1} parent=1 // pred_check
      _
    $region67: #{tpu_custom_call.1} parent=1 // pred_check_branch
      %131 = sbr.rel (0) target = $region69
    $region68: #{tpu_custom_call.1} parent=1 // pred_region
      _
    $region69: #{tpu_custom_call.1} parent=1 // pred_fallthru
      _
    // Predicated region
    $region70: #{tpu_custom_call.1} parent=1 // pred_check
      _
    $region71: #{tpu_custom_call.1} parent=1 // pred_check_branch
      %133 = sbr.rel (0) target = $region73
    $region72: #{tpu_custom_call.1} parent=1 // pred_region
      _
    $region73: #{tpu_custom_call.1} parent=1 // pred_fallthru
      _
    // Predicated region
    $region74: #{tpu_custom_call.1} parent=1 // pred_check
      _
    $region75: #{tpu_custom_call.1} parent=1 // pred_check_branch
      %135 = sbr.rel (0) target = $region77
    $region76: #{tpu_custom_call.1} parent=1 // pred_region
      _
    $region77: #{tpu_custom_call.1} parent=1 // pred_fallthru
      _
    // Predicated region
    $region78: #{tpu_custom_call.1} parent=1 // pred_check
      _
    $region79: #{tpu_custom_call.1} parent=1 // pred_check_branch
      %137 = sbr.rel (0) target = $region81
    $region80: #{tpu_custom_call.1} parent=1 // pred_region
      _
    $region81: #{tpu_custom_call.1} parent=1 // pred_fallthru
      _
    // Predicated region
    $region82: #{tpu_custom_call.1} parent=1 // pred_check
      _
    $region83: #{tpu_custom_call.1} parent=1 // pred_check_branch
      %139 = sbr.rel (0) target = $region85
    $region84: #{tpu_custom_call.1} parent=1 // pred_region
      _
    $region85: #{tpu_custom_call.1} parent=1 // pred_fallthru
      _
    // Predicated region
    $region86: #{tpu_custom_call.1} parent=1 // pred_check
      _
    $region87: #{tpu_custom_call.1} parent=1 // pred_check_branch
      %141 = sbr.rel (0) target = $region89
    $region88: #{tpu_custom_call.1} parent=1 // pred_region
      _
    $region89: #{tpu_custom_call.1} parent=1 // pred_fallthru
      _
    // Predicated region
    $region90: #{tpu_custom_call.1} parent=1 // pred_check
      _
    $region91: #{tpu_custom_call.1} parent=1 // pred_check_branch
      %143 = sbr.rel (0) target = $region93
    $region92: #{tpu_custom_call.1} parent=1 // pred_region
      %144 = dma.done [#allocation3], 32
    $region93: #{tpu_custom_call.1} parent=1 // pred_fallthru
      _
    // Predicated region
    $region94: #{tpu_custom_call.1} parent=1 // pred_check
      _
    $region95: #{tpu_custom_call.1} parent=1 // pred_check_branch
      %146 = sbr.rel (0) target = $region97
    $region96: #{tpu_custom_call.1} parent=1 // pred_region
      %147 = dma.done [#allocation6], 16
    $region97: #{tpu_custom_call.1} parent=1 // pred_fallthru
      _
    // Predicated region
    $region98: #{tpu_custom_call.1} parent=1 // pred_check
      _
    $region99: #{tpu_custom_call.1} parent=1 // pred_check_branch
      %149 = sbr.rel (0) target = $region101
    $region100: #{tpu_custom_call.1} parent=1 // pred_region
      %150 = dma.done [#allocation6], 16
    $region101: #{tpu_custom_call.1} parent=1 // pred_fallthru
      _
    // Predicated region
    $region102: #{tpu_custom_call.1} parent=1 // pred_check
      _
    $region103: #{tpu_custom_call.1} parent=1 // pred_check_branch
      %152 = sbr.rel (0) target = $region105
    $region104: #{tpu_custom_call.1} parent=1 // pred_region
      %153 = dma.done [#allocation9], 32
    $region105: #{tpu_custom_call.1} parent=1 // pred_fallthru
      _
    // Predicated region
    $region106: #{tpu_custom_call.1} parent=1 // pred_check
      _
    $region107: #{tpu_custom_call.1} parent=1 // pred_check_branch
      %155 = sbr.rel (0) target = $region109
    $region108: #{tpu_custom_call.1} parent=1 // pred_region
      %156 = dma.done [#allocation9], 32
    $region109: #{tpu_custom_call.1} parent=1 // pred_fallthru
      _
    // Predicated region
    $region110: #{tpu_custom_call.1} parent=1 // pred_check
      _
    $region111: #{tpu_custom_call.1} parent=1 // pred_check_branch
      %158 = sbr.rel (0) target = $region113
    $region112: #{tpu_custom_call.1} parent=1 // pred_region
      %159 = dma.done [#allocation12], 32
    $region113: #{tpu_custom_call.1} parent=1 // pred_fallthru
      _
    // Predicated region
    $region114: #{tpu_custom_call.1} parent=1 // pred_check
      _
    $region115: #{tpu_custom_call.1} parent=1 // pred_check_branch
      %161 = sbr.rel (0) target = $region117
    $region116: #{tpu_custom_call.1} parent=1 // pred_region
      %162 = dma.done [#allocation12], 32
    $region117: #{tpu_custom_call.1} parent=1 // pred_fallthru
      _
    %v164 = vld [vmem:[#allocation2] sm:$0x1]
    %v165 = vld [vmem:[#allocation2 + $0x1] sm:$0x1]
    %v168 = vlaneseq
    %v169 = vshrl.u32 %v168, 7
    %v170 = vsub.s32 0, %v169
    %v171 = vrot.slane %v164, %v170
    %v172 = vlaneseq
    %v173 = vshrl.u32 %v172, 7
    %v174 = vsub.s32 0, %v173
    %v175 = vrot.slane %v165, %v174
    %v178 = vld [vmem:[%s0] sm:$0xff]
    %v179 = vld [vmem:[%s0 + $0x8] sm:$0xff]
    %v180 = vld [vmem:[#allocation5] sm:$0x1]
    %v181 = vld [vmem:[#allocation7] sm:$0x1]
    %vm182 = vcmask 261120
    %v183 = vsel %vm182, %v178, 0.0
    %184 = vadd.xlane.f32.xlu0 %v183
    %v185 = vpop.xlane.xlu0 %184
    %v186 = vsel %vm182, %v179, 0.0
    %187 = vadd.xlane.f32.xlu0 %v186
    %v188 = vpop.xlane.xlu0 %187
    %v189 = vrcp.pop 32.0
    %v190 = vmul.f32 %v185, %v189
    %v191 = vmul.f32 %v188, %v189
    %v192 = vsub.f32 %v178, %v190
    %v193 = vsub.f32 %v179, %v191
    %v194 = vmul.f32 %v192, %v192
    %v195 = vmul.f32 %v193, %v193
    %v196 = vsel %vm182, %v194, 0.0
    %197 = vadd.xlane.f32.xlu0 %v196
    %v198 = vpop.xlane.xlu0 %197
    %v199 = vsel %vm182, %v195, 0.0
    %200 = vadd.xlane.f32.xlu0 %v199
    %v201 = vpop.xlane.xlu0 %200
    %v202 = vmul.f32 %v198, %v189
    %v203 = vmul.f32 %v201, %v189
    %v204 = vadd.f32 %v202, 1e-12
    %v205 = vadd.f32 %v203, 1e-12
    %v206 = vrsqrt.pop %v204
    %v207 = vrsqrt.pop %v205
    %v208 = vmul.f32 %v192, %v206
    %v209 = vmul.f32 %v193, %v207
    %v211 = vlaneseq
    %v212 = vshrl.u32 %v211, 7
    %v213 = vsub.s32 0, %v212
    %v214 = vrot.slane %v180, %v213
    %v216 = vmul.f32 %v208, %v214
    %v217 = vmul.f32 %v209, %v214
    %v219 = vlaneseq
    %v220 = vshrl.u32 %v219, 7
    %v221 = vsub.s32 0, %v220
    %v222 = vrot.slane %v181, %v221
    %v224 = vadd.f32 %v216, %v222
    %v225 = vadd.f32 %v217, %v222
    %v226 = vpack.c.bf16 %v225, %v224
    %v227 = vld [vmem:[%s4] sm:$0xf]
    %v228 = vld [vmem:[%s4 + $0x4] sm:$0xf]
    %v229 = vld [vmem:[%s4 + $0x8] sm:$0xf]
    %v230 = vld [vmem:[%s4 + $0xc] sm:$0xf]
    %v231 = vld [vmem:[#allocation8] sm:$0x1]
    %v233 = vlaneseq
    %v234 = vshrl.u32 %v233, 7
    %v235 = vsub.s32 0, %v234
    %v236 = vrot.slane %v231, %v235
    %v242 = vunpack.c.l.b16 %v227
    %v243 = vunpack.c.l.b16 %v228
    %v244 = vunpack.c.l.b16 %v229
    %v245 = vunpack.c.l.b16 %v230
    %v246 = vpack.c.b16 %v243, %v242
    %v247 = vpack.c.b16 %v245, %v244
    %v251 = vsel %vm182, %v226, 0
    %253 = vmatprep.subr.bf16.mxu0 0
    %254 = vmatpush1.bf16.msra.mxu0 %v246
    %255 = vmatprep.subr.bf16.mxu0 0
    %256 = vmatpush1.bf16.msra.mxu0 %v247
    %257 = vmatprep.subr.bf16.mxu0 0
    %258 = vmatpush1.bf16.msra.mxu0 0
    %259 = vmatprep.subr.bf16.mxu0 0
    %260 = vmatpush1.bf16.msra.mxu0 0
    %261 = vmatprep.subr.bf16.mxu0 0
    %262 = vmatpush1.bf16.msra.mxu0 0
    %263 = vmatprep.subr.bf16.mxu0 0
    %264 = vmatpush1.bf16.msra.mxu0 0
    %265 = vmatprep.subr.bf16.mxu0 0
    %266 = vmatpush1.bf16.msra.mxu0 0
    %267 = vmatprep.subr.bf16.mxu0 0
    %268 = vmatpush1.bf16.msra.mxu0 0
    %269 = vmatprep.subr.bf16.mxu0 0
    %270 = vmatpush1.bf16.msra.mxu0 0
    %271 = vmatprep.subr.bf16.mxu0 0
    %272 = vmatpush1.bf16.msra.mxu0 0
    %273 = vmatprep.subr.bf16.mxu0 0
    %274 = vmatpush1.bf16.msra.mxu0 0
    %275 = vmatprep.subr.bf16.mxu0 0
    %276 = vmatpush1.bf16.msra.mxu0 0
    %277 = vmatprep.subr.bf16.mxu0 0
    %278 = vmatpush1.bf16.msra.mxu0 0
    %279 = vmatprep.subr.bf16.mxu0 0
    %280 = vmatpush1.bf16.msra.mxu0 0
    %281 = vmatprep.subr.bf16.mxu0 0
    %282 = vmatpush1.bf16.msra.mxu0 0
    %283 = vmatprep.subr.bf16.mxu0 0
    %284 = vmatpush1.bf16.msra.mxu0 0
    %285 = vmatprep.mubr.bf16.mxu0 0
    %286 = vmatmul.mubr.bf16.gmra.mrb[0].mxu0 %v251
    %v287 = vpop.f32.mrb[0].mxu0
    %v288 = vadd.f32 %v236, %v287
    %v289 = vpop.f32.mrb[0].mxu0
    %v290 = vpop.f32.mrb[0].mxu0
    %v291 = vadd.f32 %v236, %v290
    %v292 = vpop.f32.mrb[0].mxu0
    %293 = vdwg.mxu0
    %v294 = vld [vmem:[%s6] sm:$0xf]
    %v295 = vld [vmem:[%s6 + $0x4] sm:$0xf]
    %v296 = vld [vmem:[%s6 + $0x8] sm:$0xf]
    %v297 = vld [vmem:[%s6 + $0xc] sm:$0xf]
    %v298 = vpack.c.bf16 %v288, %v288
    %v299 = vpack.c.bf16 %v291, %v291
    %301 = vrot.lane.b32.xlu0 %v298, 96
    %v302 = vpop.permute.xlu0 %301
    %vm303 = vcmask 130048
    %v305 = vsel %vm303, %v298, 0
    %v308 = vsel %vm303, %v302, 0
    %310 = vmatprep.subr.bf16.mxu0 0
    %311 = vmatpush1.bf16.xpose.msra.mxu0 %v308
    %312 = vmatprep.subr.bf16.mxu0 0
    %313 = vmatpush1.bf16.xpose.msra.mxu0 0
    %314 = vmatprep.subr.bf16.mxu0 0
    %315 = vmatpush1.bf16.xpose.msra.mxu0 0
    %316 = vmatprep.subr.bf16.mxu0 0
    %317 = vmatpush1.bf16.xpose.msra.mxu0 0
    %318 = vmatprep.subr.bf16.mxu0 0
    %319 = vmatpush1.bf16.xpose.msra.mxu0 0
    %320 = vmatprep.subr.bf16.mxu0 0
    %321 = vmatpush1.bf16.xpose.msra.mxu0 0
    %322 = vmatprep.subr.bf16.mxu0 0
    %323 = vmatpush1.bf16.xpose.msra.mxu0 0
    %324 = vmatprep.subr.bf16.mxu0 0
    %325 = vmatpush1.bf16.xpose.msra.mxu0 0
    %326 = vmatprep.subr.bf16.mxu0 0
    %327 = vmatpush1.bf16.xpose.msra.mxu0 0
    %328 = vmatprep.subr.bf16.mxu0 0
    %329 = vmatpush1.bf16.xpose.msra.mxu0 0
    %330 = vmatprep.subr.bf16.mxu0 0
    %331 = vmatpush1.bf16.xpose.msra.mxu0 0
    %332 = vmatprep.subr.bf16.mxu0 0
    %333 = vmatpush1.bf16.xpose.msra.mxu0 0
    %334 = vmatprep.subr.bf16.mxu0 0
    %335 = vmatpush1.bf16.xpose.msra.mxu0 0
    %336 = vmatprep.subr.bf16.mxu0 0
    %337 = vmatpush1.bf16.xpose.msra.mxu0 0
    %338 = vmatprep.subr.bf16.mxu0 0
    %339 = vmatpush1.bf16.xpose.msra.mxu0 0
    %340 = vmatprep.subr.bf16.mxu0 0
    %341 = vmatpush1.bf16.xpose.msra.mxu0 0
    %342 = vmatprep.mubr.bf16.mxu0 0
    %343 = vmatmul.mubr.bf16.gmra.mrb[0].mxu0 %v305
    %v344 = vpop.f32.mrb[0].mxu0
    %v345 = vadd.f32 0.0, %v344
    %v346 = vpop.f32.mrb[0].mxu0
    %v347 = vpop.f32.mrb[0].mxu0
    %v348 = vpop.f32.mrb[0].mxu0
    %349 = vdwg.mxu0
    %351 = vrot.lane.b32.xlu0 %v299, 96
    %v352 = vpop.permute.xlu0 %351
    %v354 = vsel %vm303, %v299, 0
    %v357 = vsel %vm303, %v352, 0
    %359 = vmatprep.subr.bf16.mxu0 0
    %360 = vmatpush1.bf16.xpose.msra.mxu0 %v357
    %361 = vmatprep.subr.bf16.mxu0 0
    %362 = vmatpush1.bf16.xpose.msra.mxu0 0
    %363 = vmatprep.subr.bf16.mxu0 0
    %364 = vmatpush1.bf16.xpose.msra.mxu0 0
    %365 = vmatprep.subr.bf16.mxu0 0
    %366 = vmatpush1.bf16.xpose.msra.mxu0 0
    %367 = vmatprep.subr.bf16.mxu0 0
    %368 = vmatpush1.bf16.xpose.msra.mxu0 0
    %369 = vmatprep.subr.bf16.mxu0 0
    %370 = vmatpush1.bf16.xpose.msra.mxu0 0
    %371 = vmatprep.subr.bf16.mxu0 0
    %372 = vmatpush1.bf16.xpose.msra.mxu0 0
    %373 = vmatprep.subr.bf16.mxu0 0
    %374 = vmatpush1.bf16.xpose.msra.mxu0 0
    %375 = vmatprep.subr.bf16.mxu0 0
    %376 = vmatpush1.bf16.xpose.msra.mxu0 0
    %377 = vmatprep.subr.bf16.mxu0 0
    %378 = vmatpush1.bf16.xpose.msra.mxu0 0
    %379 = vmatprep.subr.bf16.mxu0 0
    %380 = vmatpush1.bf16.xpose.msra.mxu0 0
    %381 = vmatprep.subr.bf16.mxu0 0
    %382 = vmatpush1.bf16.xpose.msra.mxu0 0
    %383 = vmatprep.subr.bf16.mxu0 0
    %384 = vmatpush1.bf16.xpose.msra.mxu0 0
    %385 = vmatprep.subr.bf16.mxu0 0
    %386 = vmatpush1.bf16.xpose.msra.mxu0 0
    %387 = vmatprep.subr.bf16.mxu0 0
    %388 = vmatpush1.bf16.xpose.msra.mxu0 0
    %389 = vmatprep.subr.bf16.mxu0 0
    %390 = vmatpush1.bf16.xpose.msra.mxu0 0
    %391 = vmatprep.mubr.bf16.mxu0 0
    %392 = vmatmul.mubr.bf16.gmra.mrb[0].mxu0 %v354
    %v393 = vpop.f32.mrb[0].mxu0
    %v394 = vadd.f32 0.0, %v393
    %v395 = vpop.f32.mrb[0].mxu0
    %v396 = vpop.f32.mrb[0].mxu0
    %v397 = vpop.f32.mrb[0].mxu0
    %398 = vdwg.mxu0
    %v399 = vmul.f32 %v345, 0.25
    %v400 = vmul.f32 %v394, 0.25
    %v401 = vadd.f32 %v399, %v171
    %v402 = vadd.f32 %v400, %v175
    %vm403 = vcmask 64512
    %v404 = vsel %vm403, %v401, -inf
    %405 = vmax.xlane.f32.xlu0 %v404
    %v406 = vpop.xlane.xlu0 %405
    %v407 = vsel %vm403, %v402, -inf
    %408 = vmax.xlane.f32.xlu0 %v407
    %v409 = vpop.xlane.xlu0 %408
    %v410 = vsub.f32 %v401, %v406
    %v411 = vsub.f32 %v402, %v409
    %v412 = vmul.f32 %v410, 1.442695
    %v413 = vpow.pop %v412
    %v414 = vmul.f32 %v411, 1.442695
    %v415 = vpow.pop %v414
    %v416 = vsel %vm403, %v413, 0.0
    %417 = vadd.xlane.f32.xlu0 %v416
    %v418 = vpop.xlane.xlu0 %417
    %v419 = vsel %vm403, %v415, 0.0
    %420 = vadd.xlane.f32.xlu0 %v419
    %v421 = vpop.xlane.xlu0 %420
    %v422 = vrcp.pop %v418
    %v423 = vrcp.pop %v421
    %v424 = vmul.f32 %v413, %v422
    %v425 = vmul.f32 %v415, %v423
    %v426 = vpack.c.bf16 %v424, %v424
    %v427 = vpack.c.bf16 %v425, %v425
    %428 = vrot.lane.b32.xlu0 %v298, 64
    %v429 = vpop.permute.xlu0 %428
    %v431 = vsel %vm403, %v426, 0
    %vm433 = vcmask 1043456
    %v435 = vsel %vm433, %v429, 0
    %437 = vmatprep.subr.bf16.mxu0 0
    %438 = vmatpush1.bf16.msra.mxu0 %v435
    %439 = vmatprep.subr.bf16.mxu0 0
    %440 = vmatpush1.bf16.msra.mxu0 0
    %441 = vmatprep.subr.bf16.mxu0 0
    %442 = vmatpush1.bf16.msra.mxu0 0
    %443 = vmatprep.subr.bf16.mxu0 0
    %444 = vmatpush1.bf16.msra.mxu0 0
    %445 = vmatprep.subr.bf16.mxu0 0
    %446 = vmatpush1.bf16.msra.mxu0 0
    %447 = vmatprep.subr.bf16.mxu0 0
    %448 = vmatpush1.bf16.msra.mxu0 0
    %449 = vmatprep.subr.bf16.mxu0 0
    %450 = vmatpush1.bf16.msra.mxu0 0
    %451 = vmatprep.subr.bf16.mxu0 0
    %452 = vmatpush1.bf16.msra.mxu0 0
    %453 = vmatprep.subr.bf16.mxu0 0
    %454 = vmatpush1.bf16.msra.mxu0 0
    %455 = vmatprep.subr.bf16.mxu0 0
    %456 = vmatpush1.bf16.msra.mxu0 0
    %457 = vmatprep.subr.bf16.mxu0 0
    %458 = vmatpush1.bf16.msra.mxu0 0
    %459 = vmatprep.subr.bf16.mxu0 0
    %460 = vmatpush1.bf16.msra.mxu0 0
    %461 = vmatprep.subr.bf16.mxu0 0
    %462 = vmatpush1.bf16.msra.mxu0 0
    %463 = vmatprep.subr.bf16.mxu0 0
    %464 = vmatpush1.bf16.msra.mxu0 0
    %465 = vmatprep.subr.bf16.mxu0 0
    %466 = vmatpush1.bf16.msra.mxu0 0
    %467 = vmatprep.subr.bf16.mxu0 0
    %468 = vmatpush1.bf16.msra.mxu0 0
    %469 = vmatprep.mubr.bf16.mxu0 0
    %470 = vmatmul.mubr.bf16.gmra.mrb[0].mxu0 %v431
    %v471 = vpop.f32.mrb[0].mxu0
    %v472 = vadd.f32 0.0, %v471
    %v473 = vpop.f32.mrb[0].mxu0
    %v474 = vpop.f32.mrb[0].mxu0
    %v475 = vpop.f32.mrb[0].mxu0
    %476 = vdwg.mxu0
    %477 = vrot.lane.b32.xlu0 %v299, 64
    %v478 = vpop.permute.xlu0 %477
    %v480 = vsel %vm403, %v427, 0
    %v483 = vsel %vm433, %v478, 0
    %485 = vmatprep.subr.bf16.mxu0 0
    %486 = vmatpush1.bf16.msra.mxu0 %v483
    %487 = vmatprep.subr.bf16.mxu0 0
    %488 = vmatpush1.bf16.msra.mxu0 0
    %489 = vmatprep.subr.bf16.mxu0 0
    %490 = vmatpush1.bf16.msra.mxu0 0
    %491 = vmatprep.subr.bf16.mxu0 0
    %492 = vmatpush1.bf16.msra.mxu0 0
    %493 = vmatprep.subr.bf16.mxu0 0
    %494 = vmatpush1.bf16.msra.mxu0 0
    %495 = vmatprep.subr.bf16.mxu0 0
    %496 = vmatpush1.bf16.msra.mxu0 0
    %497 = vmatprep.subr.bf16.mxu0 0
    %498 = vmatpush1.bf16.msra.mxu0 0
    %499 = vmatprep.subr.bf16.mxu0 0
    %500 = vmatpush1.bf16.msra.mxu0 0
    %501 = vmatprep.subr.bf16.mxu0 0
    %502 = vmatpush1.bf16.msra.mxu0 0
    %503 = vmatprep.subr.bf16.mxu0 0
    %504 = vmatpush1.bf16.msra.mxu0 0
    %505 = vmatprep.subr.bf16.mxu0 0
    %506 = vmatpush1.bf16.msra.mxu0 0
    %507 = vmatprep.subr.bf16.mxu0 0
    %508 = vmatpush1.bf16.msra.mxu0 0
    %509 = vmatprep.subr.bf16.mxu0 0
    %510 = vmatpush1.bf16.msra.mxu0 0
    %511 = vmatprep.subr.bf16.mxu0 0
    %512 = vmatpush1.bf16.msra.mxu0 0
    %513 = vmatprep.subr.bf16.mxu0 0
    %514 = vmatpush1.bf16.msra.mxu0 0
    %515 = vmatprep.subr.bf16.mxu0 0
    %516 = vmatpush1.bf16.msra.mxu0 0
    %517 = vmatprep.mubr.bf16.mxu0 0
    %518 = vmatmul.mubr.bf16.gmra.mrb[0].mxu0 %v480
    %v519 = vpop.f32.mrb[0].mxu0
    %v520 = vadd.f32 0.0, %v519
    %v521 = vpop.f32.mrb[0].mxu0
    %v522 = vpop.f32.mrb[0].mxu0
    %v523 = vpop.f32.mrb[0].mxu0
    %524 = vdwg.mxu0
    %v525 = vpack.c.bf16 %v520, %v472
    %526 = vrot.lane.b32.xlu0 %v298, 112
    %v527 = vpop.permute.xlu0 %526
    %528 = vrot.lane.b32.xlu0 %v298, 80
    %v529 = vpop.permute.xlu0 %528
    %v531 = vsel %vm303, %v527, 0
    %v534 = vsel %vm303, %v529, 0
    %536 = vmatprep.subr.bf16.mxu0 0
    %537 = vmatpush1.bf16.xpose.msra.mxu0 %v534
    %538 = vmatprep.subr.bf16.mxu0 0
    %539 = vmatpush1.bf16.xpose.msra.mxu0 0
    %540 = vmatprep.subr.bf16.mxu0 0
    %541 = vmatpush1.bf16.xpose.msra.mxu0 0
    %542 = vmatprep.subr.bf16.mxu0 0
    %543 = vmatpush1.bf16.xpose.msra.mxu0 0
    %544 = vmatprep.subr.bf16.mxu0 0
    %545 = vmatpush1.bf16.xpose.msra.mxu0 0
    %546 = vmatprep.subr.bf16.mxu0 0
    %547 = vmatpush1.bf16.xpose.msra.mxu0 0
    %548 = vmatprep.subr.bf16.mxu0 0
    %549 = vmatpush1.bf16.xpose.msra.mxu0 0
    %550 = vmatprep.subr.bf16.mxu0 0
    %551 = vmatpush1.bf16.xpose.msra.mxu0 0
    %552 = vmatprep.subr.bf16.mxu0 0
    %553 = vmatpush1.bf16.xpose.msra.mxu0 0
    %554 = vmatprep.subr.bf16.mxu0 0
    %555 = vmatpush1.bf16.xpose.msra.mxu0 0
    %556 = vmatprep.subr.bf16.mxu0 0
    %557 = vmatpush1.bf16.xpose.msra.mxu0 0
    %558 = vmatprep.subr.bf16.mxu0 0
    %559 = vmatpush1.bf16.xpose.msra.mxu0 0
    %560 = vmatprep.subr.bf16.mxu0 0
    %561 = vmatpush1.bf16.xpose.msra.mxu0 0
    %562 = vmatprep.subr.bf16.mxu0 0
    %563 = vmatpush1.bf16.xpose.msra.mxu0 0
    %564 = vmatprep.subr.bf16.mxu0 0
    %565 = vmatpush1.bf16.xpose.msra.mxu0 0
    %566 = vmatprep.subr.bf16.mxu0 0
    %567 = vmatpush1.bf16.xpose.msra.mxu0 0
    %568 = vmatprep.mubr.bf16.mxu0 0
    %569 = vmatmul.mubr.bf16.gmra.mrb[0].mxu0 %v531
    %v570 = vpop.f32.mrb[0].mxu0
    %v571 = vadd.f32 0.0, %v570
    %v572 = vpop.f32.mrb[0].mxu0
    %v573 = vpop.f32.mrb[0].mxu0
    %v574 = vpop.f32.mrb[0].mxu0
    %575 = vdwg.mxu0
    %576 = vrot.lane.b32.xlu0 %v299, 112
    %v577 = vpop.permute.xlu0 %576
    %578 = vrot.lane.b32.xlu0 %v299, 80
    %v579 = vpop.permute.xlu0 %578
    %v581 = vsel %vm303, %v577, 0
    %v584 = vsel %vm303, %v579, 0
    %586 = vmatprep.subr.bf16.mxu0 0
    %587 = vmatpush1.bf16.xpose.msra.mxu0 %v584
    %588 = vmatprep.subr.bf16.mxu0 0
    %589 = vmatpush1.bf16.xpose.msra.mxu0 0
    %590 = vmatprep.subr.bf16.mxu0 0
    %591 = vmatpush1.bf16.xpose.msra.mxu0 0
    %592 = vmatprep.subr.bf16.mxu0 0
    %593 = vmatpush1.bf16.xpose.msra.mxu0 0
    %594 = vmatprep.subr.bf16.mxu0 0
    %595 = vmatpush1.bf16.xpose.msra.mxu0 0
    %596 = vmatprep.subr.bf16.mxu0 0
    %597 = vmatpush1.bf16.xpose.msra.mxu0 0
    %598 = vmatprep.subr.bf16.mxu0 0
    %599 = vmatpush1.bf16.xpose.msra.mxu0 0
    %600 = vmatprep.subr.bf16.mxu0 0
    %601 = vmatpush1.bf16.xpose.msra.mxu0 0
    %602 = vmatprep.subr.bf16.mxu0 0
    %603 = vmatpush1.bf16.xpose.msra.mxu0 0
    %604 = vmatprep.subr.bf16.mxu0 0
    %605 = vmatpush1.bf16.xpose.msra.mxu0 0
    %606 = vmatprep.subr.bf16.mxu0 0
    %607 = vmatpush1.bf16.xpose.msra.mxu0 0
    %608 = vmatprep.subr.bf16.mxu0 0
    %609 = vmatpush1.bf16.xpose.msra.mxu0 0
    %610 = vmatprep.subr.bf16.mxu0 0
    %611 = vmatpush1.bf16.xpose.msra.mxu0 0
    %612 = vmatprep.subr.bf16.mxu0 0
    %613 = vmatpush1.bf16.xpose.msra.mxu0 0
    %614 = vmatprep.subr.bf16.mxu0 0
    %615 = vmatpush1.bf16.xpose.msra.mxu0 0
    %616 = vmatprep.subr.bf16.mxu0 0
    %617 = vmatpush1.bf16.xpose.msra.mxu0 0
    %618 = vmatprep.mubr.bf16.mxu0 0
    %619 = vmatmul.mubr.bf16.gmra.mrb[0].mxu0 %v581
    %v620 = vpop.f32.mrb[0].mxu0
    %v621 = vadd.f32 0.0, %v620
    %v622 = vpop.f32.mrb[0].mxu0
    %v623 = vpop.f32.mrb[0].mxu0
    %v624 = vpop.f32.mrb[0].mxu0
    %625 = vdwg.mxu0
    %v626 = vmul.f32 %v571, 0.25
    %v627 = vmul.f32 %v621, 0.25
    %v628 = vadd.f32 %v626, %v171
    %v629 = vadd.f32 %v627, %v175
    %v630 = vsel %vm403, %v628, -inf
    %631 = vmax.xlane.f32.xlu0 %v630
    %v632 = vpop.xlane.xlu0 %631
    %v633 = vsel %vm403, %v629, -inf
    %634 = vmax.xlane.f32.xlu0 %v633
    %v635 = vpop.xlane.xlu0 %634
    %v636 = vsub.f32 %v628, %v632
    %v637 = vsub.f32 %v629, %v635
    %v638 = vmul.f32 %v636, 1.442695
    %v639 = vpow.pop %v638
    %v640 = vmul.f32 %v637, 1.442695
    %v641 = vpow.pop %v640
    %v642 = vsel %vm403, %v639, 0.0
    %643 = vadd.xlane.f32.xlu0 %v642
    %v644 = vpop.xlane.xlu0 %643
    %v645 = vsel %vm403, %v641, 0.0
    %646 = vadd.xlane.f32.xlu0 %v645
    %v647 = vpop.xlane.xlu0 %646
    %v648 = vrcp.pop %v644
    %v649 = vrcp.pop %v647
    %v650 = vmul.f32 %v639, %v648
    %v651 = vmul.f32 %v641, %v649
    %v652 = vpack.c.bf16 %v650, %v650
    %v653 = vpack.c.bf16 %v651, %v651
    %654 = vrot.lane.b32.xlu0 %v298, 48
    %v655 = vpop.permute.xlu0 %654
    %v657 = vsel %vm403, %v652, 0
    %v660 = vsel %vm433, %v655, 0
    %662 = vmatprep.subr.bf16.mxu0 0
    %663 = vmatpush1.bf16.msra.mxu0 %v660
    %664 = vmatprep.subr.bf16.mxu0 0
    %665 = vmatpush1.bf16.msra.mxu0 0
    %666 = vmatprep.subr.bf16.mxu0 0
    %667 = vmatpush1.bf16.msra.mxu0 0
    %668 = vmatprep.subr.bf16.mxu0 0
    %669 = vmatpush1.bf16.msra.mxu0 0
    %670 = vmatprep.subr.bf16.mxu0 0
    %671 = vmatpush1.bf16.msra.mxu0 0
    %672 = vmatprep.subr.bf16.mxu0 0
    %673 = vmatpush1.bf16.msra.mxu0 0
    %674 = vmatprep.subr.bf16.mxu0 0
    %675 = vmatpush1.bf16.msra.mxu0 0
    %676 = vmatprep.subr.bf16.mxu0 0
    %677 = vmatpush1.bf16.msra.mxu0 0
    %678 = vmatprep.subr.bf16.mxu0 0
    %679 = vmatpush1.bf16.msra.mxu0 0
    %680 = vmatprep.subr.bf16.mxu0 0
    %681 = vmatpush1.bf16.msra.mxu0 0
    %682 = vmatprep.subr.bf16.mxu0 0
    %683 = vmatpush1.bf16.msra.mxu0 0
    %684 = vmatprep.subr.bf16.mxu0 0
    %685 = vmatpush1.bf16.msra.mxu0 0
    %686 = vmatprep.subr.bf16.mxu0 0
    %687 = vmatpush1.bf16.msra.mxu0 0
    %688 = vmatprep.subr.bf16.mxu0 0
    %689 = vmatpush1.bf16.msra.mxu0 0
    %690 = vmatprep.subr.bf16.mxu0 0
    %691 = vmatpush1.bf16.msra.mxu0 0
    %692 = vmatprep.subr.bf16.mxu0 0
    %693 = vmatpush1.bf16.msra.mxu0 0
    %694 = vmatprep.mubr.bf16.mxu0 0
    %695 = vmatmul.mubr.bf16.gmra.mrb[0].mxu0 %v657
    %v696 = vpop.f32.mrb[0].mxu0
    %v697 = vadd.f32 0.0, %v696
    %v698 = vpop.f32.mrb[0].mxu0
    %v699 = vpop.f32.mrb[0].mxu0
    %v700 = vpop.f32.mrb[0].mxu0
    %701 = vdwg.mxu0
    %702 = vrot.lane.b32.xlu0 %v299, 48
    %v703 = vpop.permute.xlu0 %702
    %v705 = vsel %vm403, %v653, 0
    %v708 = vsel %vm433, %v703, 0
    %710 = vmatprep.subr.bf16.mxu0 0
    %711 = vmatpush1.bf16.msra.mxu0 %v708
    %712 = vmatprep.subr.bf16.mxu0 0
    %713 = vmatpush1.bf16.msra.mxu0 0
    %714 = vmatprep.subr.bf16.mxu0 0
    %715 = vmatpush1.bf16.msra.mxu0 0
    %716 = vmatprep.subr.bf16.mxu0 0
    %717 = vmatpush1.bf16.msra.mxu0 0
    %718 = vmatprep.subr.bf16.mxu0 0
    %719 = vmatpush1.bf16.msra.mxu0 0
    %720 = vmatprep.subr.bf16.mxu0 0
    %721 = vmatpush1.bf16.msra.mxu0 0
    %722 = vmatprep.subr.bf16.mxu0 0
    %723 = vmatpush1.bf16.msra.mxu0 0
    %724 = vmatprep.subr.bf16.mxu0 0
    %725 = vmatpush1.bf16.msra.mxu0 0
    %726 = vmatprep.subr.bf16.mxu0 0
    %727 = vmatpush1.bf16.msra.mxu0 0
    %728 = vmatprep.subr.bf16.mxu0 0
    %729 = vmatpush1.bf16.msra.mxu0 0
    %730 = vmatprep.subr.bf16.mxu0 0
    %731 = vmatpush1.bf16.msra.mxu0 0
    %732 = vmatprep.subr.bf16.mxu0 0
    %733 = vmatpush1.bf16.msra.mxu0 0
    %734 = vmatprep.subr.bf16.mxu0 0
    %735 = vmatpush1.bf16.msra.mxu0 0
    %736 = vmatprep.subr.bf16.mxu0 0
    %737 = vmatpush1.bf16.msra.mxu0 0
    %738 = vmatprep.subr.bf16.mxu0 0
    %739 = vmatpush1.bf16.msra.mxu0 0
    %740 = vmatprep.subr.bf16.mxu0 0
    %741 = vmatpush1.bf16.msra.mxu0 0
    %742 = vmatprep.mubr.bf16.mxu0 0
    %743 = vmatmul.mubr.bf16.gmra.mrb[0].mxu0 %v705
    %v744 = vpop.f32.mrb[0].mxu0
    %v745 = vadd.f32 0.0, %v744
    %v746 = vpop.f32.mrb[0].mxu0
    %v747 = vpop.f32.mrb[0].mxu0
    %v748 = vpop.f32.mrb[0].mxu0
    %749 = vdwg.mxu0
    %v750 = vpack.c.bf16 %v745, %v697
    %v753 = vunpack.c.l.b16 %v296
    %v754 = vunpack.c.l.b16 %v297
    %v755 = vpack.c.b16 %v754, %v753
    %v758 = vsel %vm303, %v750, 0
    %760 = vmatprep.subr.bf16.mxu0 0
    %761 = vmatpush1.bf16.msra.mxu0 %v755
    %762 = vmatprep.subr.bf16.mxu0 0
    %763 = vmatpush1.bf16.msra.mxu0 0
    %764 = vmatprep.subr.bf16.mxu0 0
    %765 = vmatpush1.bf16.msra.mxu0 0
    %766 = vmatprep.subr.bf16.mxu0 0
    %767 = vmatpush1.bf16.msra.mxu0 0
    %768 = vmatprep.subr.bf16.mxu0 0
    %769 = vmatpush1.bf16.msra.mxu0 0
    %770 = vmatprep.subr.bf16.mxu0 0
    %771 = vmatpush1.bf16.msra.mxu0 0
    %772 = vmatprep.subr.bf16.mxu0 0
    %773 = vmatpush1.bf16.msra.mxu0 0
    %774 = vmatprep.subr.bf16.mxu0 0
    %775 = vmatpush1.bf16.msra.mxu0 0
    %776 = vmatprep.subr.bf16.mxu0 0
    %777 = vmatpush1.bf16.msra.mxu0 0
    %778 = vmatprep.subr.bf16.mxu0 0
    %779 = vmatpush1.bf16.msra.mxu0 0
    %780 = vmatprep.subr.bf16.mxu0 0
    %781 = vmatpush1.bf16.msra.mxu0 0
    %782 = vmatprep.subr.bf16.mxu0 0
    %783 = vmatpush1.bf16.msra.mxu0 0
    %784 = vmatprep.subr.bf16.mxu0 0
    %785 = vmatpush1.bf16.msra.mxu0 0
    %786 = vmatprep.subr.bf16.mxu0 0
    %787 = vmatpush1.bf16.msra.mxu0 0
    %788 = vmatprep.subr.bf16.mxu0 0
    %789 = vmatpush1.bf16.msra.mxu0 0
    %790 = vmatprep.subr.bf16.mxu0 0
    %791 = vmatpush1.bf16.msra.mxu0 0
    %792 = vmatprep.mubr.bf16.mxu0 0
    %793 = vmatmul.mubr.bf16.gmra.mrb[0].mxu0 %v758
    %v794 = vpop.f32.mrb[0].mxu0
    %v795 = vadd.f32 0.0, %v794
    %v796 = vpop.f32.mrb[0].mxu0
    %v797 = vpop.f32.mrb[0].mxu0
    %v798 = vadd.f32 0.0, %v797
    %v799 = vpop.f32.mrb[0].mxu0
    %800 = vdwg.mxu0
    %v803 = vunpack.c.l.b16 %v294
    %v804 = vunpack.c.l.b16 %v295
    %v805 = vpack.c.b16 %v804, %v803
    %v808 = vsel %vm303, %v525, 0
    %810 = vmatprep.subr.bf16.mxu0 0
    %811 = vmatpush1.bf16.msra.mxu0 %v805
    %812 = vmatprep.subr.bf16.mxu0 0
    %813 = vmatpush1.bf16.msra.mxu0 0
    %814 = vmatprep.subr.bf16.mxu0 0
    %815 = vmatpush1.bf16.msra.mxu0 0
    %816 = vmatprep.subr.bf16.mxu0 0
    %817 = vmatpush1.bf16.msra.mxu0 0
    %818 = vmatprep.subr.bf16.mxu0 0
    %819 = vmatpush1.bf16.msra.mxu0 0
    %820 = vmatprep.subr.bf16.mxu0 0
    %821 = vmatpush1.bf16.msra.mxu0 0
    %822 = vmatprep.subr.bf16.mxu0 0
    %823 = vmatpush1.bf16.msra.mxu0 0
    %824 = vmatprep.subr.bf16.mxu0 0
    %825 = vmatpush1.bf16.msra.mxu0 0
    %826 = vmatprep.subr.bf16.mxu0 0
    %827 = vmatpush1.bf16.msra.mxu0 0
    %828 = vmatprep.subr.bf16.mxu0 0
    %829 = vmatpush1.bf16.msra.mxu0 0
    %830 = vmatprep.subr.bf16.mxu0 0
    %831 = vmatpush1.bf16.msra.mxu0 0
    %832 = vmatprep.subr.bf16.mxu0 0
    %833 = vmatpush1.bf16.msra.mxu0 0
    %834 = vmatprep.subr.bf16.mxu0 0
    %835 = vmatpush1.bf16.msra.mxu0 0
    %836 = vmatprep.subr.bf16.mxu0 0
    %837 = vmatpush1.bf16.msra.mxu0 0
    %838 = vmatprep.subr.bf16.mxu0 0
    %839 = vmatpush1.bf16.msra.mxu0 0
    %840 = vmatprep.subr.bf16.mxu0 0
    %841 = vmatpush1.bf16.msra.mxu0 0
    %842 = vmatprep.mubr.bf16.mxu0 0
    %843 = vmatmul.mubr.bf16.gmra.mrb[0].mxu0 %v808
    %v844 = vpop.f32.mrb[0].mxu0
    %v845 = vadd.f32 %v795, %v844
    %v846 = vpop.f32.mrb[0].mxu0
    %v847 = vpop.f32.mrb[0].mxu0
    %v848 = vadd.f32 %v798, %v847
    %v849 = vpop.f32.mrb[0].mxu0
    %850 = vdwg.mxu0
    %v851 = vadd.f32 %v224, %v845
    %v852 = vadd.f32 %v225, %v848
    %v853 = vld [vmem:[#allocation10] sm:$0x1]
    %v855 = vlaneseq
    %v856 = vshrl.u32 %v855, 7
    %v857 = vsub.s32 0, %v856
    %v858 = vrot.slane %v853, %v857
    %v860 = vadd.f32 %v851, %v858
    %v861 = vadd.f32 %v852, %v858
    %v862 = vld [vmem:[#allocation11] sm:$0x1]
    %v863 = vld [vmem:[%s9] sm:$0x1]
    %v864 = vsel %vm182, %v860, 0.0
    %865 = vadd.xlane.f32.xlu0 %v864
    %v866 = vpop.xlane.xlu0 %865
    %v867 = vsel %vm182, %v861, 0.0
    %868 = vadd.xlane.f32.xlu0 %v867
    %v869 = vpop.xlane.xlu0 %868
    %v870 = vmul.f32 %v866, %v189
    %v871 = vmul.f32 %v869, %v189
    %v872 = vsub.f32 %v860, %v870
    %v873 = vsub.f32 %v861, %v871
    %v874 = vmul.f32 %v872, %v872
    %v875 = vmul.f32 %v873, %v873
    %v876 = vsel %vm182, %v874, 0.0
    %877 = vadd.xlane.f32.xlu0 %v876
    %v878 = vpop.xlane.xlu0 %877
    %v879 = vsel %vm182, %v875, 0.0
    %880 = vadd.xlane.f32.xlu0 %v879
    %v881 = vpop.xlane.xlu0 %880
    %v882 = vmul.f32 %v878, %v189
    %v883 = vmul.f32 %v881, %v189
    %v884 = vadd.f32 %v882, 1e-12
    %v885 = vadd.f32 %v883, 1e-12
    %v886 = vrsqrt.pop %v884
    %v887 = vrsqrt.pop %v885
    %v888 = vmul.f32 %v872, %v886
    %v889 = vmul.f32 %v873, %v887
    %v891 = vlaneseq
    %v892 = vshrl.u32 %v891, 7
    %v893 = vsub.s32 0, %v892
    %v894 = vrot.slane %v862, %v893
    %v896 = vmul.f32 %v888, %v894
    %v897 = vmul.f32 %v889, %v894
    %v899 = vlaneseq
    %v900 = vshrl.u32 %v899, 7
    %v901 = vsub.s32 0, %v900
    %v902 = vrot.slane %v863, %v901
    %v904 = vadd.f32 %v896, %v902
    %v905 = vadd.f32 %v897, %v902
    %v906 = vpack.c.bf16 %v905, %v904
    %v907 = vld [vmem:[%s10] sm:$0xf]
    %v908 = vld [vmem:[%s10 + $0x4] sm:$0xf]
    %v909 = vld [vmem:[%s10 + $0x8] sm:$0xf]
    %v910 = vld [vmem:[%s10 + $0xc] sm:$0xf]
    %v911 = vld [vmem:[#allocation13] sm:$0x1]
    %v913 = vlaneseq
    %v914 = vshrl.u32 %v913, 7
    %v915 = vsub.s32 0, %v914
    %v916 = vrot.slane %v911, %v915
    %v922 = vunpack.c.l.b16 %v907
    %v923 = vunpack.c.l.b16 %v908
    %v924 = vunpack.c.l.b16 %v909
    %v925 = vunpack.c.l.b16 %v910
    %v926 = vpack.c.b16 %v923, %v922
    %v927 = vpack.c.b16 %v925, %v924
    %v931 = vsel %vm182, %v906, 0
    %933 = vmatprep.subr.bf16.mxu0 0
    %934 = vmatpush1.bf16.msra.mxu0 %v926
    %935 = vmatprep.subr.bf16.mxu0 0
    %936 = vmatpush1.bf16.msra.mxu0 %v927
    %937 = vmatprep.subr.bf16.mxu0 0
    %938 = vmatpush1.bf16.msra.mxu0 0
    %939 = vmatprep.subr.bf16.mxu0 0
    %940 = vmatpush1.bf16.msra.mxu0 0
    %941 = vmatprep.subr.bf16.mxu0 0
    %942 = vmatpush1.bf16.msra.mxu0 0
    %943 = vmatprep.subr.bf16.mxu0 0
    %944 = vmatpush1.bf16.msra.mxu0 0
    %945 = vmatprep.subr.bf16.mxu0 0
    %946 = vmatpush1.bf16.msra.mxu0 0
    %947 = vmatprep.subr.bf16.mxu0 0
    %948 = vmatpush1.bf16.msra.mxu0 0
    %949 = vmatprep.subr.bf16.mxu0 0
    %950 = vmatpush1.bf16.msra.mxu0 0
    %951 = vmatprep.subr.bf16.mxu0 0
    %952 = vmatpush1.bf16.msra.mxu0 0
    %953 = vmatprep.subr.bf16.mxu0 0
    %954 = vmatpush1.bf16.msra.mxu0 0
    %955 = vmatprep.subr.bf16.mxu0 0
    %956 = vmatpush1.bf16.msra.mxu0 0
    %957 = vmatprep.subr.bf16.mxu0 0
    %958 = vmatpush1.bf16.msra.mxu0 0
    %959 = vmatprep.subr.bf16.mxu0 0
    %960 = vmatpush1.bf16.msra.mxu0 0
    %961 = vmatprep.subr.bf16.mxu0 0
    %962 = vmatpush1.bf16.msra.mxu0 0
    %963 = vmatprep.subr.bf16.mxu0 0
    %964 = vmatpush1.bf16.msra.mxu0 0
    %965 = vmatprep.mubr.bf16.mxu0 0
    %966 = vmatmul.mubr.bf16.gmra.mrb[0].mxu0 %v931
    %v967 = vpop.f32.mrb[0].mxu0
    %v968 = vadd.f32 %v916, %v967
    %v969 = vpop.f32.mrb[0].mxu0
    %v970 = vpop.f32.mrb[0].mxu0
    %v971 = vadd.f32 %v916, %v970
    %v972 = vpop.f32.mrb[0].mxu0
    %973 = vdwg.mxu0
    %v974 = vmul.f32 %v968, %v968
    %v975 = vmul.f32 %v971, %v971
    %v976 = vmul.f32 %v968, %v974
    %v977 = vmul.f32 %v971, %v975
    %v978 = vmul.f32 %v976, 0.044715
    %v979 = vmul.f32 %v977, 0.044715
    %v980 = vadd.f32 %v968, %v978
    %v981 = vadd.f32 %v971, %v979
    %v982 = vmul.f32 %v980, 0.7978846
    %v983 = vmul.f32 %v981, 0.7978846
    %v984 = vtanh.pop %v982
    %v985 = vtanh.pop %v983
    %v986 = vadd.f32 %v984, 1.0
    %v987 = vadd.f32 %v985, 1.0
    %v988 = vmul.f32 %v986, 0.5
    %v989 = vmul.f32 %v987, 0.5
    %v990 = vmul.f32 %v968, %v988
    %v991 = vmul.f32 %v971, %v989
    %v992 = vpack.c.bf16 %v991, %v990
    %v993 = vld [vmem:[%s12] sm:$0xf]
    %v994 = vld [vmem:[%s12 + $0x4] sm:$0xf]
    %v995 = vld [vmem:[%s12 + $0x8] sm:$0xf]
    %v996 = vld [vmem:[%s12 + $0xc] sm:$0xf]
    %v997 = vld [vmem:[%s12 + $0x10] sm:$0xf]
    %v998 = vld [vmem:[%s12 + $0x14] sm:$0xf]
    %v999 = vld [vmem:[%s12 + $0x18] sm:$0xf]
    %v1000 = vld [vmem:[%s12 + $0x1c] sm:$0xf]
    %v1001 = vld [vmem:[%s13] sm:$0x1]
    %v1003 = vlaneseq
    %v1004 = vshrl.u32 %v1003, 7
    %v1005 = vsub.s32 0, %v1004
    %v1006 = vrot.slane %v1001, %v1005
    %v1016 = vunpack.c.l.b16 %v993
    %v1017 = vunpack.c.l.b16 %v994
    %v1018 = vunpack.c.l.b16 %v995
    %v1019 = vunpack.c.l.b16 %v996
    %v1020 = vunpack.c.l.b16 %v997
    %v1021 = vunpack.c.l.b16 %v998
    %v1022 = vunpack.c.l.b16 %v999
    %v1023 = vunpack.c.l.b16 %v1000
    %v1024 = vpack.c.b16 %v1017, %v1016
    %v1025 = vpack.c.b16 %v1019, %v1018
    %v1026 = vpack.c.b16 %v1021, %v1020
    %v1027 = vpack.c.b16 %v1023, %v1022
    %vm1032 = vcmask 523264
    %v1034 = vsel %vm1032, %v992, 0
    %1036 = vmatprep.subr.bf16.mxu0 0
    %1037 = vmatpush1.bf16.msra.mxu0 %v1024
    %1038 = vmatprep.subr.bf16.mxu0 0
    %1039 = vmatpush1.bf16.msra.mxu0 %v1025
    %1040 = vmatprep.subr.bf16.mxu0 0
    %1041 = vmatpush1.bf16.msra.mxu0 %v1026
    %1042 = vmatprep.subr.bf16.mxu0 0
    %1043 = vmatpush1.bf16.msra.mxu0 %v1027
    %1044 = vmatprep.subr.bf16.mxu0 0
    %1045 = vmatpush1.bf16.msra.mxu0 0
    %1046 = vmatprep.subr.bf16.mxu0 0
    %1047 = vmatpush1.bf16.msra.mxu0 0
    %1048 = vmatprep.subr.bf16.mxu0 0
    %1049 = vmatpush1.bf16.msra.mxu0 0
    %1050 = vmatprep.subr.bf16.mxu0 0
    %1051 = vmatpush1.bf16.msra.mxu0 0
    %1052 = vmatprep.subr.bf16.mxu0 0
    %1053 = vmatpush1.bf16.msra.mxu0 0
    %1054 = vmatprep.subr.bf16.mxu0 0
    %1055 = vmatpush1.bf16.msra.mxu0 0
    %1056 = vmatprep.subr.bf16.mxu0 0
    %1057 = vmatpush1.bf16.msra.mxu0 0
    %1058 = vmatprep.subr.bf16.mxu0 0
    %1059 = vmatpush1.bf16.msra.mxu0 0
    %1060 = vmatprep.subr.bf16.mxu0 0
    %1061 = vmatpush1.bf16.msra.mxu0 0
    %1062 = vmatprep.subr.bf16.mxu0 0
    %1063 = vmatpush1.bf16.msra.mxu0 0
    %1064 = vmatprep.subr.bf16.mxu0 0
    %1065 = vmatpush1.bf16.msra.mxu0 0
    %1066 = vmatprep.subr.bf16.mxu0 0
    %1067 = vmatpush1.bf16.msra.mxu0 0
    %1068 = vmatprep.mubr.bf16.mxu0 0
    %1069 = vmatmul.mubr.bf16.gmra.mrb[0].mxu0 %v1034
    %v1070 = vpop.f32.mrb[0].mxu0
    %v1071 = vadd.f32 %v1006, %v1070
    %v1072 = vpop.f32.mrb[0].mxu0
    %v1073 = vpop.f32.mrb[0].mxu0
    %v1074 = vadd.f32 %v1006, %v1073
    %v1075 = vpop.f32.mrb[0].mxu0
    %1076 = vdwg.mxu0
    %v1077 = vadd.f32 %v904, %v1071
    %v1078 = vadd.f32 %v905, %v1074
    %v1079 = vld [vmem:[%s14] sm:$0x1]
    %v1080 = vld [vmem:[%s15] sm:$0x1]
    %v1081 = vsel %vm182, %v1077, 0.0
    %1082 = vadd.xlane.f32.xlu0 %v1081
    %v1083 = vpop.xlane.xlu0 %1082
    %v1084 = vsel %vm182, %v1078, 0.0
    %1085 = vadd.xlane.f32.xlu0 %v1084
    %v1086 = vpop.xlane.xlu0 %1085
    %v1087 = vmul.f32 %v1083, %v189
    %v1088 = vmul.f32 %v1086, %v189
    %v1089 = vsub.f32 %v1077, %v1087
    %v1090 = vsub.f32 %v1078, %v1088
    %v1091 = vmul.f32 %v1089, %v1089
    %v1092 = vmul.f32 %v1090, %v1090
    %v1093 = vsel %vm182, %v1091, 0.0
    %1094 = vadd.xlane.f32.xlu0 %v1093
    %v1095 = vpop.xlane.xlu0 %1094
    %v1096 = vsel %vm182, %v1092, 0.0
    %1097 = vadd.xlane.f32.xlu0 %v1096
    %v1098 = vpop.xlane.xlu0 %1097
    %v1099 = vmul.f32 %v1095, %v189
    %v1100 = vmul.f32 %v1098, %v189
    %v1101 = vadd.f32 %v1099, 1e-12
    %v1102 = vadd.f32 %v1100, 1e-12
    %v1103 = vrsqrt.pop %v1101
    %v1104 = vrsqrt.pop %v1102
    %v1105 = vmul.f32 %v1089, %v1103
    %v1106 = vmul.f32 %v1090, %v1104
    %v1108 = vlaneseq
    %v1109 = vshrl.u32 %v1108, 7
    %v1110 = vsub.s32 0, %v1109
    %v1111 = vrot.slane %v1079, %v1110
    %v1113 = vmul.f32 %v1105, %v1111
    %v1114 = vmul.f32 %v1106, %v1111
    %v1116 = vlaneseq
    %v1117 = vshrl.u32 %v1116, 7
    %v1118 = vsub.s32 0, %v1117
    %v1119 = vrot.slane %v1080, %v1118
    %v1121 = vadd.f32 %v1113, %v1119
    %v1122 = vadd.f32 %v1114, %v1119
    %v1123 = vpack.c.bf16 %v1122, %v1121
    %s1124 = scalar_lea.vmem %s4, 16
    %v1125 = vld [vmem:[%s1124] sm:$0xf]
    %v1126 = vld [vmem:[%s1124 + $0x4] sm:$0xf]
    %v1127 = vld [vmem:[%s1124 + $0x8] sm:$0xf]
    %v1128 = vld [vmem:[%s1124 + $0xc] sm:$0xf]
    %s1129 = scalar_lea.vmem [#allocation8], 1
    %v1130 = vld [vmem:[%s1129] sm:$0x1]
    %v1132 = vlaneseq
    %v1133 = vshrl.u32 %v1132, 7
    %v1134 = vsub.s32 0, %v1133
    %v1135 = vrot.slane %v1130, %v1134
    %v1141 = vunpack.c.l.b16 %v1125
    %v1142 = vunpack.c.l.b16 %v1126
    %v1143 = vunpack.c.l.b16 %v1127
    %v1144 = vunpack.c.l.b16 %v1128
    %v1145 = vpack.c.b16 %v1142, %v1141
    %v1146 = vpack.c.b16 %v1144, %v1143
    %v1150 = vsel %vm182, %v1123, 0
    %1152 = vmatprep.subr.bf16.mxu0 0
    %1153 = vmatpush1.bf16.msra.mxu0 %v1145
    %1154 = vmatprep.subr.bf16.mxu0 0
    %1155 = vmatpush1.bf16.msra.mxu0 %v1146
    %1156 = vmatprep.subr.bf16.mxu0 0
    %1157 = vmatpush1.bf16.msra.mxu0 0
    %1158 = vmatprep.subr.bf16.mxu0 0
    %1159 = vmatpush1.bf16.msra.mxu0 0
    %1160 = vmatprep.subr.bf16.mxu0 0
    %1161 = vmatpush1.bf16.msra.mxu0 0
    %1162 = vmatprep.subr.bf16.mxu0 0
    %1163 = vmatpush1.bf16.msra.mxu0 0
    %1164 = vmatprep.subr.bf16.mxu0 0
    %1165 = vmatpush1.bf16.msra.mxu0 0
    %1166 = vmatprep.subr.bf16.mxu0 0
    %1167 = vmatpush1.bf16.msra.mxu0 0
    %1168 = vmatprep.subr.bf16.mxu0 0
    %1169 = vmatpush1.bf16.msra.mxu0 0
    %1170 = vmatprep.subr.bf16.mxu0 0
    %1171 = vmatpush1.bf16.msra.mxu0 0
    %1172 = vmatprep.subr.bf16.mxu0 0
    %1173 = vmatpush1.bf16.msra.mxu0 0
    %1174 = vmatprep.subr.bf16.mxu0 0
    %1175 = vmatpush1.bf16.msra.mxu0 0
    %1176 = vmatprep.subr.bf16.mxu0 0
    %1177 = vmatpush1.bf16.msra.mxu0 0
    %1178 = vmatprep.subr.bf16.mxu0 0
    %1179 = vmatpush1.bf16.msra.mxu0 0
    %1180 = vmatprep.subr.bf16.mxu0 0
    %1181 = vmatpush1.bf16.msra.mxu0 0
    %1182 = vmatprep.subr.bf16.mxu0 0
    %1183 = vmatpush1.bf16.msra.mxu0 0
    %1184 = vmatprep.mubr.bf16.mxu0 0
    %1185 = vmatmul.mubr.bf16.gmra.mrb[0].mxu0 %v1150
    %v1186 = vpop.f32.mrb[0].mxu0
    %v1187 = vadd.f32 %v1135, %v1186
    %v1188 = vpop.f32.mrb[0].mxu0
    %v1189 = vpop.f32.mrb[0].mxu0
    %v1190 = vadd.f32 %v1135, %v1189
    %v1191 = vpop.f32.mrb[0].mxu0
    %1192 = vdwg.mxu0
    %s1193 = scalar_lea.vmem %s6, 16
    %v1194 = vld [vmem:[%s1193] sm:$0xf]
    %v1195 = vld [vmem:[%s1193 + $0x4] sm:$0xf]
    %v1196 = vld [vmem:[%s1193 + $0x8] sm:$0xf]
    %v1197 = vld [vmem:[%s1193 + $0xc] sm:$0xf]
    %v1198 = vpack.c.bf16 %v1187, %v1187
    %v1199 = vpack.c.bf16 %v1190, %v1190
    %1201 = vrot.lane.b32.xlu0 %v1198, 96
    %v1202 = vpop.permute.xlu0 %1201
    %v1204 = vsel %vm303, %v1198, 0
    %v1207 = vsel %vm303, %v1202, 0
    %1209 = vmatprep.subr.bf16.mxu0 0
    %1210 = vmatpush1.bf16.xpose.msra.mxu0 %v1207
    %1211 = vmatprep.subr.bf16.mxu0 0
    %1212 = vmatpush1.bf16.xpose.msra.mxu0 0
    %1213 = vmatprep.subr.bf16.mxu0 0
    %1214 = vmatpush1.bf16.xpose.msra.mxu0 0
    %1215 = vmatprep.subr.bf16.mxu0 0
    %1216 = vmatpush1.bf16.xpose.msra.mxu0 0
    %1217 = vmatprep.subr.bf16.mxu0 0
    %1218 = vmatpush1.bf16.xpose.msra.mxu0 0
    %1219 = vmatprep.subr.bf16.mxu0 0
    %1220 = vmatpush1.bf16.xpose.msra.mxu0 0
    %1221 = vmatprep.subr.bf16.mxu0 0
    %1222 = vmatpush1.bf16.xpose.msra.mxu0 0
    %1223 = vmatprep.subr.bf16.mxu0 0
    %1224 = vmatpush1.bf16.xpose.msra.mxu0 0
    %1225 = vmatprep.subr.bf16.mxu0 0
    %1226 = vmatpush1.bf16.xpose.msra.mxu0 0
    %1227 = vmatprep.subr.bf16.mxu0 0
    %1228 = vmatpush1.bf16.xpose.msra.mxu0 0
    %1229 = vmatprep.subr.bf16.mxu0 0
    %1230 = vmatpush1.bf16.xpose.msra.mxu0 0
    %1231 = vmatprep.subr.bf16.mxu0 0
    %1232 = vmatpush1.bf16.xpose.msra.mxu0 0
    %1233 = vmatprep.subr.bf16.mxu0 0
    %1234 = vmatpush1.bf16.xpose.msra.mxu0 0
    %1235 = vmatprep.subr.bf16.mxu0 0
    %1236 = vmatpush1.bf16.xpose.msra.mxu0 0
    %1237 = vmatprep.subr.bf16.mxu0 0
    %1238 = vmatpush1.bf16.xpose.msra.mxu0 0
    %1239 = vmatprep.subr.bf16.mxu0 0
    %1240 = vmatpush1.bf16.xpose.msra.mxu0 0
    %1241 = vmatprep.mubr.bf16.mxu0 0
    %1242 = vmatmul.mubr.bf16.gmra.mrb[0].mxu0 %v1204
    %v1243 = vpop.f32.mrb[0].mxu0
    %v1244 = vadd.f32 0.0, %v1243
    %v1245 = vpop.f32.mrb[0].mxu0
    %v1246 = vpop.f32.mrb[0].mxu0
    %v1247 = vpop.f32.mrb[0].mxu0
    %1248 = vdwg.mxu0
    %1250 = vrot.lane.b32.xlu0 %v1199, 96
    %v1251 = vpop.permute.xlu0 %1250
    %v1253 = vsel %vm303, %v1199, 0
    %v1256 = vsel %vm303, %v1251, 0
    %1258 = vmatprep.subr.bf16.mxu0 0
    %1259 = vmatpush1.bf16.xpose.msra.mxu0 %v1256
    %1260 = vmatprep.subr.bf16.mxu0 0
    %1261 = vmatpush1.bf16.xpose.msra.mxu0 0
    %1262 = vmatprep.subr.bf16.mxu0 0
    %1263 = vmatpush1.bf16.xpose.msra.mxu0 0
    %1264 = vmatprep.subr.bf16.mxu0 0
    %1265 = vmatpush1.bf16.xpose.msra.mxu0 0
    %1266 = vmatprep.subr.bf16.mxu0 0
    %1267 = vmatpush1.bf16.xpose.msra.mxu0 0
    %1268 = vmatprep.subr.bf16.mxu0 0
    %1269 = vmatpush1.bf16.xpose.msra.mxu0 0
    %1270 = vmatprep.subr.bf16.mxu0 0
    %1271 = vmatpush1.bf16.xpose.msra.mxu0 0
    %1272 = vmatprep.subr.bf16.mxu0 0
    %1273 = vmatpush1.bf16.xpose.msra.mxu0 0
    %1274 = vmatprep.subr.bf16.mxu0 0
    %1275 = vmatpush1.bf16.xpose.msra.mxu0 0
    %1276 = vmatprep.subr.bf16.mxu0 0
    %1277 = vmatpush1.bf16.xpose.msra.mxu0 0
    %1278 = vmatprep.subr.bf16.mxu0 0
    %1279 = vmatpush1.bf16.xpose.msra.mxu0 0
    %1280 = vmatprep.subr.bf16.mxu0 0
    %1281 = vmatpush1.bf16.xpose.msra.mxu0 0
    %1282 = vmatprep.subr.bf16.mxu0 0
    %1283 = vmatpush1.bf16.xpose.msra.mxu0 0
    %1284 = vmatprep.subr.bf16.mxu0 0
    %1285 = vmatpush1.bf16.xpose.msra.mxu0 0
    %1286 = vmatprep.subr.bf16.mxu0 0
    %1287 = vmatpush1.bf16.xpose.msra.mxu0 0
    %1288 = vmatprep.subr.bf16.mxu0 0
    %1289 = vmatpush1.bf16.xpose.msra.mxu0 0
    %1290 = vmatprep.mubr.bf16.mxu0 0
    %1291 = vmatmul.mubr.bf16.gmra.mrb[0].mxu0 %v1253
    %v1292 = vpop.f32.mrb[0].mxu0
    %v1293 = vadd.f32 0.0, %v1292
    %v1294 = vpop.f32.mrb[0].mxu0
    %v1295 = vpop.f32.mrb[0].mxu0
    %v1296 = vpop.f32.mrb[0].mxu0
    %1297 = vdwg.mxu0
    %v1298 = vmul.f32 %v1244, 0.25
    %v1299 = vmul.f32 %v1293, 0.25
    %v1300 = vadd.f32 %v1298, %v171
    %v1301 = vadd.f32 %v1299, %v175
    %v1302 = vsel %vm403, %v1300, -inf
    %1303 = vmax.xlane.f32.xlu0 %v1302
    %v1304 = vpop.xlane.xlu0 %1303
    %v1305 = vsel %vm403, %v1301, -inf
    %1306 = vmax.xlane.f32.xlu0 %v1305
    %v1307 = vpop.xlane.xlu0 %1306
    %v1308 = vsub.f32 %v1300, %v1304
    %v1309 = vsub.f32 %v1301, %v1307
    %v1310 = vmul.f32 %v1308, 1.442695
    %v1311 = vpow.pop %v1310
    %v1312 = vmul.f32 %v1309, 1.442695
    %v1313 = vpow.pop %v1312
    %v1314 = vsel %vm403, %v1311, 0.0
    %1315 = vadd.xlane.f32.xlu0 %v1314
    %v1316 = vpop.xlane.xlu0 %1315
    %v1317 = vsel %vm403, %v1313, 0.0
    %1318 = vadd.xlane.f32.xlu0 %v1317
    %v1319 = vpop.xlane.xlu0 %1318
    %v1320 = vrcp.pop %v1316
    %v1321 = vrcp.pop %v1319
    %v1322 = vmul.f32 %v1311, %v1320
    %v1323 = vmul.f32 %v1313, %v1321
    %v1324 = vpack.c.bf16 %v1322, %v1322
    %v1325 = vpack.c.bf16 %v1323, %v1323
    %1326 = vrot.lane.b32.xlu0 %v1198, 64
    %v1327 = vpop.permute.xlu0 %1326
    %v1329 = vsel %vm403, %v1324, 0
    %v1332 = vsel %vm433, %v1327, 0
    %1334 = vmatprep.subr.bf16.mxu0 0
    %1335 = vmatpush1.bf16.msra.mxu0 %v1332
    %1336 = vmatprep.subr.bf16.mxu0 0
    %1337 = vmatpush1.bf16.msra.mxu0 0
    %1338 = vmatprep.subr.bf16.mxu0 0
    %1339 = vmatpush1.bf16.msra.mxu0 0
    %1340 = vmatprep.subr.bf16.mxu0 0
    %1341 = vmatpush1.bf16.msra.mxu0 0
    %1342 = vmatprep.subr.bf16.mxu0 0
    %1343 = vmatpush1.bf16.msra.mxu0 0
    %1344 = vmatprep.subr.bf16.mxu0 0
    %1345 = vmatpush1.bf16.msra.mxu0 0
    %1346 = vmatprep.subr.bf16.mxu0 0
    %1347 = vmatpush1.bf16.msra.mxu0 0
    %1348 = vmatprep.subr.bf16.mxu0 0
    %1349 = vmatpush1.bf16.msra.mxu0 0
    %1350 = vmatprep.subr.bf16.mxu0 0
    %1351 = vmatpush1.bf16.msra.mxu0 0
    %1352 = vmatprep.subr.bf16.mxu0 0
    %1353 = vmatpush1.bf16.msra.mxu0 0
    %1354 = vmatprep.subr.bf16.mxu0 0
    %1355 = vmatpush1.bf16.msra.mxu0 0
    %1356 = vmatprep.subr.bf16.mxu0 0
    %1357 = vmatpush1.bf16.msra.mxu0 0
    %1358 = vmatprep.subr.bf16.mxu0 0
    %1359 = vmatpush1.bf16.msra.mxu0 0
    %1360 = vmatprep.subr.bf16.mxu0 0
    %1361 = vmatpush1.bf16.msra.mxu0 0
    %1362 = vmatprep.subr.bf16.mxu0 0
    %1363 = vmatpush1.bf16.msra.mxu0 0
    %1364 = vmatprep.subr.bf16.mxu0 0
    %1365 = vmatpush1.bf16.msra.mxu0 0
    %1366 = vmatprep.mubr.bf16.mxu0 0
    %1367 = vmatmul.mubr.bf16.gmra.mrb[0].mxu0 %v1329
    %v1368 = vpop.f32.mrb[0].mxu0
    %v1369 = vadd.f32 0.0, %v1368
    %v1370 = vpop.f32.mrb[0].mxu0
    %v1371 = vpop.f32.mrb[0].mxu0
    %v1372 = vpop.f32.mrb[0].mxu0
    %1373 = vdwg.mxu0
    %1374 = vrot.lane.b32.xlu0 %v1199, 64
    %v1375 = vpop.permute.xlu0 %1374
    %v1377 = vsel %vm403, %v1325, 0
    %v1380 = vsel %vm433, %v1375, 0
    %1382 = vmatprep.subr.bf16.mxu0 0
    %1383 = vmatpush1.bf16.msra.mxu0 %v1380
    %1384 = vmatprep.subr.bf16.mxu0 0
    %1385 = vmatpush1.bf16.msra.mxu0 0
    %1386 = vmatprep.subr.bf16.mxu0 0
    %1387 = vmatpush1.bf16.msra.mxu0 0
    %1388 = vmatprep.subr.bf16.mxu0 0
    %1389 = vmatpush1.bf16.msra.mxu0 0
    %1390 = vmatprep.subr.bf16.mxu0 0
    %1391 = vmatpush1.bf16.msra.mxu0 0
    %1392 = vmatprep.subr.bf16.mxu0 0
    %1393 = vmatpush1.bf16.msra.mxu0 0
    %1394 = vmatprep.subr.bf16.mxu0 0
    %1395 = vmatpush1.bf16.msra.mxu0 0
    %1396 = vmatprep.subr.bf16.mxu0 0
    %1397 = vmatpush1.bf16.msra.mxu0 0
    %1398 = vmatprep.subr.bf16.mxu0 0
    %1399 = vmatpush1.bf16.msra.mxu0 0
    %1400 = vmatprep.subr.bf16.mxu0 0
    %1401 = vmatpush1.bf16.msra.mxu0 0
    %1402 = vmatprep.subr.bf16.mxu0 0
    %1403 = vmatpush1.bf16.msra.mxu0 0
    %1404 = vmatprep.subr.bf16.mxu0 0
    %1405 = vmatpush1.bf16.msra.mxu0 0
    %1406 = vmatprep.subr.bf16.mxu0 0
    %1407 = vmatpush1.bf16.msra.mxu0 0
    %1408 = vmatprep.subr.bf16.mxu0 0
    %1409 = vmatpush1.bf16.msra.mxu0 0
    %1410 = vmatprep.subr.bf16.mxu0 0
    %1411 = vmatpush1.bf16.msra.mxu0 0
    %1412 = vmatprep.subr.bf16.mxu0 0
    %1413 = vmatpush1.bf16.msra.mxu0 0
    %1414 = vmatprep.mubr.bf16.mxu0 0
    %1415 = vmatmul.mubr.bf16.gmra.mrb[0].mxu0 %v1377
    %v1416 = vpop.f32.mrb[0].mxu0
    %v1417 = vadd.f32 0.0, %v1416
    %v1418 = vpop.f32.mrb[0].mxu0
    %v1419 = vpop.f32.mrb[0].mxu0
    %v1420 = vpop.f32.mrb[0].mxu0
    %1421 = vdwg.mxu0
    %v1422 = vpack.c.bf16 %v1417, %v1369
    %1423 = vrot.lane.b32.xlu0 %v1198, 112
    %v1424 = vpop.permute.xlu0 %1423
    %1425 = vrot.lane.b32.xlu0 %v1198, 80
    %v1426 = vpop.permute.xlu0 %1425
    %v1428 = vsel %vm303, %v1424, 0
    %v1431 = vsel %vm303, %v1426, 0
    %1433 = vmatprep.subr.bf16.mxu0 0
    %1434 = vmatpush1.bf16.xpose.msra.mxu0 %v1431
    %1435 = vmatprep.subr.bf16.mxu0 0
    %1436 = vmatpush1.bf16.xpose.msra.mxu0 0
    %1437 = vmatprep.subr.bf16.mxu0 0
    %1438 = vmatpush1.bf16.xpose.msra.mxu0 0
    %1439 = vmatprep.subr.bf16.mxu0 0
    %1440 = vmatpush1.bf16.xpose.msra.mxu0 0
    %1441 = vmatprep.subr.bf16.mxu0 0
    %1442 = vmatpush1.bf16.xpose.msra.mxu0 0
    %1443 = vmatprep.subr.bf16.mxu0 0
    %1444 = vmatpush1.bf16.xpose.msra.mxu0 0
    %1445 = vmatprep.subr.bf16.mxu0 0
    %1446 = vmatpush1.bf16.xpose.msra.mxu0 0
    %1447 = vmatprep.subr.bf16.mxu0 0
    %1448 = vmatpush1.bf16.xpose.msra.mxu0 0
    %1449 = vmatprep.subr.bf16.mxu0 0
    %1450 = vmatpush1.bf16.xpose.msra.mxu0 0
    %1451 = vmatprep.subr.bf16.mxu0 0
    %1452 = vmatpush1.bf16.xpose.msra.mxu0 0
    %1453 = vmatprep.subr.bf16.mxu0 0
    %1454 = vmatpush1.bf16.xpose.msra.mxu0 0
    %1455 = vmatprep.subr.bf16.mxu0 0
    %1456 = vmatpush1.bf16.xpose.msra.mxu0 0
    %1457 = vmatprep.subr.bf16.mxu0 0
    %1458 = vmatpush1.bf16.xpose.msra.mxu0 0
    %1459 = vmatprep.subr.bf16.mxu0 0
    %1460 = vmatpush1.bf16.xpose.msra.mxu0 0
    %1461 = vmatprep.subr.bf16.mxu0 0
    %1462 = vmatpush1.bf16.xpose.msra.mxu0 0
    %1463 = vmatprep.subr.bf16.mxu0 0
    %1464 = vmatpush1.bf16.xpose.msra.mxu0 0
    %1465 = vmatprep.mubr.bf16.mxu0 0
    %1466 = vmatmul.mubr.bf16.gmra.mrb[0].mxu0 %v1428
    %v1467 = vpop.f32.mrb[0].mxu0
    %v1468 = vadd.f32 0.0, %v1467
    %v1469 = vpop.f32.mrb[0].mxu0
    %v1470 = vpop.f32.mrb[0].mxu0
    %v1471 = vpop.f32.mrb[0].mxu0
    %1472 = vdwg.mxu0
    %1473 = vrot.lane.b32.xlu0 %v1199, 112
    %v1474 = vpop.permute.xlu0 %1473
    %1475 = vrot.lane.b32.xlu0 %v1199, 80
    %v1476 = vpop.permute.xlu0 %1475
    %v1478 = vsel %vm303, %v1474, 0
    %v1481 = vsel %vm303, %v1476, 0
    %1483 = vmatprep.subr.bf16.mxu0 0
    %1484 = vmatpush1.bf16.xpose.msra.mxu0 %v1481
    %1485 = vmatprep.subr.bf16.mxu0 0
    %1486 = vmatpush1.bf16.xpose.msra.mxu0 0
    %1487 = vmatprep.subr.bf16.mxu0 0
    %1488 = vmatpush1.bf16.xpose.msra.mxu0 0
    %1489 = vmatprep.subr.bf16.mxu0 0
    %1490 = vmatpush1.bf16.xpose.msra.mxu0 0
    %1491 = vmatprep.subr.bf16.mxu0 0
    %1492 = vmatpush1.bf16.xpose.msra.mxu0 0
    %1493 = vmatprep.subr.bf16.mxu0 0
    %1494 = vmatpush1.bf16.xpose.msra.mxu0 0
    %1495 = vmatprep.subr.bf16.mxu0 0
    %1496 = vmatpush1.bf16.xpose.msra.mxu0 0
    %1497 = vmatprep.subr.bf16.mxu0 0
    %1498 = vmatpush1.bf16.xpose.msra.mxu0 0
    %1499 = vmatprep.subr.bf16.mxu0 0
    %1500 = vmatpush1.bf16.xpose.msra.mxu0 0
    %1501 = vmatprep.subr.bf16.mxu0 0
    %1502 = vmatpush1.bf16.xpose.msra.mxu0 0
    %1503 = vmatprep.subr.bf16.mxu0 0
    %1504 = vmatpush1.bf16.xpose.msra.mxu0 0
    %1505 = vmatprep.subr.bf16.mxu0 0
    %1506 = vmatpush1.bf16.xpose.msra.mxu0 0
    %1507 = vmatprep.subr.bf16.mxu0 0
    %1508 = vmatpush1.bf16.xpose.msra.mxu0 0
    %1509 = vmatprep.subr.bf16.mxu0 0
    %1510 = vmatpush1.bf16.xpose.msra.mxu0 0
    %1511 = vmatprep.subr.bf16.mxu0 0
    %1512 = vmatpush1.bf16.xpose.msra.mxu0 0
    %1513 = vmatprep.subr.bf16.mxu0 0
    %1514 = vmatpush1.bf16.xpose.msra.mxu0 0
    %1515 = vmatprep.mubr.bf16.mxu0 0
    %1516 = vmatmul.mubr.bf16.gmra.mrb[0].mxu0 %v1478
    %v1517 = vpop.f32.mrb[0].mxu0
    %v1518 = vadd.f32 0.0, %v1517
    %v1519 = vpop.f32.mrb[0].mxu0
    %v1520 = vpop.f32.mrb[0].mxu0
    %v1521 = vpop.f32.mrb[0].mxu0
    %1522 = vdwg.mxu0
    %v1523 = vmul.f32 %v1468, 0.25
    %v1524 = vmul.f32 %v1518, 0.25
    %v1525 = vadd.f32 %v1523, %v171
    %v1526 = vadd.f32 %v1524, %v175
    %v1527 = vsel %vm403, %v1525, -inf
    %1528 = vmax.xlane.f32.xlu0 %v1527
    %v1529 = vpop.xlane.xlu0 %1528
    %v1530 = vsel %vm403, %v1526, -inf
    %1531 = vmax.xlane.f32.xlu0 %v1530
    %v1532 = vpop.xlane.xlu0 %1531
    %v1533 = vsub.f32 %v1525, %v1529
    %v1534 = vsub.f32 %v1526, %v1532
    %v1535 = vmul.f32 %v1533, 1.442695
    %v1536 = vpow.pop %v1535
    %v1537 = vmul.f32 %v1534, 1.442695
    %v1538 = vpow.pop %v1537
    %v1539 = vsel %vm403, %v1536, 0.0
    %1540 = vadd.xlane.f32.xlu0 %v1539
    %v1541 = vpop.xlane.xlu0 %1540
    %v1542 = vsel %vm403, %v1538, 0.0
    %1543 = vadd.xlane.f32.xlu0 %v1542
    %v1544 = vpop.xlane.xlu0 %1543
    %v1545 = vrcp.pop %v1541
    %v1546 = vrcp.pop %v1544
    %v1547 = vmul.f32 %v1536, %v1545
    %v1548 = vmul.f32 %v1538, %v1546
    %v1549 = vpack.c.bf16 %v1547, %v1547
    %v1550 = vpack.c.bf16 %v1548, %v1548
    %1551 = vrot.lane.b32.xlu0 %v1198, 48
    %v1552 = vpop.permute.xlu0 %1551
    %v1554 = vsel %vm403, %v1549, 0
    %v1557 = vsel %vm433, %v1552, 0
    %1559 = vmatprep.subr.bf16.mxu0 0
    %1560 = vmatpush1.bf16.msra.mxu0 %v1557
    %1561 = vmatprep.subr.bf16.mxu0 0
    %1562 = vmatpush1.bf16.msra.mxu0 0
    %1563 = vmatprep.subr.bf16.mxu0 0
    %1564 = vmatpush1.bf16.msra.mxu0 0
    %1565 = vmatprep.subr.bf16.mxu0 0
    %1566 = vmatpush1.bf16.msra.mxu0 0
    %1567 = vmatprep.subr.bf16.mxu0 0
    %1568 = vmatpush1.bf16.msra.mxu0 0
    %1569 = vmatprep.subr.bf16.mxu0 0
    %1570 = vmatpush1.bf16.msra.mxu0 0
    %1571 = vmatprep.subr.bf16.mxu0 0
    %1572 = vmatpush1.bf16.msra.mxu0 0
    %1573 = vmatprep.subr.bf16.mxu0 0
    %1574 = vmatpush1.bf16.msra.mxu0 0
    %1575 = vmatprep.subr.bf16.mxu0 0
    %1576 = vmatpush1.bf16.msra.mxu0 0
    %1577 = vmatprep.subr.bf16.mxu0 0
    %1578 = vmatpush1.bf16.msra.mxu0 0
    %1579 = vmatprep.subr.bf16.mxu0 0
    %1580 = vmatpush1.bf16.msra.mxu0 0
    %1581 = vmatprep.subr.bf16.mxu0 0
    %1582 = vmatpush1.bf16.msra.mxu0 0
    %1583 = vmatprep.subr.bf16.mxu0 0
    %1584 = vmatpush1.bf16.msra.mxu0 0
    %1585 = vmatprep.subr.bf16.mxu0 0
    %1586 = vmatpush1.bf16.msra.mxu0 0
    %1587 = vmatprep.subr.bf16.mxu0 0
    %1588 = vmatpush1.bf16.msra.mxu0 0
    %1589 = vmatprep.subr.bf16.mxu0 0
    %1590 = vmatpush1.bf16.msra.mxu0 0
    %1591 = vmatprep.mubr.bf16.mxu0 0
    %1592 = vmatmul.mubr.bf16.gmra.mrb[0].mxu0 %v1554
    %v1593 = vpop.f32.mrb[0].mxu0
    %v1594 = vadd.f32 0.0, %v1593
    %v1595 = vpop.f32.mrb[0].mxu0
    %v1596 = vpop.f32.mrb[0].mxu0
    %v1597 = vpop.f32.mrb[0].mxu0
    %1598 = vdwg.mxu0
    %1599 = vrot.lane.b32.xlu0 %v1199, 48
    %v1600 = vpop.permute.xlu0 %1599
    %v1602 = vsel %vm403, %v1550, 0
    %v1605 = vsel %vm433, %v1600, 0
    %1607 = vmatprep.subr.bf16.mxu0 0
    %1608 = vmatpush1.bf16.msra.mxu0 %v1605
    %1609 = vmatprep.subr.bf16.mxu0 0
    %1610 = vmatpush1.bf16.msra.mxu0 0
    %1611 = vmatprep.subr.bf16.mxu0 0
    %1612 = vmatpush1.bf16.msra.mxu0 0
    %1613 = vmatprep.subr.bf16.mxu0 0
    %1614 = vmatpush1.bf16.msra.mxu0 0
    %1615 = vmatprep.subr.bf16.mxu0 0
    %1616 = vmatpush1.bf16.msra.mxu0 0
    %1617 = vmatprep.subr.bf16.mxu0 0
    %1618 = vmatpush1.bf16.msra.mxu0 0
    %1619 = vmatprep.subr.bf16.mxu0 0
    %1620 = vmatpush1.bf16.msra.mxu0 0
    %1621 = vmatprep.subr.bf16.mxu0 0
    %1622 = vmatpush1.bf16.msra.mxu0 0
    %1623 = vmatprep.subr.bf16.mxu0 0
    %1624 = vmatpush1.bf16.msra.mxu0 0
    %1625 = vmatprep.subr.bf16.mxu0 0
    %1626 = vmatpush1.bf16.msra.mxu0 0
    %1627 = vmatprep.subr.bf16.mxu0 0
    %1628 = vmatpush1.bf16.msra.mxu0 0
    %1629 = vmatprep.subr.bf16.mxu0 0
    %1630 = vmatpush1.bf16.msra.mxu0 0
    %1631 = vmatprep.subr.bf16.mxu0 0
    %1632 = vmatpush1.bf16.msra.mxu0 0
    %1633 = vmatprep.subr.bf16.mxu0 0
    %1634 = vmatpush1.bf16.msra.mxu0 0
    %1635 = vmatprep.subr.bf16.mxu0 0
    %1636 = vmatpush1.bf16.msra.mxu0 0
    %1637 = vmatprep.subr.bf16.mxu0 0
    %1638 = vmatpush1.bf16.msra.mxu0 0
    %1639 = vmatprep.mubr.bf16.mxu0 0
    %1640 = vmatmul.mubr.bf16.gmra.mrb[0].mxu0 %v1602
    %v1641 = vpop.f32.mrb[0].mxu0
    %v1642 = vadd.f32 0.0, %v1641
    %v1643 = vpop.f32.mrb[0].mxu0
    %v1644 = vpop.f32.mrb[0].mxu0
    %v1645 = vpop.f32.mrb[0].mxu0
    %1646 = vdwg.mxu0
    %v1647 = vpack.c.bf16 %v1642, %v1594
    %v1650 = vunpack.c.l.b16 %v1196
    %v1651 = vunpack.c.l.b16 %v1197
    %v1652 = vpack.c.b16 %v1651, %v1650
    %v1655 = vsel %vm303, %v1647, 0
    %1657 = vmatprep.subr.bf16.mxu0 0
    %1658 = vmatpush1.bf16.msra.mxu0 %v1652
    %1659 = vmatprep.subr.bf16.mxu0 0
    %1660 = vmatpush1.bf16.msra.mxu0 0
    %1661 = vmatprep.subr.bf16.mxu0 0
    %1662 = vmatpush1.bf16.msra.mxu0 0
    %1663 = vmatprep.subr.bf16.mxu0 0
    %1664 = vmatpush1.bf16.msra.mxu0 0
    %1665 = vmatprep.subr.bf16.mxu0 0
    %1666 = vmatpush1.bf16.msra.mxu0 0
    %1667 = vmatprep.subr.bf16.mxu0 0
    %1668 = vmatpush1.bf16.msra.mxu0 0
    %1669 = vmatprep.subr.bf16.mxu0 0
    %1670 = vmatpush1.bf16.msra.mxu0 0
    %1671 = vmatprep.subr.bf16.mxu0 0
    %1672 = vmatpush1.bf16.msra.mxu0 0
    %1673 = vmatprep.subr.bf16.mxu0 0
    %1674 = vmatpush1.bf16.msra.mxu0 0
    %1675 = vmatprep.subr.bf16.mxu0 0
    %1676 = vmatpush1.bf16.msra.mxu0 0
    %1677 = vmatprep.subr.bf16.mxu0 0
    %1678 = vmatpush1.bf16.msra.mxu0 0
    %1679 = vmatprep.subr.bf16.mxu0 0
    %1680 = vmatpush1.bf16.msra.mxu0 0
    %1681 = vmatprep.subr.bf16.mxu0 0
    %1682 = vmatpush1.bf16.msra.mxu0 0
    %1683 = vmatprep.subr.bf16.mxu0 0
    %1684 = vmatpush1.bf16.msra.mxu0 0
    %1685 = vmatprep.subr.bf16.mxu0 0
    %1686 = vmatpush1.bf16.msra.mxu0 0
    %1687 = vmatprep.subr.bf16.mxu0 0
    %1688 = vmatpush1.bf16.msra.mxu0 0
    %1689 = vmatprep.mubr.bf16.mxu0 0
    %1690 = vmatmul.mubr.bf16.gmra.mrb[0].mxu0 %v1655
    %v1691 = vpop.f32.mrb[0].mxu0
    %v1692 = vadd.f32 0.0, %v1691
    %v1693 = vpop.f32.mrb[0].mxu0
    %v1694 = vpop.f32.mrb[0].mxu0
    %v1695 = vadd.f32 0.0, %v1694
    %v1696 = vpop.f32.mrb[0].mxu0
    %1697 = vdwg.mxu0
    %v1700 = vunpack.c.l.b16 %v1194
    %v1701 = vunpack.c.l.b16 %v1195
    %v1702 = vpack.c.b16 %v1701, %v1700
    %v1705 = vsel %vm303, %v1422, 0
    %1707 = vmatprep.subr.bf16.mxu0 0
    %1708 = vmatpush1.bf16.msra.mxu0 %v1702
    %1709 = vmatprep.subr.bf16.mxu0 0
    %1710 = vmatpush1.bf16.msra.mxu0 0
    %1711 = vmatprep.subr.bf16.mxu0 0
    %1712 = vmatpush1.bf16.msra.mxu0 0
    %1713 = vmatprep.subr.bf16.mxu0 0
    %1714 = vmatpush1.bf16.msra.mxu0 0
    %1715 = vmatprep.subr.bf16.mxu0 0
    %1716 = vmatpush1.bf16.msra.mxu0 0
    %1717 = vmatprep.subr.bf16.mxu0 0
    %1718 = vmatpush1.bf16.msra.mxu0 0
    %1719 = vmatprep.subr.bf16.mxu0 0
    %1720 = vmatpush1.bf16.msra.mxu0 0
    %1721 = vmatprep.subr.bf16.mxu0 0
    %1722 = vmatpush1.bf16.msra.mxu0 0
    %1723 = vmatprep.subr.bf16.mxu0 0
    %1724 = vmatpush1.bf16.msra.mxu0 0
    %1725 = vmatprep.subr.bf16.mxu0 0
    %1726 = vmatpush1.bf16.msra.mxu0 0
    %1727 = vmatprep.subr.bf16.mxu0 0
    %1728 = vmatpush1.bf16.msra.mxu0 0
    %1729 = vmatprep.subr.bf16.mxu0 0
    %1730 = vmatpush1.bf16.msra.mxu0 0
    %1731 = vmatprep.subr.bf16.mxu0 0
    %1732 = vmatpush1.bf16.msra.mxu0 0
    %1733 = vmatprep.subr.bf16.mxu0 0
    %1734 = vmatpush1.bf16.msra.mxu0 0
    %1735 = vmatprep.subr.bf16.mxu0 0
    %1736 = vmatpush1.bf16.msra.mxu0 0
    %1737 = vmatprep.subr.bf16.mxu0 0
    %1738 = vmatpush1.bf16.msra.mxu0 0
    %1739 = vmatprep.mubr.bf16.mxu0 0
    %1740 = vmatmul.mubr.bf16.gmra.mrb[0].mxu0 %v1705
    %v1741 = vpop.f32.mrb[0].mxu0
    %v1742 = vadd.f32 %v1692, %v1741
    %v1743 = vpop.f32.mrb[0].mxu0
    %v1744 = vpop.f32.mrb[0].mxu0
    %v1745 = vadd.f32 %v1695, %v1744
    %v1746 = vpop.f32.mrb[0].mxu0
    %1747 = vdwg.mxu0
    %v1748 = vadd.f32 %v1121, %v1742
    %v1749 = vadd.f32 %v1122, %v1745
    %s1750 = scalar_lea.vmem [#allocation10], 1
    %v1751 = vld [vmem:[%s1750] sm:$0x1]
    %v1753 = vlaneseq
    %v1754 = vshrl.u32 %v1753, 7
    %v1755 = vsub.s32 0, %v1754
    %v1756 = vrot.slane %v1751, %v1755
    %v1758 = vadd.f32 %v1748, %v1756
    %v1759 = vadd.f32 %v1749, %v1756
    %s1760 = scalar_lea.vmem [#allocation11], 1
    %v1761 = vld [vmem:[%s1760] sm:$0x1]
    %s1762 = scalar_lea.vmem %s9, 1
    %v1763 = vld [vmem:[%s1762] sm:$0x1]
    %v1764 = vsel %vm182, %v1758, 0.0
    %1765 = vadd.xlane.f32.xlu0 %v1764
    %v1766 = vpop.xlane.xlu0 %1765
    %v1767 = vsel %vm182, %v1759, 0.0
    %1768 = vadd.xlane.f32.xlu0 %v1767
    %v1769 = vpop.xlane.xlu0 %1768
    %v1770 = vmul.f32 %v1766, %v189
    %v1771 = vmul.f32 %v1769, %v189
    %v1772 = vsub.f32 %v1758, %v1770
    %v1773 = vsub.f32 %v1759, %v1771
    %v1774 = vmul.f32 %v1772, %v1772
    %v1775 = vmul.f32 %v1773, %v1773
    %v1776 = vsel %vm182, %v1774, 0.0
    %1777 = vadd.xlane.f32.xlu0 %v1776
    %v1778 = vpop.xlane.xlu0 %1777
    %v1779 = vsel %vm182, %v1775, 0.0
    %1780 = vadd.xlane.f32.xlu0 %v1779
    %v1781 = vpop.xlane.xlu0 %1780
    %v1782 = vmul.f32 %v1778, %v189
    %v1783 = vmul.f32 %v1781, %v189
    %v1784 = vadd.f32 %v1782, 1e-12
    %v1785 = vadd.f32 %v1783, 1e-12
    %v1786 = vrsqrt.pop %v1784
    %v1787 = vrsqrt.pop %v1785
    %v1788 = vmul.f32 %v1772, %v1786
    %v1789 = vmul.f32 %v1773, %v1787
    %v1791 = vlaneseq
    %v1792 = vshrl.u32 %v1791, 7
    %v1793 = vsub.s32 0, %v1792
    %v1794 = vrot.slane %v1761, %v1793
    %v1796 = vmul.f32 %v1788, %v1794
    %v1797 = vmul.f32 %v1789, %v1794
    %v1799 = vlaneseq
    %v1800 = vshrl.u32 %v1799, 7
    %v1801 = vsub.s32 0, %v1800
    %v1802 = vrot.slane %v1763, %v1801
    %v1804 = vadd.f32 %v1796, %v1802
    %v1805 = vadd.f32 %v1797, %v1802
    %v1806 = vpack.c.bf16 %v1805, %v1804
    %s1807 = scalar_lea.vmem %s10, 16
    %v1808 = vld [vmem:[%s1807] sm:$0xf]
    %v1809 = vld [vmem:[%s1807 + $0x4] sm:$0xf]
    %v1810 = vld [vmem:[%s1807 + $0x8] sm:$0xf]
    %v1811 = vld [vmem:[%s1807 + $0xc] sm:$0xf]
    %s1812 = scalar_lea.vmem [#allocation13], 1
    %v1813 = vld [vmem:[%s1812] sm:$0x1]
    %v1815 = vlaneseq
    %v1816 = vshrl.u32 %v1815, 7
    %v1817 = vsub.s32 0, %v1816
    %v1818 = vrot.slane %v1813, %v1817
    %v1824 = vunpack.c.l.b16 %v1808
    %v1825 = vunpack.c.l.b16 %v1809
    %v1826 = vunpack.c.l.b16 %v1810
    %v1827 = vunpack.c.l.b16 %v1811
    %v1828 = vpack.c.b16 %v1825, %v1824
    %v1829 = vpack.c.b16 %v1827, %v1826
    %v1833 = vsel %vm182, %v1806, 0
    %1835 = vmatprep.subr.bf16.mxu0 0
    %1836 = vmatpush1.bf16.msra.mxu0 %v1828
    %1837 = vmatprep.subr.bf16.mxu0 0
    %1838 = vmatpush1.bf16.msra.mxu0 %v1829
    %1839 = vmatprep.subr.bf16.mxu0 0
    %1840 = vmatpush1.bf16.msra.mxu0 0
    %1841 = vmatprep.subr.bf16.mxu0 0
    %1842 = vmatpush1.bf16.msra.mxu0 0
    %1843 = vmatprep.subr.bf16.mxu0 0
    %1844 = vmatpush1.bf16.msra.mxu0 0
    %1845 = vmatprep.subr.bf16.mxu0 0
    %1846 = vmatpush1.bf16.msra.mxu0 0
    %1847 = vmatprep.subr.bf16.mxu0 0
    %1848 = vmatpush1.bf16.msra.mxu0 0
    %1849 = vmatprep.subr.bf16.mxu0 0
    %1850 = vmatpush1.bf16.msra.mxu0 0
    %1851 = vmatprep.subr.bf16.mxu0 0
    %1852 = vmatpush1.bf16.msra.mxu0 0
    %1853 = vmatprep.subr.bf16.mxu0 0
    %1854 = vmatpush1.bf16.msra.mxu0 0
    %1855 = vmatprep.subr.bf16.mxu0 0
    %1856 = vmatpush1.bf16.msra.mxu0 0
    %1857 = vmatprep.subr.bf16.mxu0 0
    %1858 = vmatpush1.bf16.msra.mxu0 0
    %1859 = vmatprep.subr.bf16.mxu0 0
    %1860 = vmatpush1.bf16.msra.mxu0 0
    %1861 = vmatprep.subr.bf16.mxu0 0
    %1862 = vmatpush1.bf16.msra.mxu0 0
    %1863 = vmatprep.subr.bf16.mxu0 0
    %1864 = vmatpush1.bf16.msra.mxu0 0
    %1865 = vmatprep.subr.bf16.mxu0 0
    %1866 = vmatpush1.bf16.msra.mxu0 0
    %1867 = vmatprep.mubr.bf16.mxu0 0
    %1868 = vmatmul.mubr.bf16.gmra.mrb[0].mxu0 %v1833
    %v1869 = vpop.f32.mrb[0].mxu0
    %v1870 = vadd.f32 %v1818, %v1869
    %v1871 = vpop.f32.mrb[0].mxu0
    %v1872 = vpop.f32.mrb[0].mxu0
    %v1873 = vadd.f32 %v1818, %v1872
    %v1874 = vpop.f32.mrb[0].mxu0
    %1875 = vdwg.mxu0
    %v1876 = vmul.f32 %v1870, %v1870
    %v1877 = vmul.f32 %v1873, %v1873
    %v1878 = vmul.f32 %v1870, %v1876
    %v1879 = vmul.f32 %v1873, %v1877
    %v1880 = vmul.f32 %v1878, 0.044715
    %v1881 = vmul.f32 %v1879, 0.044715
    %v1882 = vadd.f32 %v1870, %v1880
    %v1883 = vadd.f32 %v1873, %v1881
    %v1884 = vmul.f32 %v1882, 0.7978846
    %v1885 = vmul.f32 %v1883, 0.7978846
    %v1886 = vtanh.pop %v1884
    %v1887 = vtanh.pop %v1885
    %v1888 = vadd.f32 %v1886, 1.0
    %v1889 = vadd.f32 %v1887, 1.0
    %v1890 = vmul.f32 %v1888, 0.5
    %v1891 = vmul.f32 %v1889, 0.5
    %v1892 = vmul.f32 %v1870, %v1890
    %v1893 = vmul.f32 %v1873, %v1891
    %v1894 = vpack.c.bf16 %v1893, %v1892
    %s1895 = scalar_lea.vmem %s12, 32
    %v1896 = vld [vmem:[%s1895] sm:$0xf]
    %v1897 = vld [vmem:[%s1895 + $0x4] sm:$0xf]
    %v1898 = vld [vmem:[%s1895 + $0x8] sm:$0xf]
    %v1899 = vld [vmem:[%s1895 + $0xc] sm:$0xf]
    %v1900 = vld [vmem:[%s1895 + $0x10] sm:$0xf]
    %v1901 = vld [vmem:[%s1895 + $0x14] sm:$0xf]
    %v1902 = vld [vmem:[%s1895 + $0x18] sm:$0xf]
    %v1903 = vld [vmem:[%s1895 + $0x1c] sm:$0xf]
    %s1904 = scalar_lea.vmem %s13, 1
    %v1905 = vld [vmem:[%s1904] sm:$0x1]
    %v1907 = vlaneseq
    %v1908 = vshrl.u32 %v1907, 7
    %v1909 = vsub.s32 0, %v1908
    %v1910 = vrot.slane %v1905, %v1909
    %v1920 = vunpack.c.l.b16 %v1896
    %v1921 = vunpack.c.l.b16 %v1897
    %v1922 = vunpack.c.l.b16 %v1898
    %v1923 = vunpack.c.l.b16 %v1899
    %v1924 = vunpack.c.l.b16 %v1900
    %v1925 = vunpack.c.l.b16 %v1901
    %v1926 = vunpack.c.l.b16 %v1902
    %v1927 = vunpack.c.l.b16 %v1903
    %v1928 = vpack.c.b16 %v1921, %v1920
    %v1929 = vpack.c.b16 %v1923, %v1922
    %v1930 = vpack.c.b16 %v1925, %v1924
    %v1931 = vpack.c.b16 %v1927, %v1926
    %v1937 = vsel %vm1032, %v1894, 0
    %1939 = vmatprep.subr.bf16.mxu0 0
    %1940 = vmatpush1.bf16.msra.mxu0 %v1928
    %1941 = vmatprep.subr.bf16.mxu0 0
    %1942 = vmatpush1.bf16.msra.mxu0 %v1929
    %1943 = vmatprep.subr.bf16.mxu0 0
    %1944 = vmatpush1.bf16.msra.mxu0 %v1930
    %1945 = vmatprep.subr.bf16.mxu0 0
    %1946 = vmatpush1.bf16.msra.mxu0 %v1931
    %1947 = vmatprep.subr.bf16.mxu0 0
    %1948 = vmatpush1.bf16.msra.mxu0 0
    %1949 = vmatprep.subr.bf16.mxu0 0
    %1950 = vmatpush1.bf16.msra.mxu0 0
    %1951 = vmatprep.subr.bf16.mxu0 0
    %1952 = vmatpush1.bf16.msra.mxu0 0
    %1953 = vmatprep.subr.bf16.mxu0 0
    %1954 = vmatpush1.bf16.msra.mxu0 0
    %1955 = vmatprep.subr.bf16.mxu0 0
    %1956 = vmatpush1.bf16.msra.mxu0 0
    %1957 = vmatprep.subr.bf16.mxu0 0
    %1958 = vmatpush1.bf16.msra.mxu0 0
    %1959 = vmatprep.subr.bf16.mxu0 0
    %1960 = vmatpush1.bf16.msra.mxu0 0
    %1961 = vmatprep.subr.bf16.mxu0 0
    %1962 = vmatpush1.bf16.msra.mxu0 0
    %1963 = vmatprep.subr.bf16.mxu0 0
    %1964 = vmatpush1.bf16.msra.mxu0 0
    %1965 = vmatprep.subr.bf16.mxu0 0
    %1966 = vmatpush1.bf16.msra.mxu0 0
    %1967 = vmatprep.subr.bf16.mxu0 0
    %1968 = vmatpush1.bf16.msra.mxu0 0
    %1969 = vmatprep.subr.bf16.mxu0 0
    %1970 = vmatpush1.bf16.msra.mxu0 0
    %1971 = vmatprep.mubr.bf16.mxu0 0
    %1972 = vmatmul.mubr.bf16.gmra.mrb[0].mxu0 %v1937
    %v1973 = vpop.f32.mrb[0].mxu0
    %v1974 = vadd.f32 %v1910, %v1973
    %v1975 = vpop.f32.mrb[0].mxu0
    %v1976 = vpop.f32.mrb[0].mxu0
    %v1977 = vadd.f32 %v1910, %v1976
    %v1978 = vpop.f32.mrb[0].mxu0
    %1979 = vdwg.mxu0
    %v1980 = vadd.f32 %v1804, %v1974
    %v1981 = vadd.f32 %v1805, %v1977
    %s1982 = scalar_lea.vmem %s14, 1
    %v1983 = vld [vmem:[%s1982] sm:$0x1]
    %s1984 = scalar_lea.vmem %s15, 1
    %v1985 = vld [vmem:[%s1984] sm:$0x1]
    %v1986 = vsel %vm182, %v1980, 0.0
    %1987 = vadd.xlane.f32.xlu0 %v1986
    %v1988 = vpop.xlane.xlu0 %1987
    %v1989 = vsel %vm182, %v1981, 0.0
    %1990 = vadd.xlane.f32.xlu0 %v1989
    %v1991 = vpop.xlane.xlu0 %1990
    %v1992 = vmul.f32 %v1988, %v189
    %v1993 = vmul.f32 %v1991, %v189
    %v1994 = vsub.f32 %v1980, %v1992
    %v1995 = vsub.f32 %v1981, %v1993
    %v1996 = vmul.f32 %v1994, %v1994
    %v1997 = vmul.f32 %v1995, %v1995
    %v1998 = vsel %vm182, %v1996, 0.0
    %1999 = vadd.xlane.f32.xlu0 %v1998
    %v2000 = vpop.xlane.xlu0 %1999
    %v2001 = vsel %vm182, %v1997, 0.0
    %2002 = vadd.xlane.f32.xlu0 %v2001
    %v2003 = vpop.xlane.xlu0 %2002
    %v2004 = vmul.f32 %v2000, %v189
    %v2005 = vmul.f32 %v2003, %v189
    %v2006 = vadd.f32 %v2004, 1e-12
    %v2007 = vadd.f32 %v2005, 1e-12
    %v2008 = vrsqrt.pop %v2006
    %v2009 = vrsqrt.pop %v2007
    %v2010 = vmul.f32 %v1994, %v2008
    %v2011 = vmul.f32 %v1995, %v2009
    %v2013 = vlaneseq
    %v2014 = vshrl.u32 %v2013, 7
    %v2015 = vsub.s32 0, %v2014
    %v2016 = vrot.slane %v1983, %v2015
    %v2018 = vmul.f32 %v2010, %v2016
    %v2019 = vmul.f32 %v2011, %v2016
    %v2021 = vlaneseq
    %v2022 = vshrl.u32 %v2021, 7
    %v2023 = vsub.s32 0, %v2022
    %v2024 = vrot.slane %v1985, %v2023
    %v2026 = vadd.f32 %v2018, %v2024
    %v2027 = vadd.f32 %v2019, %v2024
    %v2028 = vpack.c.bf16 %v2026, %v2026
    %v2029 = vpack.c.bf16 %v2027, %v2027
    %v2030 = vld [vmem:[%s16] sm:$0xf]
    %v2031 = vld [vmem:[%s16 + $0x4] sm:$0xf]
    %v2032 = vld [vmem:[%s16 + $0x8] sm:$0xf]
    %v2033 = vld [vmem:[%s16 + $0xc] sm:$0xf]
    %v2034 = vld [vmem:[%s17] sm:$0x1]
    %v2036 = vlaneseq
    %v2037 = vshrl.u32 %v2036, 7
    %v2038 = vsub.s32 0, %v2037
    %v2039 = vrot.slane %v2034, %v2038
    %v2043 = vunpack.c.l.b16 %v2028
    %v2044 = vunpack.c.l.b16 %v2029
    %v2045 = vrot.slane %v2044, 7
    %vm2046 = vcmask 1041409
    %v2047 = vsel %vm2046, %v2045, %v2043
    %v2048 = vpack.c.b16 %v2047, %v2047
    %v2053 = vunpack.c.l.b16 %v2030
    %v2054 = vunpack.c.l.b16 %v2031
    %v2055 = vunpack.c.l.b16 %v2032
    %v2056 = vunpack.c.l.b16 %v2033
    %v2057 = vpack.c.b16 %v2054, %v2053
    %v2058 = vpack.c.b16 %v2056, %v2055
    %v2062 = vsel %vm182, %v2048, 0
    %2064 = vmatprep.subr.bf16.mxu0 0
    %2065 = vmatpush1.bf16.msra.mxu0 %v2057
    %2066 = vmatprep.subr.bf16.mxu0 0
    %2067 = vmatpush1.bf16.msra.mxu0 %v2058
    %2068 = vmatprep.subr.bf16.mxu0 0
    %2069 = vmatpush1.bf16.msra.mxu0 0
    %2070 = vmatprep.subr.bf16.mxu0 0
    %2071 = vmatpush1.bf16.msra.mxu0 0
    %2072 = vmatprep.subr.bf16.mxu0 0
    %2073 = vmatpush1.bf16.msra.mxu0 0
    %2074 = vmatprep.subr.bf16.mxu0 0
    %2075 = vmatpush1.bf16.msra.mxu0 0
    %2076 = vmatprep.subr.bf16.mxu0 0
    %2077 = vmatpush1.bf16.msra.mxu0 0
    %2078 = vmatprep.subr.bf16.mxu0 0
    %2079 = vmatpush1.bf16.msra.mxu0 0
    %2080 = vmatprep.subr.bf16.mxu0 0
    %2081 = vmatpush1.bf16.msra.mxu0 0
    %2082 = vmatprep.subr.bf16.mxu0 0
    %2083 = vmatpush1.bf16.msra.mxu0 0
    %2084 = vmatprep.subr.bf16.mxu0 0
    %2085 = vmatpush1.bf16.msra.mxu0 0
    %2086 = vmatprep.subr.bf16.mxu0 0
    %2087 = vmatpush1.bf16.msra.mxu0 0
    %2088 = vmatprep.subr.bf16.mxu0 0
    %2089 = vmatpush1.bf16.msra.mxu0 0
    %2090 = vmatprep.subr.bf16.mxu0 0
    %2091 = vmatpush1.bf16.msra.mxu0 0
    %2092 = vmatprep.subr.bf16.mxu0 0
    %2093 = vmatpush1.bf16.msra.mxu0 0
    %2094 = vmatprep.subr.bf16.mxu0 0
    %2095 = vmatpush1.bf16.msra.mxu0 0
    %2096 = vmatprep.mubr.bf16.mxu0 0
    %2097 = vmatmul.mubr.bf16.gmra.mrb[0].mxu0 %v2062
    %v2098 = vpop.f32.mrb[0].mxu0
    %v2099 = vadd.f32 %v2039, %v2098
    %v2100 = vpop.f32.mrb[0].mxu0
    %v2101 = vpop.f32.mrb[0].mxu0
    %v2102 = vpop.f32.mrb[0].mxu0
    %2103 = vdwg.mxu0
    %v2104 = vtanh.pop %v2099
    %v2105 = vld [vmem:[%s18] sm:$0xf]
    %v2106 = vld [vmem:[%s18 + $0x4] sm:$0xf]
    %v2107 = vpack.c.bf16 %v2104, %v2104
    %v2110 = vunpack.c.l.b16 %v2105
    %v2111 = vunpack.c.l.b16 %v2106
    %v2112 = vpack.c.b16 %v2111, %v2110
    %v2114 = vsel %vm182, %v2107, 0
    %v2117 = vsel %vm182, %v2112, 0
    %2119 = vmatprep.subr.bf16.mxu0 0
    %2120 = vmatpush1.bf16.xpose.msra.mxu0 %v2117
    %2121 = vmatprep.subr.bf16.mxu0 0
    %2122 = vmatpush1.bf16.xpose.msra.mxu0 0
    %2123 = vmatprep.subr.bf16.mxu0 0
    %2124 = vmatpush1.bf16.xpose.msra.mxu0 0
    %2125 = vmatprep.subr.bf16.mxu0 0
    %2126 = vmatpush1.bf16.xpose.msra.mxu0 0
    %2127 = vmatprep.subr.bf16.mxu0 0
    %2128 = vmatpush1.bf16.xpose.msra.mxu0 0
    %2129 = vmatprep.subr.bf16.mxu0 0
    %2130 = vmatpush1.bf16.xpose.msra.mxu0 0
    %2131 = vmatprep.subr.bf16.mxu0 0
    %2132 = vmatpush1.bf16.xpose.msra.mxu0 0
    %2133 = vmatprep.subr.bf16.mxu0 0
    %2134 = vmatpush1.bf16.xpose.msra.mxu0 0
    %2135 = vmatprep.subr.bf16.mxu0 0
    %2136 = vmatpush1.bf16.xpose.msra.mxu0 0
    %2137 = vmatprep.subr.bf16.mxu0 0
    %2138 = vmatpush1.bf16.xpose.msra.mxu0 0
    %2139 = vmatprep.subr.bf16.mxu0 0
    %2140 = vmatpush1.bf16.xpose.msra.mxu0 0
    %2141 = vmatprep.subr.bf16.mxu0 0
    %2142 = vmatpush1.bf16.xpose.msra.mxu0 0
    %2143 = vmatprep.subr.bf16.mxu0 0
    %2144 = vmatpush1.bf16.xpose.msra.mxu0 0
    %2145 = vmatprep.subr.bf16.mxu0 0
    %2146 = vmatpush1.bf16.xpose.msra.mxu0 0
    %2147 = vmatprep.subr.bf16.mxu0 0
    %2148 = vmatpush1.bf16.xpose.msra.mxu0 0
    %2149 = vmatprep.subr.bf16.mxu0 0
    %2150 = vmatpush1.bf16.xpose.msra.mxu0 0
    %2151 = vmatprep.mubr.bf16.mxu0 0
    %2152 = vmatmul.mubr.bf16.gmra.mrb[0].mxu0 %v2114
    %v2153 = vpop.f32.mrb[0].mxu0
    %v2154 = vadd.f32 0.0, %v2153
    %v2155 = vpop.f32.mrb[0].mxu0
    %v2156 = vpop.f32.mrb[0].mxu0
    %v2157 = vpop.f32.mrb[0].mxu0
    %2158 = vdwg.mxu0
    %vm2159 = vcmask 123904
    %v2160 = vsel %vm2159, %v2154, -inf
    %2161 = vmax.xlane.f32.xlu0 %v2160
    %v2162 = vpop.xlane.xlu0 %2161
    %v2163 = vsub.f32 %v2154, %v2162
    %v2164 = vmul.f32 %v2163, 1.442695
    %v2165 = vpow.pop %v2164
    %v2166 = vsel %vm2159, %v2165, 0.0
    %2167 = vadd.xlane.f32.xlu0 %v2166
    %v2168 = vpop.xlane.xlu0 %2167
    %v2169 = vrcp.pop %v2168
    %v2170 = vmul.f32 %v2165, %v2169
    %v2171 = vpack.c.bf16 %v2170, %v2170
    %v2174 = vsel %vm303, %v2171, 0
    %2176 = vmatprep.subr.bf16.mxu0 0
    %2177 = vmatpush1.bf16.msra.mxu0 %v2112
    %2178 = vmatprep.subr.bf16.mxu0 0
    %2179 = vmatpush1.bf16.msra.mxu0 0
    %2180 = vmatprep.subr.bf16.mxu0 0
    %2181 = vmatpush1.bf16.msra.mxu0 0
    %2182 = vmatprep.subr.bf16.mxu0 0
    %2183 = vmatpush1.bf16.msra.mxu0 0
    %2184 = vmatprep.subr.bf16.mxu0 0
    %2185 = vmatpush1.bf16.msra.mxu0 0
    %2186 = vmatprep.subr.bf16.mxu0 0
    %2187 = vmatpush1.bf16.msra.mxu0 0
    %2188 = vmatprep.subr.bf16.mxu0 0
    %2189 = vmatpush1.bf16.msra.mxu0 0
    %2190 = vmatprep.subr.bf16.mxu0 0
    %2191 = vmatpush1.bf16.msra.mxu0 0
    %2192 = vmatprep.subr.bf16.mxu0 0
    %2193 = vmatpush1.bf16.msra.mxu0 0
    %2194 = vmatprep.subr.bf16.mxu0 0
    %2195 = vmatpush1.bf16.msra.mxu0 0
    %2196 = vmatprep.subr.bf16.mxu0 0
    %2197 = vmatpush1.bf16.msra.mxu0 0
    %2198 = vmatprep.subr.bf16.mxu0 0
    %2199 = vmatpush1.bf16.msra.mxu0 0
    %2200 = vmatprep.subr.bf16.mxu0 0
    %2201 = vmatpush1.bf16.msra.mxu0 0
    %2202 = vmatprep.subr.bf16.mxu0 0
    %2203 = vmatpush1.bf16.msra.mxu0 0
    %2204 = vmatprep.subr.bf16.mxu0 0
    %2205 = vmatpush1.bf16.msra.mxu0 0
    %2206 = vmatprep.subr.bf16.mxu0 0
    %2207 = vmatpush1.bf16.msra.mxu0 0
    %2208 = vmatprep.mubr.bf16.mxu0 0
    %2209 = vmatmul.mubr.bf16.gmra.mrb[0].mxu0 %v2174
    %v2210 = vpop.f32.mrb[0].mxu0
    %v2211 = vadd.f32 0.0, %v2210
    %v2212 = vpop.f32.mrb[0].mxu0
    %v2213 = vpop.f32.mrb[0].mxu0
    %v2214 = vpop.f32.mrb[0].mxu0
    %2215 = vdwg.mxu0
    %v2216 = vld [vmem:[%s19] sm:$0xf]
    %v2217 = vld [vmem:[%s19 + $0x4] sm:$0xf]
    %v2218 = vld [vmem:[%s19 + $0x8] sm:$0xf]
    %v2219 = vld [vmem:[%s19 + $0xc] sm:$0xf]
    %v2220 = vpack.c.bf16 %v2211, %v2211
    %v2221 = vld [vmem:[%s20] sm:$0xf]
    %v2222 = vld [vmem:[%s20 + $0x4] sm:$0xf]
    %v2223 = vld [vmem:[%s20 + $0x8] sm:$0xf]
    %v2224 = vld [vmem:[%s20 + $0xc] sm:$0xf]
    %v2229 = vunpack.c.l.b16 %v2221
    %v2230 = vunpack.c.l.b16 %v2222
    %v2231 = vunpack.c.l.b16 %v2223
    %v2232 = vunpack.c.l.b16 %v2224
    %v2233 = vpack.c.b16 %v2230, %v2229
    %v2234 = vpack.c.b16 %v2232, %v2231
    %v2238 = vsel %vm182, %v2220, 0
    %2240 = vmatprep.subr.bf16.mxu0 0
    %2241 = vmatpush1.bf16.msra.mxu0 %v2233
    %2242 = vmatprep.subr.bf16.mxu0 0
    %2243 = vmatpush1.bf16.msra.mxu0 %v2234
    %2244 = vmatprep.subr.bf16.mxu0 0
    %2245 = vmatpush1.bf16.msra.mxu0 0
    %2246 = vmatprep.subr.bf16.mxu0 0
    %2247 = vmatpush1.bf16.msra.mxu0 0
    %2248 = vmatprep.subr.bf16.mxu0 0
    %2249 = vmatpush1.bf16.msra.mxu0 0
    %2250 = vmatprep.subr.bf16.mxu0 0
    %2251 = vmatpush1.bf16.msra.mxu0 0
    %2252 = vmatprep.subr.bf16.mxu0 0
    %2253 = vmatpush1.bf16.msra.mxu0 0
    %2254 = vmatprep.subr.bf16.mxu0 0
    %2255 = vmatpush1.bf16.msra.mxu0 0
    %2256 = vmatprep.subr.bf16.mxu0 0
    %2257 = vmatpush1.bf16.msra.mxu0 0
    %2258 = vmatprep.subr.bf16.mxu0 0
    %2259 = vmatpush1.bf16.msra.mxu0 0
    %2260 = vmatprep.subr.bf16.mxu0 0
    %2261 = vmatpush1.bf16.msra.mxu0 0
    %2262 = vmatprep.subr.bf16.mxu0 0
    %2263 = vmatpush1.bf16.msra.mxu0 0
    %2264 = vmatprep.subr.bf16.mxu0 0
    %2265 = vmatpush1.bf16.msra.mxu0 0
    %2266 = vmatprep.subr.bf16.mxu0 0
    %2267 = vmatpush1.bf16.msra.mxu0 0
    %2268 = vmatprep.subr.bf16.mxu0 0
    %2269 = vmatpush1.bf16.msra.mxu0 0
    %2270 = vmatprep.subr.bf16.mxu0 0
    %2271 = vmatpush1.bf16.msra.mxu0 0
    %2272 = vmatprep.mubr.bf16.mxu0 0
    %2273 = vmatmul.mubr.bf16.gmra.mrb[0].mxu0 %v2238
    %v2274 = vpop.f32.mrb[0].mxu0
    %v2275 = vadd.f32 0.0, %v2274
    %v2276 = vpop.f32.mrb[0].mxu0
    %v2277 = vpop.f32.mrb[0].mxu0
    %v2278 = vpop.f32.mrb[0].mxu0
    %2279 = vdwg.mxu0
    %v2284 = vunpack.c.l.b16 %v2216
    %v2285 = vunpack.c.l.b16 %v2217
    %v2286 = vunpack.c.l.b16 %v2218
    %v2287 = vunpack.c.l.b16 %v2219
    %v2288 = vpack.c.b16 %v2285, %v2284
    %v2289 = vpack.c.b16 %v2287, %v2286
    %2292 = vmatprep.subr.bf16.mxu0 0
    %2293 = vmatpush1.bf16.msra.mxu0 %v2288
    %2294 = vmatprep.subr.bf16.mxu0 0
    %2295 = vmatpush1.bf16.msra.mxu0 %v2289
    %2296 = vmatprep.subr.bf16.mxu0 0
    %2297 = vmatpush1.bf16.msra.mxu0 0
    %2298 = vmatprep.subr.bf16.mxu0 0
    %2299 = vmatpush1.bf16.msra.mxu0 0
    %2300 = vmatprep.subr.bf16.mxu0 0
    %2301 = vmatpush1.bf16.msra.mxu0 0
    %2302 = vmatprep.subr.bf16.mxu0 0
    %2303 = vmatpush1.bf16.msra.mxu0 0
    %2304 = vmatprep.subr.bf16.mxu0 0
    %2305 = vmatpush1.bf16.msra.mxu0 0
    %2306 = vmatprep.subr.bf16.mxu0 0
    %2307 = vmatpush1.bf16.msra.mxu0 0
    %2308 = vmatprep.subr.bf16.mxu0 0
    %2309 = vmatpush1.bf16.msra.mxu0 0
    %2310 = vmatprep.subr.bf16.mxu0 0
    %2311 = vmatpush1.bf16.msra.mxu0 0
    %2312 = vmatprep.subr.bf16.mxu0 0
    %2313 = vmatpush1.bf16.msra.mxu0 0
    %2314 = vmatprep.subr.bf16.mxu0 0
    %2315 = vmatpush1.bf16.msra.mxu0 0
    %2316 = vmatprep.subr.bf16.mxu0 0
    %2317 = vmatpush1.bf16.msra.mxu0 0
    %2318 = vmatprep.subr.bf16.mxu0 0
    %2319 = vmatpush1.bf16.msra.mxu0 0
    %2320 = vmatprep.subr.bf16.mxu0 0
    %2321 = vmatpush1.bf16.msra.mxu0 0
    %2322 = vmatprep.subr.bf16.mxu0 0
    %2323 = vmatpush1.bf16.msra.mxu0 0
    %2324 = vmatprep.mubr.bf16.mxu0 0
    %2325 = vmatmul.mubr.bf16.gmra.mrb[0].mxu0 %v2114
    %v2326 = vpop.f32.mrb[0].mxu0
    %v2327 = vadd.f32 %v2275, %v2326
    %v2328 = vpop.f32.mrb[0].mxu0
    %v2329 = vpop.f32.mrb[0].mxu0
    %v2330 = vpop.f32.mrb[0].mxu0
    %2331 = vdwg.mxu0
    %v2332 = vld [vmem:[%s21] sm:$0x1]
    %v2334 = vlaneseq
    %v2335 = vshrl.u32 %v2334, 7
    %v2336 = vsub.s32 0, %v2335
    %v2337 = vrot.slane %v2332, %v2336
    %v2339 = vadd.f32 %v2327, %v2337
    %vm2340 = vcmask 9216
    %2341 = vst.msk [vmem:[#allocation14] sm:$0x3] %vm2340, %v2339
    // Predicated region
    $region118: #{tpu_custom_call.1} parent=1 // pred_check
      _
    $region119: #{tpu_custom_call.1} parent=1 // pred_check_branch
      %2343 = sbr.rel (0) target = $region121
    $region120: #{tpu_custom_call.1} parent=1 // pred_region
      %s2345 = ssub.s32 32, 32
      %2346 = vsyncadd [#allocation4], %s2345
      %s2348 = sshll.u32 [#allocation14], 4
      %s2349 = int_to_ptr.vmem [resolvable:$true] %s2348
      %2351 = dma.vmem_to_hbm [thread:$0]  %s2349, 32, %s22, [#allocation4]
    $region121: #{tpu_custom_call.1} parent=1 // pred_fallthru
      _
    // Predicated region
    $region122: #{tpu_custom_call.1} parent=1 // pred_check
      _
    $region123: #{tpu_custom_call.1} parent=1 // pred_check_branch
      %2353 = sbr.rel (0) target = $region125
    $region124: #{tpu_custom_call.1} parent=1 // pred_region
      %2354 = dma.done [#allocation4], 32
    $region125: #{tpu_custom_call.1} parent=1 // pred_fallthru
      _
    %2355 = vsyncpa [#allocation3], 1
    %2356 = vsyncpa [#allocation6], 1
    %2357 = vsyncpa [#allocation9], 1
    %2358 = vsyncpa [#allocation12], 1
    %2359 = vsyncpa [#allocation4], 1

</llo_original>
